<compile_context>
chip_gen: v6e
topology: v6e:2x2x1
jax: 0.10.0
libtpu: 0.0.40
codegen_flags: <defaults>
</compile_context>

<pallas_src>
import numpy as np
import jax
import jax.numpy as jnp
from jax import lax
from jax.experimental import pallas as pl
from jax.experimental.pallas import tpu as pltpu

# Module-consistent small shapes: state_size=(8,8), output_dim=4
H, W = 8, 8
HW = H * W                 # 64 spatial positions
C1, C2 = 32, 64            # conv channel counts
HIDDEN = 128
OUT_DIM = 4
INPUT_DIM = C2 * HW        # 4096
LANES = 128                # native lane width; image lives in lanes [0, HW)
OUT_PAD = 128              # lane-dense padded Q output
K1PAD = 16                 # conv1 contraction padded 9 -> 16 (sublane aligned)

PAIRS = C2 // 2            # 32: two conv2 channels packed per 128-lane row
NCHUNKS = 4                # fc1 weight pipelined in 4 chunks along the grid
PPC = PAIRS // NCHUNKS     # 8 pair-rows (and weight rows) per grid step


# ----------------------------- Pallas kernel -------------------------------

def sarsa_kernel(x_ref, mask_ref, w1_ref, b1_ref, w2_ref, b2_ref,
                 wf1_ref, bf1_ref, wf2_ref, bf2_ref, o_ref,
                 pairs_ref, hacc_ref):
    """Fused conv1 -> conv2 -> pack -> (chunked) fc1 -> ReLU -> fc2.

    x_ref   : (1, 128)              image in lanes [0,64), zeros elsewhere
    mask_ref: (9, 1, 128)           per-tap in-bounds masks (0/1); tap 4 == image mask
    w1_ref  : (C1, 16)              conv1 weight, taps on K axis (padded 9->16)
    b1_ref  : (C1, 1)
    w2_ref  : (9, C2, C1)           conv2 weight, one (C2,C1) slab per tap
    b2_ref  : (C2, 1)
    wf1_ref : (PPC, 128, HIDDEN)    bf16 fc1 weight CHUNK (pair-packed, flatten baked in)
    bf1_ref : (1, HIDDEN)
    wf2_ref : (HIDDEN, 128)         fc2 weight, zero-padded past OUT_DIM lanes
    bf2_ref : (1, 128)
    o_ref   : (1, 128)              lane-dense Q output (first OUT_DIM lanes valid)
    pairs_ref: VMEM (PAIRS,1,128) f32   packed conv2 activation (persists over grid)
    hacc_ref : VMEM (1,HIDDEN) f32      fc1 accumulator
    """
    k = pl.program_id(0)

    # ---- step 0 only: conv1 + conv2 + channel packing (hidden under wf1 DMAs) ----
    @pl.when(k == 0)
    def _():
        x = x_ref[...]                                        # (1, 128)

        # conv1 as ONE MXU matmul: stack the 9 masked spatial shifts of x
        # (+ 7 zero rows so K is sublane-aligned) and hit them with (C1,16).
        rows = []
        for t in range(9):
            s = (t // 3 - 1) * W + (t % 3 - 1)                # flat spatial shift
            xs = x if s == 0 else pltpu.roll(x, (-s) % LANES, axis=1)
            rows.append(xs * mask_ref[t])                     # kill out-of-image reads
        rows.append(jnp.zeros((K1PAD - 9, LANES), jnp.float32))
        xstack = jnp.concatenate(rows, axis=0)                # (16, 128)
        a1 = jnp.dot(w1_ref[...], xstack,
                     preferred_element_type=jnp.float32) + b1_ref[...]   # (C1, 128)

        # conv2: one (C2,C1)@(C1,128) matmul per tap, consumed immediately
        # (no 288-sublane concatenate -> no vreg spill pressure).
        acc2 = jnp.zeros((C2, LANES), jnp.float32)
        for t in range(9):
            s = (t // 3 - 1) * W + (t % 3 - 1)
            a1s = a1 if s == 0 else pltpu.roll(a1, (-s) % LANES, axis=1)
            acc2 = acc2 + jnp.dot(w2_ref[t], a1s * mask_ref[t],
                                  preferred_element_type=jnp.float32)
        # Zero the junk lanes >= HW (they hold only bias); tap 4 mask == image mask.
        a2 = (acc2 + b2_ref[...]) * mask_ref[4]               # (C2, 128)

        # Pack two channels per 128-lane row: row i = [chan i | chan i+PAIRS].
        packed = a2[:PAIRS, :] + pltpu.roll(a2[PAIRS:, :], HW, axis=1)   # (32, 128)
        pairs_ref[...] = packed[:, None, :]                   # (32, 1, 128)
        hacc_ref[...] = bf1_ref[...]                          # fc1 bias init

    # ---- every step: one batched, lane-dense fc1 partial for this weight chunk ----
    base = pl.multiple_of(k * PPC, PPC)
    pk = pairs_ref[pl.ds(base, PPC)].astype(jnp.bfloat16)     # (PPC, 1, 128) bf16
    # PPC independent (1,128)@(128,HIDDEN) matmuls (batch dim), f32 accumulation;
    # no serial MRF-pop -> VPU-add chain.
    part = lax.dot_general(pk, wf1_ref[...],
                           dimension_numbers=(((2,), (1,)), ((0,), (0,))),
                           preferred_element_type=jnp.float32)   # (PPC, 1, HIDDEN)
    hacc_ref[...] = hacc_ref[...] + jnp.sum(part, axis=0)        # (1, HIDDEN)

    # ---- last step: ReLU + fc2, lane-dense padded output store ----
    @pl.when(k == NCHUNKS - 1)
    def _():
        h = jnp.maximum(hacc_ref[...], 0.0)                   # (1, HIDDEN) f32
        o_ref[...] = jnp.dot(h, wf2_ref[...],
                             preferred_element_type=jnp.float32) + bf2_ref[...]


# ------------------------ one-time parameter prep ---------------------------

def make_tap_masks():
    """mask[k, 0, i*W+j] = 1 iff pixel (i+dy, j+dx) of tap k is inside the image."""
    m = np.zeros((9, 1, LANES), np.float32)
    for k in range(9):
        dy, dx = k // 3 - 1, k % 3 - 1
        for i in range(H):
            for j in range(W):
                if 0 <= i + dy < H and 0 <= j + dx < W:
                    m[k, 0, i * W + j] = 1.0
    return jnp.asarray(m)


def prepare_kernel_params(p):
    """Hoisted, ONCE-per-model re-layout of PyTorch-layout params into kernel layouts."""
    # conv1 (C1,1,3,3) -> (C1,16): taps on the K axis, padded 9->16 for the MXU.
    w1 = jnp.pad(p["conv1_w"].reshape(C1, 9), ((0, 0), (0, K1PAD - 9)))
    b1 = p["conv1_b"].reshape(C1, 1)
    # conv2 (C2,C1,3,3) -> (9, C2, C1): one clean (C2,C1) slab per tap.
    w2 = jnp.transpose(p["conv2_w"].reshape(C2, C1, 9), (2, 0, 1))
    b2 = p["conv2_b"].reshape(C2, 1)
    # fc1 (HIDDEN, C2*HW) -> pair-packed bf16 (PAIRS, 128, HIDDEN):
    #   row i, lanes [0,HW)   -> channel i      weights (NCHW flatten baked in)
    #   row i, lanes [HW,128) -> channel i+32   weights
    # bf16 halves the dominant HBM->VMEM stream; MXU accumulates in f32.
    wf1 = p["fc1_w"].T.reshape(C2, HW, HIDDEN)
    wf1 = jnp.concatenate([wf1[:PAIRS], wf1[PAIRS:]], axis=1).astype(jnp.bfloat16)
    bf1 = p["fc1_b"].reshape(1, HIDDEN)
    # fc2 -> (HIDDEN, 128) / (1, 128), zero-padded for a lane-dense store.
    wf2 = jnp.pad(p["fc2_w"].T, ((0, 0), (0, OUT_PAD - OUT_DIM)))
    bf2 = jnp.pad(p["fc2_b"].reshape(1, OUT_DIM), ((0, 0), (0, OUT_PAD - OUT_DIM)))
    return {"w1": w1, "b1": b1, "w2": w2, "b2": b2,
            "wf1": wf1, "bf1": bf1, "wf2": wf2, "bf2": bf2,
            "masks": make_tap_masks()}


def _xavier_uniform(key, shape, fan_in, fan_out):
    bound = float(np.sqrt(6.0 / (fan_in + fan_out)))
    return jax.random.uniform(key, shape, jnp.float32, -bound, bound)


def _bias_uniform(key, shape, fan_in):
    bound = float(1.0 / np.sqrt(fan_in))
    return jax.random.uniform(key, shape, jnp.float32, -bound, bound)


def init_params(key):
    """Deterministic synthetic params in PyTorch layouts (xavier weights,
    PyTorch-default uniform biases)."""
    ks = jax.random.split(key, 8)
    return {
        "conv1_w": _xavier_uniform(ks[0], (C1, 1, 3, 3), 1 * 9, C1 * 9),
        "conv1_b": _bias_uniform(ks[1], (C1,), 1 * 9),
        "conv2_w": _xavier_uniform(ks[2], (C2, C1, 3, 3), C1 * 9, C2 * 9),
        "conv2_b": _bias_uniform(ks[3], (C2,), C1 * 9),
        "fc1_w": _xavier_uniform(ks[4], (HIDDEN, INPUT_DIM), INPUT_DIM, HIDDEN),
        "fc1_b": _bias_uniform(ks[5], (HIDDEN,), INPUT_DIM),
        "fc2_w": _xavier_uniform(ks[6], (OUT_DIM, HIDDEN), HIDDEN, OUT_DIM),
        "fc2_b": _bias_uniform(ks[7], (OUT_DIM,), HIDDEN),
    }


# --------------------------------- forward ----------------------------------

def sarsa_forward(kp, state):
    # state.view(1,1,H,W).float() -> (1,128) row: image in lanes [0, HW)
    x = jnp.pad(state.reshape(1, HW).astype(jnp.float32),
                ((0, 0), (0, LANES - HW)))

    grid_spec = pltpu.PrefetchScalarGridSpec(
        num_scalar_prefetch=0,
        grid=(NCHUNKS,),
        in_specs=[
            pl.BlockSpec((1, LANES), lambda k: (0, 0)),                # x
            pl.BlockSpec((9, 1, LANES), lambda k: (0, 0, 0)),          # masks
            pl.BlockSpec((C1, K1PAD), lambda k: (0, 0)),               # w1
            pl.BlockSpec((C1, 1), lambda k: (0, 0)),                   # b1
            pl.BlockSpec((9, C2, C1), lambda k: (0, 0, 0)),            # w2
            pl.BlockSpec((C2, 1), lambda k: (0, 0)),                   # b2
            pl.BlockSpec((PPC, LANES, HIDDEN), lambda k: (k, 0, 0)),   # wf1 (chunked)
            pl.BlockSpec((1, HIDDEN), lambda k: (0, 0)),               # bf1
            pl.BlockSpec((HIDDEN, OUT_PAD), lambda k: (0, 0)),         # wf2
            pl.BlockSpec((1, OUT_PAD), lambda k: (0, 0)),              # bf2
        ],
        out_specs=pl.BlockSpec((1, OUT_PAD), lambda k: (0, 0)),
        scratch_shapes=[
            pltpu.VMEM((PAIRS, 1, LANES), jnp.float32),   # packed conv2 activation
            pltpu.VMEM((1, HIDDEN), jnp.float32),         # fc1 accumulator
        ],
    )
    q_pad = pl.pallas_call(
        sarsa_kernel,
        out_shape=jax.ShapeDtypeStruct((1, OUT_PAD), jnp.float32),
        grid_spec=grid_spec,
        compiler_params=pltpu.CompilerParams(dimension_semantics=("arbitrary",)),
    )(x, kp["masks"], kp["w1"], kp["b1"], kp["w2"], kp["b2"],
      kp["wf1"], kp["bf1"], kp["wf2"], kp["bf2"])
    return q_pad[:, :OUT_DIM]


def reference_forward(params, state):
    """Pure-JAX reference mirroring the PyTorch forward (for verification)."""
    x = state.reshape(1, 1, H, W).astype(jnp.float32)
    y = jax.lax.conv_general_dilated(
        x, params["conv1_w"], (1, 1), ((1, 1), (1, 1)),
        dimension_numbers=("NCHW", "OIHW", "NCHW"))
    y = y + params["conv1_b"].reshape(1, C1, 1, 1)
    y = jax.lax.conv_general_dilated(
        y, params["conv2_w"], (1, 1), ((1, 1), (1, 1)),
        dimension_numbers=("NCHW", "OIHW", "NCHW"))
    y = y + params["conv2_b"].reshape(1, C2, 1, 1)
    flat = y.reshape(1, -1)
    h = jnp.maximum(flat @ params["fc1_w"].T + params["fc1_b"], 0.0)
    return h @ params["fc2_w"].T + params["fc2_b"]


if __name__ == "__main__":
    key = jax.random.PRNGKey(0)
    pkey, skey = jax.random.split(key)
    params = init_params(pkey)                 # PyTorch-layout params
    kparams = prepare_kernel_params(params)    # kernel layouts (incl. bf16 fc1), built ONCE
    state = jax.random.uniform(skey, (H, W), jnp.float32)

    fwd = jax.jit(sarsa_forward)
    q = jax.block_until_ready(fwd(kparams, state))
    assert q.shape == (1, OUT_DIM) and q.dtype == jnp.float32

    ref = jax.block_until_ready(reference_forward(params, state))
    # fc1 weight is bf16 in the kernel -> loosened tolerance vs. the f32 reference.
    np.testing.assert_allclose(np.asarray(q), np.asarray(ref), rtol=2e-2, atol=2e-2)

    print("KERNEL_OK")
</pallas_src>

<mosaic_0001>
module attributes {stable_mosaic.version = 11 : i64} {
  func.func @sarsa_kernel(%arg0: i32, %arg1: memref<1x128xf32, #tpu.memory_space<vmem>>, %arg2: memref<9x1x128xf32, #tpu.memory_space<vmem>>, %arg3: memref<32x16xf32, #tpu.memory_space<vmem>>, %arg4: memref<32x1xf32, #tpu.memory_space<vmem>>, %arg5: memref<9x64x32xf32, #tpu.memory_space<vmem>>, %arg6: memref<64x1xf32, #tpu.memory_space<vmem>>, %arg7: memref<8x128x128xbf16, #tpu.memory_space<vmem>>, %arg8: memref<1x128xf32, #tpu.memory_space<vmem>>, %arg9: memref<128x128xf32, #tpu.memory_space<vmem>>, %arg10: memref<1x128xf32, #tpu.memory_space<vmem>>, %arg11: memref<1x128xf32, #tpu.memory_space<vmem>>, %arg12: memref<32x1x128xf32, #tpu.memory_space<vmem>>, %arg13: memref<1x128xf32, #tpu.memory_space<vmem>>) attributes {dimension_semantics = [#tpu.dimension_semantics<arbitrary>], iteration_bounds = array<i64: 4>, scalar_prefetch = 0 : i64, scratch_operands = 2 : i64, tpu.core_type = #tpu.core_type<tc>, window_params = [{pipeline_mode = #tpu.pipeline_mode<synchronous>, transform_indices = @transform_0, window_bounds = array<i64: 1, 128>}, {pipeline_mode = #tpu.pipeline_mode<synchronous>, transform_indices = @transform_1, window_bounds = array<i64: 9, 1, 128>}, {pipeline_mode = #tpu.pipeline_mode<synchronous>, transform_indices = @transform_2, window_bounds = array<i64: 32, 16>}, {pipeline_mode = #tpu.pipeline_mode<synchronous>, transform_indices = @transform_3, window_bounds = array<i64: 32, 1>}, {pipeline_mode = #tpu.pipeline_mode<synchronous>, transform_indices = @transform_4, window_bounds = array<i64: 9, 64, 32>}, {pipeline_mode = #tpu.pipeline_mode<synchronous>, transform_indices = @transform_5, window_bounds = array<i64: 64, 1>}, {transform_indices = @transform_6, window_bounds = array<i64: 8, 128, 128>}, {pipeline_mode = #tpu.pipeline_mode<synchronous>, transform_indices = @transform_7, window_bounds = array<i64: 1, 128>}, {pipeline_mode = #tpu.pipeline_mode<synchronous>, transform_indices = @transform_8, window_bounds = array<i64: 128, 128>}, {pipeline_mode = #tpu.pipeline_mode<synchronous>, transform_indices = @transform_9, window_bounds = array<i64: 1, 128>}, {pipeline_mode = #tpu.pipeline_mode<synchronous>, transform_indices = @transform_10, window_bounds = array<i64: 1, 128>}]} {
    %c0_i32 = arith.constant 0 : i32
    %0 = arith.cmpi eq, %arg0, %c0_i32 : i32
    %1 = arith.extui %0 : i1 to i32
    %c0_i32_0 = arith.constant 0 : i32
    %2 = arith.cmpi ne, %1, %c0_i32_0 : i32
    scf.if %2 {
      %c0_11 = arith.constant 0 : index
      %c0_12 = arith.constant 0 : index
      %17 = vector.load %arg1[%c0_11, %c0_12] : memref<1x128xf32, #tpu.memory_space<vmem>>, vector<1x128xf32>
      %c9_i32 = arith.constant 9 : i32
      %18 = tpu.dynamic_rotate %17 by %c9_i32 dim 1 : vector<1x128xf32>, i32 -> vector<1x128xf32>
      %c0_13 = arith.constant 0 : index
      %c0_14 = arith.constant 0 : index
      %c0_15 = arith.constant 0 : index
      %19 = vector.load %arg2[%c0_13, %c0_14, %c0_15] : memref<9x1x128xf32, #tpu.memory_space<vmem>>, vector<1x1x128xf32>
      %20 = vector.shape_cast %19 : vector<1x1x128xf32> to vector<1x128xf32>
      %21 = arith.mulf %18, %20 : vector<1x128xf32>
      %c8_i32_16 = arith.constant 8 : i32
      %22 = tpu.dynamic_rotate %17 by %c8_i32_16 dim 1 : vector<1x128xf32>, i32 -> vector<1x128xf32>
      %c1 = arith.constant 1 : index
      %c0_17 = arith.constant 0 : index
      %c0_18 = arith.constant 0 : index
      %23 = vector.load %arg2[%c1, %c0_17, %c0_18] : memref<9x1x128xf32, #tpu.memory_space<vmem>>, vector<1x1x128xf32>
      %24 = vector.shape_cast %23 : vector<1x1x128xf32> to vector<1x128xf32>
      %25 = arith.mulf %22, %24 : vector<1x128xf32>
      %c7_i32 = arith.constant 7 : i32
      %26 = tpu.dynamic_rotate %17 by %c7_i32 dim 1 : vector<1x128xf32>, i32 -> vector<1x128xf32>
      %c2 = arith.constant 2 : index
      %c0_19 = arith.constant 0 : index
      %c0_20 = arith.constant 0 : index
      %27 = vector.load %arg2[%c2, %c0_19, %c0_20] : memref<9x1x128xf32, #tpu.memory_space<vmem>>, vector<1x1x128xf32>
      %28 = vector.shape_cast %27 : vector<1x1x128xf32> to vector<1x128xf32>
      %29 = arith.mulf %26, %28 : vector<1x128xf32>
      %c1_i32 = arith.constant 1 : i32
      %30 = tpu.dynamic_rotate %17 by %c1_i32 dim 1 : vector<1x128xf32>, i32 -> vector<1x128xf32>
      %c3 = arith.constant 3 : index
      %c0_21 = arith.constant 0 : index
      %c0_22 = arith.constant 0 : index
      %31 = vector.load %arg2[%c3, %c0_21, %c0_22] : memref<9x1x128xf32, #tpu.memory_space<vmem>>, vector<1x1x128xf32>
      %32 = vector.shape_cast %31 : vector<1x1x128xf32> to vector<1x128xf32>
      %33 = arith.mulf %30, %32 : vector<1x128xf32>
      %c4 = arith.constant 4 : index
      %c0_23 = arith.constant 0 : index
      %c0_24 = arith.constant 0 : index
      %34 = vector.load %arg2[%c4, %c0_23, %c0_24] : memref<9x1x128xf32, #tpu.memory_space<vmem>>, vector<1x1x128xf32>
      %35 = vector.shape_cast %34 : vector<1x1x128xf32> to vector<1x128xf32>
      %36 = arith.mulf %17, %35 : vector<1x128xf32>
      %c127_i32 = arith.constant 127 : i32
      %37 = tpu.dynamic_rotate %17 by %c127_i32 dim 1 : vector<1x128xf32>, i32 -> vector<1x128xf32>
      %c5 = arith.constant 5 : index
      %c0_25 = arith.constant 0 : index
      %c0_26 = arith.constant 0 : index
      %38 = vector.load %arg2[%c5, %c0_25, %c0_26] : memref<9x1x128xf32, #tpu.memory_space<vmem>>, vector<1x1x128xf32>
      %39 = vector.shape_cast %38 : vector<1x1x128xf32> to vector<1x128xf32>
      %40 = arith.mulf %37, %39 : vector<1x128xf32>
      %c121_i32 = arith.constant 121 : i32
      %41 = tpu.dynamic_rotate %17 by %c121_i32 dim 1 : vector<1x128xf32>, i32 -> vector<1x128xf32>
      %c6 = arith.constant 6 : index
      %c0_27 = arith.constant 0 : index
      %c0_28 = arith.constant 0 : index
      %42 = vector.load %arg2[%c6, %c0_27, %c0_28] : memref<9x1x128xf32, #tpu.memory_space<vmem>>, vector<1x1x128xf32>
      %43 = vector.shape_cast %42 : vector<1x1x128xf32> to vector<1x128xf32>
      %44 = arith.mulf %41, %43 : vector<1x128xf32>
      %c120_i32 = arith.constant 120 : i32
      %45 = tpu.dynamic_rotate %17 by %c120_i32 dim 1 : vector<1x128xf32>, i32 -> vector<1x128xf32>
      %c7 = arith.constant 7 : index
      %c0_29 = arith.constant 0 : index
      %c0_30 = arith.constant 0 : index
      %46 = vector.load %arg2[%c7, %c0_29, %c0_30] : memref<9x1x128xf32, #tpu.memory_space<vmem>>, vector<1x1x128xf32>
      %47 = vector.shape_cast %46 : vector<1x1x128xf32> to vector<1x128xf32>
      %48 = arith.mulf %45, %47 : vector<1x128xf32>
      %c119_i32 = arith.constant 119 : i32
      %49 = tpu.dynamic_rotate %17 by %c119_i32 dim 1 : vector<1x128xf32>, i32 -> vector<1x128xf32>
      %c8 = arith.constant 8 : index
      %c0_31 = arith.constant 0 : index
      %c0_32 = arith.constant 0 : index
      %50 = vector.load %arg2[%c8, %c0_31, %c0_32] : memref<9x1x128xf32, #tpu.memory_space<vmem>>, vector<1x1x128xf32>
      %51 = vector.shape_cast %50 : vector<1x1x128xf32> to vector<1x128xf32>
      %52 = arith.mulf %49, %51 : vector<1x128xf32>
      %cst_33 = arith.constant 0.000000e+00 : f32
      %53 = vector.broadcast %cst_33 : f32 to vector<7x128xf32>
      %54 = tpu.concatenate %21, %25, %29, %33, %36, %40, %44, %48, %52, %53 in 0 : vector<1x128xf32>, vector<1x128xf32>, vector<1x128xf32>, vector<1x128xf32>, vector<1x128xf32>, vector<1x128xf32>, vector<1x128xf32>, vector<1x128xf32>, vector<1x128xf32>, vector<7x128xf32> -> vector<16x128xf32>
      %c0_34 = arith.constant 0 : index
      %c0_35 = arith.constant 0 : index
      %55 = vector.load %arg3[%c0_34, %c0_35] : memref<32x16xf32, #tpu.memory_space<vmem>>, vector<32x16xf32>
      %cst_36 = arith.constant dense<0.000000e+00> : vector<32x128xf32>
      %56 = tpu.matmul %55, %54, %cst_36 {dimension_numbers = #tpu.dot_dimension_numbers<[1], [0], [0], [1], [0, 0, 1, 1], [], []>} : vector<32x16xf32>, vector<16x128xf32>, vector<32x128xf32> -> vector<32x128xf32>
      %c0_37 = arith.constant 0 : index
      %c0_38 = arith.constant 0 : index
      %57 = vector.load %arg4[%c0_37, %c0_38] : memref<32x1xf32, #tpu.memory_space<vmem>>, vector<32x1xf32>
      %58 = vector.broadcast %57 : vector<32x1xf32> to vector<32x128xf32>
      %59 = arith.addf %56, %58 : vector<32x128xf32>
      %cst_39 = arith.constant 0.000000e+00 : f32
      %60 = vector.broadcast %cst_39 : f32 to vector<64x128xf32>
      %c9_i32_40 = arith.constant 9 : i32
      %61 = tpu.dynamic_rotate %59 by %c9_i32_40 dim 1 : vector<32x128xf32>, i32 -> vector<32x128xf32>
      %c0_41 = arith.constant 0 : index
      %c0_42 = arith.constant 0 : index
      %c0_43 = arith.constant 0 : index
      %62 = vector.load %arg5[%c0_41, %c0_42, %c0_43] : memref<9x64x32xf32, #tpu.memory_space<vmem>>, vector<1x64x32xf32>
      %63 = vector.shape_cast %62 : vector<1x64x32xf32> to vector<64x32xf32>
      %c0_44 = arith.constant 0 : index
      %c0_45 = arith.constant 0 : index
      %c0_46 = arith.constant 0 : index
      %64 = vector.load %arg2[%c0_44, %c0_45, %c0_46] : memref<9x1x128xf32, #tpu.memory_space<vmem>>, vector<1x1x128xf32>
      %65 = vector.shape_cast %64 : vector<1x1x128xf32> to vector<1x128xf32>
      %66 = vector.broadcast %65 : vector<1x128xf32> to vector<32x128xf32>
      %67 = arith.mulf %61, %66 : vector<32x128xf32>
      %cst_47 = arith.constant dense<0.000000e+00> : vector<64x128xf32>
      %68 = tpu.matmul %63, %67, %cst_47 {dimension_numbers = #tpu.dot_dimension_numbers<[1], [0], [0], [1], [0, 0, 1, 1], [], []>} : vector<64x32xf32>, vector<32x128xf32>, vector<64x128xf32> -> vector<64x128xf32>
      %69 = arith.addf %60, %68 : vector<64x128xf32>
      %c8_i32_48 = arith.constant 8 : i32
      %70 = tpu.dynamic_rotate %59 by %c8_i32_48 dim 1 : vector<32x128xf32>, i32 -> vector<32x128xf32>
      %c1_49 = arith.constant 1 : index
      %c0_50 = arith.constant 0 : index
      %c0_51 = arith.constant 0 : index
      %71 = vector.load %arg5[%c1_49, %c0_50, %c0_51] : memref<9x64x32xf32, #tpu.memory_space<vmem>>, vector<1x64x32xf32>
      %72 = vector.shape_cast %71 : vector<1x64x32xf32> to vector<64x32xf32>
      %c1_52 = arith.constant 1 : index
      %c0_53 = arith.constant 0 : index
      %c0_54 = arith.constant 0 : index
      %73 = vector.load %arg2[%c1_52, %c0_53, %c0_54] : memref<9x1x128xf32, #tpu.memory_space<vmem>>, vector<1x1x128xf32>
      %74 = vector.shape_cast %73 : vector<1x1x128xf32> to vector<1x128xf32>
      %75 = vector.broadcast %74 : vector<1x128xf32> to vector<32x128xf32>
      %76 = arith.mulf %70, %75 : vector<32x128xf32>
      %cst_55 = arith.constant dense<0.000000e+00> : vector<64x128xf32>
      %77 = tpu.matmul %72, %76, %cst_55 {dimension_numbers = #tpu.dot_dimension_numbers<[1], [0], [0], [1], [0, 0, 1, 1], [], []>} : vector<64x32xf32>, vector<32x128xf32>, vector<64x128xf32> -> vector<64x128xf32>
      %78 = arith.addf %69, %77 : vector<64x128xf32>
      %c7_i32_56 = arith.constant 7 : i32
      %79 = tpu.dynamic_rotate %59 by %c7_i32_56 dim 1 : vector<32x128xf32>, i32 -> vector<32x128xf32>
      %c2_57 = arith.constant 2 : index
      %c0_58 = arith.constant 0 : index
      %c0_59 = arith.constant 0 : index
      %80 = vector.load %arg5[%c2_57, %c0_58, %c0_59] : memref<9x64x32xf32, #tpu.memory_space<vmem>>, vector<1x64x32xf32>
      %81 = vector.shape_cast %80 : vector<1x64x32xf32> to vector<64x32xf32>
      %c2_60 = arith.constant 2 : index
      %c0_61 = arith.constant 0 : index
      %c0_62 = arith.constant 0 : index
      %82 = vector.load %arg2[%c2_60, %c0_61, %c0_62] : memref<9x1x128xf32, #tpu.memory_space<vmem>>, vector<1x1x128xf32>
      %83 = vector.shape_cast %82 : vector<1x1x128xf32> to vector<1x128xf32>
      %84 = vector.broadcast %83 : vector<1x128xf32> to vector<32x128xf32>
      %85 = arith.mulf %79, %84 : vector<32x128xf32>
      %cst_63 = arith.constant dense<0.000000e+00> : vector<64x128xf32>
      %86 = tpu.matmul %81, %85, %cst_63 {dimension_numbers = #tpu.dot_dimension_numbers<[1], [0], [0], [1], [0, 0, 1, 1], [], []>} : vector<64x32xf32>, vector<32x128xf32>, vector<64x128xf32> -> vector<64x128xf32>
      %87 = arith.addf %78, %86 : vector<64x128xf32>
      %c1_i32_64 = arith.constant 1 : i32
      %88 = tpu.dynamic_rotate %59 by %c1_i32_64 dim 1 : vector<32x128xf32>, i32 -> vector<32x128xf32>
      %c3_65 = arith.constant 3 : index
      %c0_66 = arith.constant 0 : index
      %c0_67 = arith.constant 0 : index
      %89 = vector.load %arg5[%c3_65, %c0_66, %c0_67] : memref<9x64x32xf32, #tpu.memory_space<vmem>>, vector<1x64x32xf32>
      %90 = vector.shape_cast %89 : vector<1x64x32xf32> to vector<64x32xf32>
      %c3_68 = arith.constant 3 : index
      %c0_69 = arith.constant 0 : index
      %c0_70 = arith.constant 0 : index
      %91 = vector.load %arg2[%c3_68, %c0_69, %c0_70] : memref<9x1x128xf32, #tpu.memory_space<vmem>>, vector<1x1x128xf32>
      %92 = vector.shape_cast %91 : vector<1x1x128xf32> to vector<1x128xf32>
      %93 = vector.broadcast %92 : vector<1x128xf32> to vector<32x128xf32>
      %94 = arith.mulf %88, %93 : vector<32x128xf32>
      %cst_71 = arith.constant dense<0.000000e+00> : vector<64x128xf32>
      %95 = tpu.matmul %90, %94, %cst_71 {dimension_numbers = #tpu.dot_dimension_numbers<[1], [0], [0], [1], [0, 0, 1, 1], [], []>} : vector<64x32xf32>, vector<32x128xf32>, vector<64x128xf32> -> vector<64x128xf32>
      %96 = arith.addf %87, %95 : vector<64x128xf32>
      %c4_72 = arith.constant 4 : index
      %c0_73 = arith.constant 0 : index
      %c0_74 = arith.constant 0 : index
      %97 = vector.load %arg5[%c4_72, %c0_73, %c0_74] : memref<9x64x32xf32, #tpu.memory_space<vmem>>, vector<1x64x32xf32>
      %98 = vector.shape_cast %97 : vector<1x64x32xf32> to vector<64x32xf32>
      %c4_75 = arith.constant 4 : index
      %c0_76 = arith.constant 0 : index
      %c0_77 = arith.constant 0 : index
      %99 = vector.load %arg2[%c4_75, %c0_76, %c0_77] : memref<9x1x128xf32, #tpu.memory_space<vmem>>, vector<1x1x128xf32>
      %100 = vector.shape_cast %99 : vector<1x1x128xf32> to vector<1x128xf32>
      %101 = vector.broadcast %100 : vector<1x128xf32> to vector<32x128xf32>
      %102 = arith.mulf %59, %101 : vector<32x128xf32>
      %cst_78 = arith.constant dense<0.000000e+00> : vector<64x128xf32>
      %103 = tpu.matmul %98, %102, %cst_78 {dimension_numbers = #tpu.dot_dimension_numbers<[1], [0], [0], [1], [0, 0, 1, 1], [], []>} : vector<64x32xf32>, vector<32x128xf32>, vector<64x128xf32> -> vector<64x128xf32>
      %104 = arith.addf %96, %103 : vector<64x128xf32>
      %c127_i32_79 = arith.constant 127 : i32
      %105 = tpu.dynamic_rotate %59 by %c127_i32_79 dim 1 : vector<32x128xf32>, i32 -> vector<32x128xf32>
      %c5_80 = arith.constant 5 : index
      %c0_81 = arith.constant 0 : index
      %c0_82 = arith.constant 0 : index
      %106 = vector.load %arg5[%c5_80, %c0_81, %c0_82] : memref<9x64x32xf32, #tpu.memory_space<vmem>>, vector<1x64x32xf32>
      %107 = vector.shape_cast %106 : vector<1x64x32xf32> to vector<64x32xf32>
      %c5_83 = arith.constant 5 : index
      %c0_84 = arith.constant 0 : index
      %c0_85 = arith.constant 0 : index
      %108 = vector.load %arg2[%c5_83, %c0_84, %c0_85] : memref<9x1x128xf32, #tpu.memory_space<vmem>>, vector<1x1x128xf32>
      %109 = vector.shape_cast %108 : vector<1x1x128xf32> to vector<1x128xf32>
      %110 = vector.broadcast %109 : vector<1x128xf32> to vector<32x128xf32>
      %111 = arith.mulf %105, %110 : vector<32x128xf32>
      %cst_86 = arith.constant dense<0.000000e+00> : vector<64x128xf32>
      %112 = tpu.matmul %107, %111, %cst_86 {dimension_numbers = #tpu.dot_dimension_numbers<[1], [0], [0], [1], [0, 0, 1, 1], [], []>} : vector<64x32xf32>, vector<32x128xf32>, vector<64x128xf32> -> vector<64x128xf32>
      %113 = arith.addf %104, %112 : vector<64x128xf32>
      %c121_i32_87 = arith.constant 121 : i32
      %114 = tpu.dynamic_rotate %59 by %c121_i32_87 dim 1 : vector<32x128xf32>, i32 -> vector<32x128xf32>
      %c6_88 = arith.constant 6 : index
      %c0_89 = arith.constant 0 : index
      %c0_90 = arith.constant 0 : index
      %115 = vector.load %arg5[%c6_88, %c0_89, %c0_90] : memref<9x64x32xf32, #tpu.memory_space<vmem>>, vector<1x64x32xf32>
      %116 = vector.shape_cast %115 : vector<1x64x32xf32> to vector<64x32xf32>
      %c6_91 = arith.constant 6 : index
      %c0_92 = arith.constant 0 : index
      %c0_93 = arith.constant 0 : index
      %117 = vector.load %arg2[%c6_91, %c0_92, %c0_93] : memref<9x1x128xf32, #tpu.memory_space<vmem>>, vector<1x1x128xf32>
      %118 = vector.shape_cast %117 : vector<1x1x128xf32> to vector<1x128xf32>
      %119 = vector.broadcast %118 : vector<1x128xf32> to vector<32x128xf32>
      %120 = arith.mulf %114, %119 : vector<32x128xf32>
      %cst_94 = arith.constant dense<0.000000e+00> : vector<64x128xf32>
      %121 = tpu.matmul %116, %120, %cst_94 {dimension_numbers = #tpu.dot_dimension_numbers<[1], [0], [0], [1], [0, 0, 1, 1], [], []>} : vector<64x32xf32>, vector<32x128xf32>, vector<64x128xf32> -> vector<64x128xf32>
      %122 = arith.addf %113, %121 : vector<64x128xf32>
      %c120_i32_95 = arith.constant 120 : i32
      %123 = tpu.dynamic_rotate %59 by %c120_i32_95 dim 1 : vector<32x128xf32>, i32 -> vector<32x128xf32>
      %c7_96 = arith.constant 7 : index
      %c0_97 = arith.constant 0 : index
      %c0_98 = arith.constant 0 : index
      %124 = vector.load %arg5[%c7_96, %c0_97, %c0_98] : memref<9x64x32xf32, #tpu.memory_space<vmem>>, vector<1x64x32xf32>
      %125 = vector.shape_cast %124 : vector<1x64x32xf32> to vector<64x32xf32>
      %c7_99 = arith.constant 7 : index
      %c0_100 = arith.constant 0 : index
      %c0_101 = arith.constant 0 : index
      %126 = vector.load %arg2[%c7_99, %c0_100, %c0_101] : memref<9x1x128xf32, #tpu.memory_space<vmem>>, vector<1x1x128xf32>
      %127 = vector.shape_cast %126 : vector<1x1x128xf32> to vector<1x128xf32>
      %128 = vector.broadcast %127 : vector<1x128xf32> to vector<32x128xf32>
      %129 = arith.mulf %123, %128 : vector<32x128xf32>
      %cst_102 = arith.constant dense<0.000000e+00> : vector<64x128xf32>
      %130 = tpu.matmul %125, %129, %cst_102 {dimension_numbers = #tpu.dot_dimension_numbers<[1], [0], [0], [1], [0, 0, 1, 1], [], []>} : vector<64x32xf32>, vector<32x128xf32>, vector<64x128xf32> -> vector<64x128xf32>
      %131 = arith.addf %122, %130 : vector<64x128xf32>
      %c119_i32_103 = arith.constant 119 : i32
      %132 = tpu.dynamic_rotate %59 by %c119_i32_103 dim 1 : vector<32x128xf32>, i32 -> vector<32x128xf32>
      %c8_104 = arith.constant 8 : index
      %c0_105 = arith.constant 0 : index
      %c0_106 = arith.constant 0 : index
      %133 = vector.load %arg5[%c8_104, %c0_105, %c0_106] : memref<9x64x32xf32, #tpu.memory_space<vmem>>, vector<1x64x32xf32>
      %134 = vector.shape_cast %133 : vector<1x64x32xf32> to vector<64x32xf32>
      %c8_107 = arith.constant 8 : index
      %c0_108 = arith.constant 0 : index
      %c0_109 = arith.constant 0 : index
      %135 = vector.load %arg2[%c8_107, %c0_108, %c0_109] : memref<9x1x128xf32, #tpu.memory_space<vmem>>, vector<1x1x128xf32>
      %136 = vector.shape_cast %135 : vector<1x1x128xf32> to vector<1x128xf32>
      %137 = vector.broadcast %136 : vector<1x128xf32> to vector<32x128xf32>
      %138 = arith.mulf %132, %137 : vector<32x128xf32>
      %cst_110 = arith.constant dense<0.000000e+00> : vector<64x128xf32>
      %139 = tpu.matmul %134, %138, %cst_110 {dimension_numbers = #tpu.dot_dimension_numbers<[1], [0], [0], [1], [0, 0, 1, 1], [], []>} : vector<64x32xf32>, vector<32x128xf32>, vector<64x128xf32> -> vector<64x128xf32>
      %140 = arith.addf %131, %139 : vector<64x128xf32>
      %c0_111 = arith.constant 0 : index
      %c0_112 = arith.constant 0 : index
      %141 = vector.load %arg6[%c0_111, %c0_112] : memref<64x1xf32, #tpu.memory_space<vmem>>, vector<64x1xf32>
      %142 = vector.broadcast %141 : vector<64x1xf32> to vector<64x128xf32>
      %143 = arith.addf %140, %142 : vector<64x128xf32>
      %c4_113 = arith.constant 4 : index
      %c0_114 = arith.constant 0 : index
      %c0_115 = arith.constant 0 : index
      %144 = vector.load %arg2[%c4_113, %c0_114, %c0_115] : memref<9x1x128xf32, #tpu.memory_space<vmem>>, vector<1x1x128xf32>
      %145 = vector.shape_cast %144 : vector<1x1x128xf32> to vector<1x128xf32>
      %146 = vector.broadcast %145 : vector<1x128xf32> to vector<64x128xf32>
      %147 = arith.mulf %143, %146 : vector<64x128xf32>
      %148 = vector.extract_strided_slice %147 {offsets = [0, 0], sizes = [32, 128], strides = [1, 1]} : vector<64x128xf32> to vector<32x128xf32>
      %149 = vector.extract_strided_slice %147 {offsets = [32, 0], sizes = [32, 128], strides = [1, 1]} : vector<64x128xf32> to vector<32x128xf32>
      %c64_i32 = arith.constant 64 : i32
      %150 = tpu.dynamic_rotate %149 by %c64_i32 dim 1 : vector<32x128xf32>, i32 -> vector<32x128xf32>
      %151 = arith.addf %148, %150 : vector<32x128xf32>
      %152 = vector.shape_cast %151 : vector<32x128xf32> to vector<32x1x128xf32>
      %c0_116 = arith.constant 0 : index
      %c0_117 = arith.constant 0 : index
      %c0_118 = arith.constant 0 : index
      %153 = vector.load %arg12[%c0_116, %c0_117, %c0_118] : memref<32x1x128xf32, #tpu.memory_space<vmem>>, vector<32x1x128xf32>
      tpu.vector_store %arg12[%c0_116, %c0_117, %c0_118], %152 {strides = array<i32>} : memref<32x1x128xf32, #tpu.memory_space<vmem>>, vector<32x1x128xf32>,
      %c0_119 = arith.constant 0 : index
      %c0_120 = arith.constant 0 : index
      %154 = vector.load %arg8[%c0_119, %c0_120] : memref<1x128xf32, #tpu.memory_space<vmem>>, vector<1x128xf32>
      %c0_121 = arith.constant 0 : index
      %c0_122 = arith.constant 0 : index
      %155 = vector.load %arg13[%c0_121, %c0_122] : memref<1x128xf32, #tpu.memory_space<vmem>>, vector<1x128xf32>
      tpu.vector_store %arg13[%c0_121, %c0_122], %154 {strides = array<i32>} : memref<1x128xf32, #tpu.memory_space<vmem>>, vector<1x128xf32>,
    } else {
    }
    %c8_i32 = arith.constant 8 : i32
    %3 = arith.muli %arg0, %c8_i32 : i32
    %4 = tpu.assume_multiple %3, 8 : i32
    %5 = arith.index_cast %4 : i32 to index
    %c0 = arith.constant 0 : index
    %c0_1 = arith.constant 0 : index
    %6 = vector.load %arg12[%5, %c0, %c0_1] : memref<32x1x128xf32, #tpu.memory_space<vmem>>, vector<8x1x128xf32>
    %7 = arith.truncf %6 : vector<8x1x128xf32> to vector<8x1x128xbf16>
    %c0_2 = arith.constant 0 : index
    %c0_3 = arith.constant 0 : index
    %c0_4 = arith.constant 0 : index
    %8 = vector.load %arg7[%c0_2, %c0_3, %c0_4] : memref<8x128x128xbf16, #tpu.memory_space<vmem>>, vector<8x128x128xbf16>
    %cst = arith.constant dense<0.000000e+00> : vector<8x1x128xf32>
    %9 = tpu.matmul %7, %8, %cst {dimension_numbers = #tpu.dot_dimension_numbers<[2], [1], [1], [2], [0, 0, 0, 1, 1, 2], [0], [0]>} : vector<8x1x128xbf16>, vector<8x128x128xbf16>, vector<8x1x128xf32> -> vector<8x1x128xf32>
    %c0_5 = arith.constant 0 : index
    %c0_6 = arith.constant 0 : index
    %10 = vector.load %arg13[%c0_5, %c0_6] : memref<1x128xf32, #tpu.memory_space<vmem>>, vector<1x128xf32>
    %cst_7 = arith.constant dense<0.000000e+00> : vector<1x128xf32>
    %11 = vector.multi_reduction <add>, %9, %cst_7 [0] : vector<8x1x128xf32> to vector<1x128xf32>
    %12 = arith.addf %10, %11 : vector<1x128xf32>
    %c0_8 = arith.constant 0 : index
    %c0_9 = arith.constant 0 : index
    %13 = vector.load %arg13[%c0_8, %c0_9] : memref<1x128xf32, #tpu.memory_space<vmem>>, vector<1x128xf32>
    tpu.vector_store %arg13[%c0_8, %c0_9], %12 {strides = array<i32>} : memref<1x128xf32, #tpu.memory_space<vmem>>, vector<1x128xf32>,
    %c3_i32 = arith.constant 3 : i32
    %14 = arith.cmpi eq, %arg0, %c3_i32 : i32
    %15 = arith.extui %14 : i1 to i32
    %c0_i32_10 = arith.constant 0 : i32
    %16 = arith.cmpi ne, %15, %c0_i32_10 : i32
    scf.if %16 {
      %c0_11 = arith.constant 0 : index
      %c0_12 = arith.constant 0 : index
      %17 = vector.load %arg13[%c0_11, %c0_12] : memref<1x128xf32, #tpu.memory_space<vmem>>, vector<1x128xf32>
      %cst_13 = arith.constant 0.000000e+00 : f32
      %18 = vector.broadcast %cst_13 : f32 to vector<1x128xf32>
      %19 = arith.maximumf %17, %18 : vector<1x128xf32>
      %c0_14 = arith.constant 0 : index
      %c0_15 = arith.constant 0 : index
      %20 = vector.load %arg9[%c0_14, %c0_15] : memref<128x128xf32, #tpu.memory_space<vmem>>, vector<128x128xf32>
      %cst_16 = arith.constant dense<0.000000e+00> : vector<1x128xf32>
      %21 = tpu.matmul %19, %20, %cst_16 {dimension_numbers = #tpu.dot_dimension_numbers<[1], [0], [0], [1], [0, 0, 1, 1], [], []>} : vector<1x128xf32>, vector<128x128xf32>, vector<1x128xf32> -> vector<1x128xf32>
      %c0_17 = arith.constant 0 : index
      %c0_18 = arith.constant 0 : index
      %22 = vector.load %arg10[%c0_17, %c0_18] : memref<1x128xf32, #tpu.memory_space<vmem>>, vector<1x128xf32>
      %23 = arith.addf %21, %22 : vector<1x128xf32>
      %c0_19 = arith.constant 0 : index
      %c0_20 = arith.constant 0 : index
      %24 = vector.load %arg11[%c0_19, %c0_20] : memref<1x128xf32, #tpu.memory_space<vmem>>, vector<1x128xf32>
      tpu.vector_store %arg11[%c0_19, %c0_20], %23 {strides = array<i32>} : memref<1x128xf32, #tpu.memory_space<vmem>>, vector<1x128xf32>,
    } else {
    }
    return
  }
  func.func @transform_0(%arg0: i32) -> (i32, i32) {
    %c0_i32 = arith.constant 0 : i32
    %c0_i32_0 = arith.constant 0 : i32
    %c0_i32_1 = arith.constant 0 : i32
    return %c0_i32, %c0_i32_0 : i32, i32
  }
  func.func @transform_1(%arg0: i32) -> (i32, i32, i32) {
    %c0_i32 = arith.constant 0 : i32
    %c0_i32_0 = arith.constant 0 : i32
    %c0_i32_1 = arith.constant 0 : i32
    %c0_i32_2 = arith.constant 0 : i32
    return %c0_i32, %c0_i32_0, %c0_i32_1 : i32, i32, i32
  }
  func.func @transform_2(%arg0: i32) -> (i32, i32) {
    %c0_i32 = arith.constant 0 : i32
    %c0_i32_0 = arith.constant 0 : i32
    %c0_i32_1 = arith.constant 0 : i32
    return %c0_i32, %c0_i32_0 : i32, i32
  }
  func.func @transform_3(%arg0: i32) -> (i32, i32) {
    %c0_i32 = arith.constant 0 : i32
    %c0_i32_0 = arith.constant 0 : i32
    %c0_i32_1 = arith.constant 0 : i32
    return %c0_i32, %c0_i32_0 : i32, i32
  }
  func.func @transform_4(%arg0: i32) -> (i32, i32, i32) {
    %c0_i32 = arith.constant 0 : i32
    %c0_i32_0 = arith.constant 0 : i32
    %c0_i32_1 = arith.constant 0 : i32
    %c0_i32_2 = arith.constant 0 : i32
    return %c0_i32, %c0_i32_0, %c0_i32_1 : i32, i32, i32
  }
  func.func @transform_5(%arg0: i32) -> (i32, i32) {
    %c0_i32 = arith.constant 0 : i32
    %c0_i32_0 = arith.constant 0 : i32
    %c0_i32_1 = arith.constant 0 : i32
    return %c0_i32, %c0_i32_0 : i32, i32
  }
  func.func @transform_6(%arg0: i32) -> (i32, i32, i32) {
    %c0_i32 = arith.constant 0 : i32
    %c0_i32_0 = arith.constant 0 : i32
    %c0_i32_1 = arith.constant 0 : i32
    return %arg0, %c0_i32, %c0_i32_0 : i32, i32, i32
  }
  func.func @transform_7(%arg0: i32) -> (i32, i32) {
    %c0_i32 = arith.constant 0 : i32
    %c0_i32_0 = arith.constant 0 : i32
    %c0_i32_1 = arith.constant 0 : i32
    return %c0_i32, %c0_i32_0 : i32, i32
  }
  func.func @transform_8(%arg0: i32) -> (i32, i32) {
    %c0_i32 = arith.constant 0 : i32
    %c0_i32_0 = arith.constant 0 : i32
    %c0_i32_1 = arith.constant 0 : i32
    return %c0_i32, %c0_i32_0 : i32, i32
  }
  func.func @transform_9(%arg0: i32) -> (i32, i32) {
    %c0_i32 = arith.constant 0 : i32
    %c0_i32_0 = arith.constant 0 : i32
    %c0_i32_1 = arith.constant 0 : i32
    return %c0_i32, %c0_i32_0 : i32, i32
  }
  func.func @transform_10(%arg0: i32) -> (i32, i32) {
    %c0_i32 = arith.constant 0 : i32
    %c0_i32_0 = arith.constant 0 : i32
    %c0_i32_1 = arith.constant 0 : i32
    return %c0_i32, %c0_i32_0 : i32, i32
  }
}

</mosaic_0001>

<llo_original>
// kernel: sarsa_forward.1
$region0: #{sarsa_forward.1}
  #allocation0 [shape = 'u32[]', space=smem, size = 0x4, offset = 0x4, fixed_abs, tag = 'smem constant byte address 0x4 - core index']
  #allocation1 [shape = 'u32[144,128]{1,0:T(1,128)}', space=vmem, size = 0x12000, scoped, tag = 'internal scratch']
  #allocation2 [shape = 'f32[32,1,128]{2,1,0:T(1,128)}', space=vmem, size = 0x4000, scoped, tag = 'scratch operand']
  #allocation3 [shape = 'f32[1,128]{1,0:T(1,128)}', space=vmem, size = 0x200, scoped, tag = 'scratch operand']
  %s0 = inlined_call_operand.vmem [shape: f32[1,128], index: 0, kind: input, shape index: {}]
  %s1 = inlined_call_operand.vmem [shape: f32[9,1,128], index: 1, kind: input, shape index: {}]
  %s2 = inlined_call_operand.vmem [shape: f32[32,16], index: 2, kind: input, shape index: {}]
  %s3 = inlined_call_operand.vmem [shape: f32[32,1], index: 3, kind: input, shape index: {}]
  %s4 = inlined_call_operand.vmem [shape: f32[9,64,32], index: 4, kind: input, shape index: {}]
  %s5 = inlined_call_operand.vmem [shape: f32[64,1], index: 5, kind: input, shape index: {}]
  %s6 = inlined_call_operand.hbm [shape: bf16[32,128,128], index: 6, kind: input, shape index: {}]
  %s7 = inlined_call_operand.vmem [shape: f32[1,128], index: 7, kind: input, shape index: {}]
  %s8 = inlined_call_operand.vmem [shape: f32[128,128], index: 8, kind: input, shape index: {}]
  %s9 = inlined_call_operand.vmem [shape: f32[1,128], index: 9, kind: input, shape index: {}]
  %s10 = inlined_call_operand.hbm [shape: f32[1,128], index: 10, kind: output, shape index: {}]
  %s11 = sld [smem:[#allocation0]]
  $region85: #{sarsa_forward.1} parent=0
    _
  %s13 = ssub.s32 1, %s11
  %s14 = scalar_select 0, %s13, %s11
  $region1: #{sarsa_forward.1} parent=0
    #allocation4 [shape = 'u8[524288]{0}', space=vmem, size = 0x80000, scoped, tag = 'input window, operand 6']
    #allocation5 [shape = 's32[2]{0}', space=sflag, size = 0x8, scoped, tag = 'scoped memory for sarsa_forward.1']
    #allocation6 [shape = 's32[2]{0}', space=sflag, size = 0x8, scoped, tag = 'scoped memory for sarsa_forward.1']
    #allocation7 [shape = 'u8[512]{0}', space=vmem, size = 0x400, scoped, tag = 'output window, operand 0, single buffered']
    %15 = vsyncpa [#allocation5], 0
    %s16 = scalar_lea.sflag [#allocation5], 1
    %17 = vsyncpa %s16, 0
    %18 = vsyncpa [#allocation6], 0
    loop: start=0, step=1, limit=6
    $region2: #{sarsa_forward.1} parent=1 // loop_pre_header
      _
    $region3: #{sarsa_forward.1} parent=1 // loop_header
      %s20 = sphi 0, %s24
      %p21 = scmp.ge.s32.totalorder %s20, 6
      %s28 = sphi 0, %s28
      %s30 = sphi 0, %s28
      %s31 = sphi 0, %s30
      %s45 = sphi 0, %s31
      %s49 = sphi 0, %s49
      %s51 = sphi 0, %s49
      %s52 = sphi 0, %s51
      %s66 = sphi 0, %s52
      %s70 = sphi 0, %s70
      %s72 = sphi 0, %s70
      %s73 = sphi 0, %s72
      %s87 = sphi 0, %s73
      %s91 = sphi 0, %s91
      %s93 = sphi 0, %s91
      %s94 = sphi 0, %s93
      %s108 = sphi 0, %s94
      %s112 = sphi 0, %s112
      %s114 = sphi 0, %s112
      %s115 = sphi 0, %s114
      %s129 = sphi 0, %s115
      %s133 = sphi 0, %s133
      %s135 = sphi 0, %s133
      %s136 = sphi 0, %s135
      %s150 = sphi 0, %s136
      %s156 = sphi 0, %s158
      %s159 = sphi 0, %s156
      %s160 = sphi 0, %s159
      %s176 = sphi 0, %s160
      %s180 = sphi 0, %s180
      %s182 = sphi 0, %s180
      %s183 = sphi 0, %s182
      %s197 = sphi 0, %s183
      %s201 = sphi 0, %s201
      %s203 = sphi 0, %s201
      %s204 = sphi 0, %s203
      %s218 = sphi 0, %s204
      %s222 = sphi 0, %s222
      %s224 = sphi 0, %s222
      %s225 = sphi 0, %s224
      %s239 = sphi 0, %s225
      %s243 = sphi 0, %s243
      %s245 = sphi 0, %s243
      %s246 = sphi 0, %s245
      %s260 = sphi 0, %s246
    $region4: #{sarsa_forward.1} parent=1 // loop_header_branch
      %23 = sbr.rel (%p21) target = $region8
    $region5: #{sarsa_forward.1} parent=1 // loop_body
      %s25 = ssub.s32 %s20, 1
      %s26 = ssub.s32 %s20, 2
      %s27 = sadd.s32 %s20, 1
      %s29 = sadd.s32 %s28, 1
      %p32 = scmp.eq.s32.totalorder %s20, 3
      %p33 = scmp.ne.s32.totalorder %s28, %s30
      %p34 = scmp.eq.s32.totalorder %s20, 0
      %p35 = por %p33, %p34
      %p36 = scmp.ne.s32.totalorder %s28, %s30
      %p37 = scmp.eq.s32.totalorder %s25, 3
      %p38 = por %p36, %p37
      %p39 = scmp.ne.s32.totalorder %s30, %s31
      %p40 = scmp.eq.s32.totalorder %s25, 0
      %p41 = por %p39, %p40
      %p42 = scmp.ne.s32.totalorder %s30, %s31
      %p43 = scmp.eq.s32.totalorder %s26, 3
      %p44 = por %p42, %p43
      %p46 = scmp.ne.s32.totalorder %s31, %s45
      %p47 = scmp.eq.s32.totalorder %s26, 0
      %p48 = por %p46, %p47
      %s50 = sadd.s32 %s49, 1
      %p53 = scmp.eq.s32.totalorder %s20, 3
      %p54 = scmp.ne.s32.totalorder %s49, %s51
      %p55 = scmp.eq.s32.totalorder %s20, 0
      %p56 = por %p54, %p55
      %p57 = scmp.ne.s32.totalorder %s49, %s51
      %p58 = scmp.eq.s32.totalorder %s25, 3
      %p59 = por %p57, %p58
      %p60 = scmp.ne.s32.totalorder %s51, %s52
      %p61 = scmp.eq.s32.totalorder %s25, 0
      %p62 = por %p60, %p61
      %p63 = scmp.ne.s32.totalorder %s51, %s52
      %p64 = scmp.eq.s32.totalorder %s26, 3
      %p65 = por %p63, %p64
      %p67 = scmp.ne.s32.totalorder %s52, %s66
      %p68 = scmp.eq.s32.totalorder %s26, 0
      %p69 = por %p67, %p68
      %s71 = sadd.s32 %s70, 1
      %p74 = scmp.eq.s32.totalorder %s20, 3
      %p75 = scmp.ne.s32.totalorder %s70, %s72
      %p76 = scmp.eq.s32.totalorder %s20, 0
      %p77 = por %p75, %p76
      %p78 = scmp.ne.s32.totalorder %s70, %s72
      %p79 = scmp.eq.s32.totalorder %s25, 3
      %p80 = por %p78, %p79
      %p81 = scmp.ne.s32.totalorder %s72, %s73
      %p82 = scmp.eq.s32.totalorder %s25, 0
      %p83 = por %p81, %p82
      %p84 = scmp.ne.s32.totalorder %s72, %s73
      %p85 = scmp.eq.s32.totalorder %s26, 3
      %p86 = por %p84, %p85
      %p88 = scmp.ne.s32.totalorder %s73, %s87
      %p89 = scmp.eq.s32.totalorder %s26, 0
      %p90 = por %p88, %p89
      %s92 = sadd.s32 %s91, 1
      %p95 = scmp.eq.s32.totalorder %s20, 3
      %p96 = scmp.ne.s32.totalorder %s91, %s93
      %p97 = scmp.eq.s32.totalorder %s20, 0
      %p98 = por %p96, %p97
      %p99 = scmp.ne.s32.totalorder %s91, %s93
      %p100 = scmp.eq.s32.totalorder %s25, 3
      %p101 = por %p99, %p100
      %p102 = scmp.ne.s32.totalorder %s93, %s94
      %p103 = scmp.eq.s32.totalorder %s25, 0
      %p104 = por %p102, %p103
      %p105 = scmp.ne.s32.totalorder %s93, %s94
      %p106 = scmp.eq.s32.totalorder %s26, 3
      %p107 = por %p105, %p106
      %p109 = scmp.ne.s32.totalorder %s94, %s108
      %p110 = scmp.eq.s32.totalorder %s26, 0
      %p111 = por %p109, %p110
      %s113 = sadd.s32 %s112, 1
      %p116 = scmp.eq.s32.totalorder %s20, 3
      %p117 = scmp.ne.s32.totalorder %s112, %s114
      %p118 = scmp.eq.s32.totalorder %s20, 0
      %p119 = por %p117, %p118
      %p120 = scmp.ne.s32.totalorder %s112, %s114
      %p121 = scmp.eq.s32.totalorder %s25, 3
      %p122 = por %p120, %p121
      %p123 = scmp.ne.s32.totalorder %s114, %s115
      %p124 = scmp.eq.s32.totalorder %s25, 0
      %p125 = por %p123, %p124
      %p126 = scmp.ne.s32.totalorder %s114, %s115
      %p127 = scmp.eq.s32.totalorder %s26, 3
      %p128 = por %p126, %p127
      %p130 = scmp.ne.s32.totalorder %s115, %s129
      %p131 = scmp.eq.s32.totalorder %s26, 0
      %p132 = por %p130, %p131
      %s134 = sadd.s32 %s133, 1
      %p137 = scmp.eq.s32.totalorder %s20, 3
      %p138 = scmp.ne.s32.totalorder %s133, %s135
      %p139 = scmp.eq.s32.totalorder %s20, 0
      %p140 = por %p138, %p139
      %p141 = scmp.ne.s32.totalorder %s133, %s135
      %p142 = scmp.eq.s32.totalorder %s25, 3
      %p143 = por %p141, %p142
      %p144 = scmp.ne.s32.totalorder %s135, %s136
      %p145 = scmp.eq.s32.totalorder %s25, 0
      %p146 = por %p144, %p145
      %p147 = scmp.ne.s32.totalorder %s135, %s136
      %p148 = scmp.eq.s32.totalorder %s26, 3
      %p149 = por %p147, %p148
      %p151 = scmp.ne.s32.totalorder %s136, %s150
      %p152 = scmp.eq.s32.totalorder %s26, 0
      %p153 = por %p151, %p152
      %s154 = ssub.s32 %s20, %s27
      %p155 = scmp.eq.s32.totalorder %s154, 0
      %s157 = sadd.s32 %s156, 1
      %s158 = scalar_select %p155, %s156, %s157
      %p161 = pneg %p155
      %p162 = scmp.eq.s32.totalorder %s20, 3
      %p163 = por %p161, %p162
      %p164 = scmp.ne.s32.totalorder %s156, %s159
      %p165 = scmp.eq.s32.totalorder %s20, 0
      %p166 = por %p164, %p165
      %p167 = scmp.ne.s32.totalorder %s156, %s159
      %p168 = scmp.eq.s32.totalorder %s25, 3
      %p169 = por %p167, %p168
      %p170 = scmp.ne.s32.totalorder %s159, %s160
      %p171 = scmp.eq.s32.totalorder %s25, 0
      %p172 = por %p170, %p171
      %p173 = scmp.ne.s32.totalorder %s159, %s160
      %p174 = scmp.eq.s32.totalorder %s26, 3
      %p175 = por %p173, %p174
      %p177 = scmp.ne.s32.totalorder %s160, %s176
      %p178 = scmp.eq.s32.totalorder %s26, 0
      %p179 = por %p177, %p178
      %s181 = sadd.s32 %s180, 1
      %p184 = scmp.eq.s32.totalorder %s20, 3
      %p185 = scmp.ne.s32.totalorder %s180, %s182
      %p186 = scmp.eq.s32.totalorder %s20, 0
      %p187 = por %p185, %p186
      %p188 = scmp.ne.s32.totalorder %s180, %s182
      %p189 = scmp.eq.s32.totalorder %s25, 3
      %p190 = por %p188, %p189
      %p191 = scmp.ne.s32.totalorder %s182, %s183
      %p192 = scmp.eq.s32.totalorder %s25, 0
      %p193 = por %p191, %p192
      %p194 = scmp.ne.s32.totalorder %s182, %s183
      %p195 = scmp.eq.s32.totalorder %s26, 3
      %p196 = por %p194, %p195
      %p198 = scmp.ne.s32.totalorder %s183, %s197
      %p199 = scmp.eq.s32.totalorder %s26, 0
      %p200 = por %p198, %p199
      %s202 = sadd.s32 %s201, 1
      %p205 = scmp.eq.s32.totalorder %s20, 3
      %p206 = scmp.ne.s32.totalorder %s201, %s203
      %p207 = scmp.eq.s32.totalorder %s20, 0
      %p208 = por %p206, %p207
      %p209 = scmp.ne.s32.totalorder %s201, %s203
      %p210 = scmp.eq.s32.totalorder %s25, 3
      %p211 = por %p209, %p210
      %p212 = scmp.ne.s32.totalorder %s203, %s204
      %p213 = scmp.eq.s32.totalorder %s25, 0
      %p214 = por %p212, %p213
      %p215 = scmp.ne.s32.totalorder %s203, %s204
      %p216 = scmp.eq.s32.totalorder %s26, 3
      %p217 = por %p215, %p216
      %p219 = scmp.ne.s32.totalorder %s204, %s218
      %p220 = scmp.eq.s32.totalorder %s26, 0
      %p221 = por %p219, %p220
      %s223 = sadd.s32 %s222, 1
      %p226 = scmp.eq.s32.totalorder %s20, 3
      %p227 = scmp.ne.s32.totalorder %s222, %s224
      %p228 = scmp.eq.s32.totalorder %s20, 0
      %p229 = por %p227, %p228
      %p230 = scmp.ne.s32.totalorder %s222, %s224
      %p231 = scmp.eq.s32.totalorder %s25, 3
      %p232 = por %p230, %p231
      %p233 = scmp.ne.s32.totalorder %s224, %s225
      %p234 = scmp.eq.s32.totalorder %s25, 0
      %p235 = por %p233, %p234
      %p236 = scmp.ne.s32.totalorder %s224, %s225
      %p237 = scmp.eq.s32.totalorder %s26, 3
      %p238 = por %p236, %p237
      %p240 = scmp.ne.s32.totalorder %s225, %s239
      %p241 = scmp.eq.s32.totalorder %s26, 0
      %p242 = por %p240, %p241
      %s244 = sadd.s32 %s243, 1
      %p247 = scmp.eq.s32.totalorder %s20, 3
      %p248 = scmp.ne.s32.totalorder %s243, %s245
      %p249 = scmp.eq.s32.totalorder %s20, 0
      %p250 = por %p248, %p249
      %p251 = scmp.ne.s32.totalorder %s243, %s245
      %p252 = scmp.eq.s32.totalorder %s25, 3
      %p253 = por %p251, %p252
      %p254 = scmp.ne.s32.totalorder %s245, %s246
      %p255 = scmp.eq.s32.totalorder %s25, 0
      %p256 = por %p254, %p255
      %p257 = scmp.ne.s32.totalorder %s245, %s246
      %p258 = scmp.eq.s32.totalorder %s26, 3
      %p259 = por %p257, %p258
      %p261 = scmp.ne.s32.totalorder %s246, %s260
      %p262 = scmp.eq.s32.totalorder %s26, 0
      %p263 = por %p261, %p262
      %p264 = scmp.le.s32.totalorder 1, %s20
      %p265 = scmp.lt.s32.totalorder %s20, 5
      %p266 = pnand %p264, %p265
      %p267 = pneg %p266
      // Predicated region
      $region9: #{sarsa_forward.1} parent=5 // pred_check
        _
      $region10: #{sarsa_forward.1} parent=5 // pred_check_branch
        %269 = sbr.rel (%p266) target = $region12
      $region11: #{sarsa_forward.1} parent=5 // pred_region
        %s270 = ssub.s32 %s20, 1
        // Predicated region
        $region13: #{sarsa_forward.1} parent=11 // pred_check
          %p271 = pneg %p41
        $region14: #{sarsa_forward.1} parent=11 // pred_check_branch
          %273 = sbr.rel (%p271) target = $region16
        $region15: #{sarsa_forward.1} parent=11 // pred_region
          _
        $region16: #{sarsa_forward.1} parent=11 // pred_fallthru
          _
        // Predicated region
        $region17: #{sarsa_forward.1} parent=11 // pred_check
          %p274 = pneg %p62
        $region18: #{sarsa_forward.1} parent=11 // pred_check_branch
          %276 = sbr.rel (%p274) target = $region20
        $region19: #{sarsa_forward.1} parent=11 // pred_region
          _
        $region20: #{sarsa_forward.1} parent=11 // pred_fallthru
          _
        // Predicated region
        $region21: #{sarsa_forward.1} parent=11 // pred_check
          %p277 = pneg %p83
        $region22: #{sarsa_forward.1} parent=11 // pred_check_branch
          %279 = sbr.rel (%p277) target = $region24
        $region23: #{sarsa_forward.1} parent=11 // pred_region
          _
        $region24: #{sarsa_forward.1} parent=11 // pred_fallthru
          _
        // Predicated region
        $region25: #{sarsa_forward.1} parent=11 // pred_check
          %p280 = pneg %p104
        $region26: #{sarsa_forward.1} parent=11 // pred_check_branch
          %282 = sbr.rel (%p280) target = $region28
        $region27: #{sarsa_forward.1} parent=11 // pred_region
          _
        $region28: #{sarsa_forward.1} parent=11 // pred_fallthru
          _
        // Predicated region
        $region29: #{sarsa_forward.1} parent=11 // pred_check
          %p283 = pneg %p125
        $region30: #{sarsa_forward.1} parent=11 // pred_check_branch
          %285 = sbr.rel (%p283) target = $region32
        $region31: #{sarsa_forward.1} parent=11 // pred_region
          _
        $region32: #{sarsa_forward.1} parent=11 // pred_fallthru
          _
        // Predicated region
        $region33: #{sarsa_forward.1} parent=11 // pred_check
          %p286 = pneg %p146
        $region34: #{sarsa_forward.1} parent=11 // pred_check_branch
          %288 = sbr.rel (%p286) target = $region36
        $region35: #{sarsa_forward.1} parent=11 // pred_region
          _
        $region36: #{sarsa_forward.1} parent=11 // pred_fallthru
          _
        // Predicated region
        $region37: #{sarsa_forward.1} parent=11 // pred_check
          %p289 = pneg %p193
        $region38: #{sarsa_forward.1} parent=11 // pred_check_branch
          %291 = sbr.rel (%p289) target = $region40
        $region39: #{sarsa_forward.1} parent=11 // pred_region
          _
        $region40: #{sarsa_forward.1} parent=11 // pred_fallthru
          _
        // Predicated region
        $region41: #{sarsa_forward.1} parent=11 // pred_check
          %p292 = pneg %p214
        $region42: #{sarsa_forward.1} parent=11 // pred_check_branch
          %294 = sbr.rel (%p292) target = $region44
        $region43: #{sarsa_forward.1} parent=11 // pred_region
          _
        $region44: #{sarsa_forward.1} parent=11 // pred_fallthru
          _
        // Predicated region
        $region45: #{sarsa_forward.1} parent=11 // pred_check
          %p295 = pneg %p235
        $region46: #{sarsa_forward.1} parent=11 // pred_check_branch
          %297 = sbr.rel (%p295) target = $region48
        $region47: #{sarsa_forward.1} parent=11 // pred_region
          _
        $region48: #{sarsa_forward.1} parent=11 // pred_fallthru
          _
      $region12: #{sarsa_forward.1} parent=5 // pred_fallthru
        _
      %p298 = scmp.lt.s32.totalorder %s20, 4
      // Predicated region
      $region49: #{sarsa_forward.1} parent=5 // pred_check
        %p299 = pneg %p298
      $region50: #{sarsa_forward.1} parent=5 // pred_check_branch
        %301 = sbr.rel (%p299) target = $region52
      $region51: #{sarsa_forward.1} parent=5 // pred_region
        // Predicated region
        $region53: #{sarsa_forward.1} parent=51 // pred_check
          %p302 = pneg %p166
        $region54: #{sarsa_forward.1} parent=51 // pred_check_branch
          %304 = sbr.rel (%p302) target = $region56
        $region55: #{sarsa_forward.1} parent=51 // pred_region
          %s305 = sand.u32 %s156, 1
          %s306 = scalar_lea.sflag [#allocation5], %s305
          %s307 = sand.u32 %s156, 1
          %s308 = smul.addr %s307, 512
          %s309 = scalar_lea.vmem [#allocation4], %s308
          %s310 = smul.u32 8, %s20
          %s312 = ssub.s32 8192, 8192
          %313 = vsyncadd %s306, %s312
          %s314 = smul.addr %s310, 16
          %s315 = smul.addr %s314, 64
          %s316 = scalar_lea.hbm %s6, %s315
          %s317 = sshll.u32 %s309, 4
          %s318 = int_to_ptr.vmem [resolvable:$true] %s317
          %323 = dma.hbm_to_vmem [thread:$0]  %s316, 8192, %s318, %s306, 64, 64, 4
        $region56: #{sarsa_forward.1} parent=51 // pred_fallthru
          _
      $region52: #{sarsa_forward.1} parent=5 // pred_fallthru
        _
      %p324 = scmp.le.s32.totalorder 1, %s20
      %p325 = scmp.lt.s32.totalorder %s20, 5
      %p326 = pnand %p324, %p325
      %p327 = pneg %p326
      // Predicated region
      $region57: #{sarsa_forward.1} parent=5 // pred_check
        _
      $region58: #{sarsa_forward.1} parent=5 // pred_check_branch
        %329 = sbr.rel (%p326) target = $region60
      $region59: #{sarsa_forward.1} parent=5 // pred_region
        %s330 = ssub.s32 %s20, 1
        %s331 = sand.u32 %s159, 1
        %s332 = scalar_lea.sflag [#allocation5], %s331
        %s333 = sand.u32 %s159, 1
        %s334 = smul.addr %s333, 512
        %s335 = scalar_lea.vmem [#allocation4], %s334
        // Predicated region
        $region61: #{sarsa_forward.1} parent=59 // pred_check
          %p336 = pneg %p172
        $region62: #{sarsa_forward.1} parent=59 // pred_check_branch
          %338 = sbr.rel (%p336) target = $region64
        $region63: #{sarsa_forward.1} parent=59 // pred_region
          %339 = dma.done %s332, 8192
        $region64: #{sarsa_forward.1} parent=59 // pred_fallthru
          _
        %p340 = pneg %p41
        %p341 = pneg %p38
        %p342 = pneg %p62
        %p343 = pneg %p59
        %p344 = pneg %p83
        %p345 = pneg %p80
        %p346 = pneg %p104
        %p347 = pneg %p101
        %p348 = pneg %p125
        %p349 = pneg %p122
        %p350 = pneg %p146
        %p351 = pneg %p143
        %s352 = sand.u32 %s159, 1
        %s353 = scalar_lea.sflag [#allocation5], %s352
        %s354 = sand.u32 %s159, 1
        %s355 = smul.addr %s354, 512
        %s356 = scalar_lea.vmem [#allocation4], %s355
        %p357 = pneg %p172
        %p358 = pneg %p169
        %p359 = pneg %p193
        %p360 = pneg %p190
        %p361 = pneg %p214
        %p362 = pneg %p211
        %p363 = pneg %p235
        %p364 = pneg %p232
        %p365 = pneg %p256
        %p366 = pneg %p253
        %s367 = smul.u32 8, %s25
        %p369 = scmp.eq.s32.totalorder %s25, 0
        // Predicated region
        $region65: #{sarsa_forward.1} parent=59 // pred_check
          %p370 = pneg %p369
        $region66: #{sarsa_forward.1} parent=59 // pred_check_branch
          %372 = sbr.rel (%p370) target = $region68
        $region67: #{sarsa_forward.1} parent=59 // pred_region
          %v373 = vld [vmem:[%s0] sm:$0x1]
          %374 = vrot.lane.b32.xlu0 %v373, 9
          %v375 = vpop.permute.xlu0 %374
          %v376 = vld [vmem:[%s1] sm:$0x1]
          %v377 = vmul.f32 %v375, %v376
          %378 = vrot.lane.b32.xlu0 %v373, 8
          %v379 = vpop.permute.xlu0 %378
          %s380 = scalar_lea.vmem %s1, 1
          %v381 = vld [vmem:[%s380] sm:$0x1]
          %v382 = vmul.f32 %v379, %v381
          %383 = vrot.lane.b32.xlu0 %v373, 7
          %v384 = vpop.permute.xlu0 %383
          %s385 = scalar_lea.vmem %s1, 2
          %v386 = vld [vmem:[%s385] sm:$0x1]
          %v387 = vmul.f32 %v384, %v386
          %388 = vrot.lane.b32.xlu0 %v373, 1
          %v389 = vpop.permute.xlu0 %388
          %s390 = scalar_lea.vmem %s1, 3
          %v391 = vld [vmem:[%s390] sm:$0x1]
          %v392 = vmul.f32 %v389, %v391
          %s393 = scalar_lea.vmem %s1, 4
          %v394 = vld [vmem:[%s393] sm:$0x1]
          %v395 = vmul.f32 %v373, %v394
          %396 = vrot.lane.b32.xlu0 %v373, 127
          %v397 = vpop.permute.xlu0 %396
          %s398 = scalar_lea.vmem %s1, 5
          %v399 = vld [vmem:[%s398] sm:$0x1]
          %v400 = vmul.f32 %v397, %v399
          %401 = vrot.lane.b32.xlu0 %v373, 121
          %v402 = vpop.permute.xlu0 %401
          %s403 = scalar_lea.vmem %s1, 6
          %v404 = vld [vmem:[%s403] sm:$0x1]
          %v405 = vmul.f32 %v402, %v404
          %406 = vrot.lane.b32.xlu0 %v373, 120
          %v407 = vpop.permute.xlu0 %406
          %s408 = scalar_lea.vmem %s1, 7
          %v409 = vld [vmem:[%s408] sm:$0x1]
          %v410 = vmul.f32 %v407, %v409
          %411 = vrot.lane.b32.xlu0 %v373, 119
          %v412 = vpop.permute.xlu0 %411
          %s413 = scalar_lea.vmem %s1, 8
          %v414 = vld [vmem:[%s413] sm:$0x1]
          %v415 = vmul.f32 %v412, %v414
          %v417 = vrot.slane %v382, 7
          %v420 = vrot.slane %v387, 6
          %v423 = vrot.slane %v392, 5
          %v426 = vlaneseq
          %v427 = vshrl.u32 %v426, 7
          %v428 = vsub.s32 0, %v427
          %v429 = vrot.slane %v395, %v428
          %v432 = vrot.slane %v400, 3
          %v435 = vrot.slane %v405, 2
          %v438 = vrot.slane %v410, 1
          %vm440 = vcmask 1040384
          %v441 = vsel %vm440, %v377, %v417
          %vm442 = vcmask 1041408
          %v443 = vsel %vm442, %v441, %v420
          %vm444 = vcmask 1042432
          %v445 = vsel %vm444, %v443, %v423
          %vm446 = vcmask 1043456
          %v447 = vsel %vm446, %v445, %v429
          %vm448 = vcmask 1044480
          %v449 = vsel %vm448, %v447, %v432
          %vm450 = vcmask 1045504
          %v451 = vsel %vm450, %v449, %v435
          %vm452 = vcmask 1046528
          %v453 = vsel %vm452, %v451, %v438
          %v454 = vsel %vm440, %v415, 0.0
          %v455 = vld [vmem:[%s2] sm:$0xff]
          %v456 = vld [vmem:[%s2 + $0x8] sm:$0xff]
          %v457 = vld [vmem:[%s2 + $0x10] sm:$0xff]
          %v458 = vld [vmem:[%s2 + $0x18] sm:$0xff]
          %v459 = vld [vmem:[%s3] sm:$0xff]
          %v460 = vld [vmem:[%s3 + $0x8] sm:$0xff]
          %v461 = vld [vmem:[%s3 + $0x10] sm:$0xff]
          %v462 = vld [vmem:[%s3 + $0x18] sm:$0xff]
          %464 = vset.pattern.permute.xlu0 0
          %465 = vperm.xlu0 %464, %v459
          %v466 = vpop.permute.xlu0 %465
          %469 = vset.pattern.permute.xlu0 0
          %470 = vperm.xlu0 %469, %v460
          %v471 = vpop.permute.xlu0 %470
          %474 = vset.pattern.permute.xlu0 0
          %475 = vperm.xlu0 %474, %v461
          %v476 = vpop.permute.xlu0 %475
          %479 = vset.pattern.permute.xlu0 0
          %480 = vperm.xlu0 %479, %v462
          %v481 = vpop.permute.xlu0 %480
          %vm483 = vcmask 130048
          %v485 = vsel %vm483, %v455, 0
          %v488 = vsel %vm483, %v456, 0
          %v491 = vsel %vm483, %v457, 0
          %v494 = vsel %vm483, %v458, 0
          %496 = vmatprep.subr.mxu0 0.0
          %497 = vmatpush1.msra.mxu0 0.0
          %498 = vmatprep.subr.mxu0 0.0
          %499 = vmatpush1.msra.mxu0 0.0
          %500 = vmatprep.subr.mxu0 0.0
          %501 = vmatpush1.msra.mxu0 0.0
          %502 = vmatprep.subr.mxu0 0.0
          %503 = vmatpush1.msra.mxu0 0.0
          %504 = vmatprep.subr.mxu0 0.0
          %505 = vmatpush1.msra.mxu0 0.0
          %506 = vmatprep.subr.mxu0 0.0
          %507 = vmatpush1.msra.mxu0 0.0
          %508 = vmatprep.subr.mxu0 0.0
          %509 = vmatpush1.msra.mxu0 0.0
          %510 = vmatprep.subr.mxu0 0.0
          %511 = vmatpush1.msra.mxu0 0.0
          %512 = vmatprep.subr.mxu0 0.0
          %513 = vmatpush1.msra.mxu0 0.0
          %514 = vmatprep.subr.mxu0 0.0
          %515 = vmatpush1.msra.mxu0 0.0
          %516 = vmatprep.subr.mxu0 0.0
          %517 = vmatpush1.msra.mxu0 0.0
          %518 = vmatprep.subr.mxu0 0.0
          %519 = vmatpush1.msra.mxu0 0.0
          %520 = vmatprep.subr.mxu0 0.0
          %521 = vmatpush1.msra.mxu0 0.0
          %522 = vmatprep.subr.mxu0 0.0
          %523 = vmatpush1.msra.mxu0 0.0
          %524 = vmatprep.subr.mxu0 0.0
          %525 = vmatpush1.msra.mxu0 %v454
          %526 = vmatprep.subr.mxu0 0.0
          %527 = vmatpush1.msra.mxu0 %v453
          %528 = vmatprep.subr.mxu0 0.0
          %529 = vmatpush2.msra.mxu0 0.0
          %530 = vmatprep.subr.mxu0 0.0
          %531 = vmatpush2.msra.mxu0 0.0
          %532 = vmatprep.subr.mxu0 0.0
          %533 = vmatpush2.msra.mxu0 0.0
          %534 = vmatprep.subr.mxu0 0.0
          %535 = vmatpush2.msra.mxu0 0.0
          %536 = vmatprep.subr.mxu0 0.0
          %537 = vmatpush2.msra.mxu0 0.0
          %538 = vmatprep.subr.mxu0 0.0
          %539 = vmatpush2.msra.mxu0 0.0
          %540 = vmatprep.subr.mxu0 0.0
          %541 = vmatpush2.msra.mxu0 0.0
          %542 = vmatprep.subr.mxu0 0.0
          %543 = vmatpush2.msra.mxu0 0.0
          %544 = vmatprep.subr.mxu0 0.0
          %545 = vmatpush2.msra.mxu0 0.0
          %546 = vmatprep.subr.mxu0 0.0
          %547 = vmatpush2.msra.mxu0 0.0
          %548 = vmatprep.subr.mxu0 0.0
          %549 = vmatpush2.msra.mxu0 0.0
          %550 = vmatprep.subr.mxu0 0.0
          %551 = vmatpush2.msra.mxu0 0.0
          %552 = vmatprep.subr.mxu0 0.0
          %553 = vmatpush2.msra.mxu0 0.0
          %554 = vmatprep.subr.mxu0 0.0
          %555 = vmatpush2.msra.mxu0 0.0
          %556 = vmatprep.subr.mxu0 0.0
          %557 = vmatpush2.msra.mxu0 0.0
          %558 = vmatprep.subr.mxu0 0.0
          %559 = vmatpush2.msra.mxu0 0.0
          %560 = vmatprep.mubr.f32.mxu0 0.0
          %561 = vmatmul.mubr.f32.gmra.mxu0 %v485
          %v562 = vpop.f32.mrf.mxu0
          %v563 = vadd.f32 %v466, %v562
          %v564 = vpop.f32.mrf.mxu0
          %565 = vmatprep.mubr.f32.mxu0 0.0
          %566 = vmatmul.mubr.f32.gmra.mxu0 %v488
          %v567 = vpop.f32.mrf.mxu0
          %v568 = vadd.f32 %v471, %v567
          %v569 = vpop.f32.mrf.mxu0
          %570 = vmatprep.mubr.f32.mxu0 0.0
          %571 = vmatmul.mubr.f32.gmra.mxu0 %v491
          %v572 = vpop.f32.mrf.mxu0
          %v573 = vadd.f32 %v476, %v572
          %v574 = vpop.f32.mrf.mxu0
          %575 = vmatprep.mubr.f32.mxu0 0.0
          %576 = vmatmul.mubr.f32.gmra.mxu0 %v494
          %v577 = vpop.f32.mrf.mxu0
          %v578 = vadd.f32 %v481, %v577
          %v579 = vpop.f32.mrf.mxu0
          %580 = vdwg.mxu0
          %581 = vrot.lane.b32.xlu0 %v563, 9
          %v582 = vpop.permute.xlu0 %581
          %583 = vrot.lane.b32.xlu0 %v568, 9
          %v584 = vpop.permute.xlu0 %583
          %585 = vrot.lane.b32.xlu0 %v573, 9
          %v586 = vpop.permute.xlu0 %585
          %587 = vrot.lane.b32.xlu0 %v578, 9
          %v588 = vpop.permute.xlu0 %587
          %v589 = vld [vmem:[%s4] sm:$0xff]
          %v590 = vld [vmem:[%s4 + $0x8] sm:$0xff]
          %v591 = vld [vmem:[%s4 + $0x10] sm:$0xff]
          %v592 = vld [vmem:[%s4 + $0x18] sm:$0xff]
          %v593 = vld [vmem:[%s4 + $0x20] sm:$0xff]
          %v594 = vld [vmem:[%s4 + $0x28] sm:$0xff]
          %v595 = vld [vmem:[%s4 + $0x30] sm:$0xff]
          %v596 = vld [vmem:[%s4 + $0x38] sm:$0xff]
          %v598 = vlaneseq
          %v599 = vshrl.u32 %v598, 7
          %v600 = vsub.s32 0, %v599
          %v601 = vrot.slane %v376, %v600
          %v603 = vmul.f32 %v582, %v601
          %v604 = vmul.f32 %v584, %v601
          %v605 = vmul.f32 %v586, %v601
          %v606 = vmul.f32 %v588, %v601
          %607 = vrot.lane.b32.xlu0 %v563, 8
          %v608 = vpop.permute.xlu0 %607
          %609 = vrot.lane.b32.xlu0 %v568, 8
          %v610 = vpop.permute.xlu0 %609
          %611 = vrot.lane.b32.xlu0 %v573, 8
          %v612 = vpop.permute.xlu0 %611
          %613 = vrot.lane.b32.xlu0 %v578, 8
          %v614 = vpop.permute.xlu0 %613
          %s615 = scalar_lea.vmem %s4, 64
          %v616 = vld [vmem:[%s615] sm:$0xff]
          %v617 = vld [vmem:[%s615 + $0x8] sm:$0xff]
          %v618 = vld [vmem:[%s615 + $0x10] sm:$0xff]
          %v619 = vld [vmem:[%s615 + $0x18] sm:$0xff]
          %v620 = vld [vmem:[%s615 + $0x20] sm:$0xff]
          %v621 = vld [vmem:[%s615 + $0x28] sm:$0xff]
          %v622 = vld [vmem:[%s615 + $0x30] sm:$0xff]
          %v623 = vld [vmem:[%s615 + $0x38] sm:$0xff]
          %v625 = vlaneseq
          %v626 = vshrl.u32 %v625, 7
          %v627 = vsub.s32 0, %v626
          %v628 = vrot.slane %v381, %v627
          %v630 = vmul.f32 %v608, %v628
          %v631 = vmul.f32 %v610, %v628
          %v632 = vmul.f32 %v612, %v628
          %v633 = vmul.f32 %v614, %v628
          %vm634 = vcmask 261120
          %v636 = vsel %vm634, %v616, 0
          %v639 = vsel %vm634, %v617, 0
          %v642 = vsel %vm634, %v618, 0
          %v645 = vsel %vm634, %v619, 0
          %v648 = vsel %vm634, %v620, 0
          %v651 = vsel %vm634, %v621, 0
          %v654 = vsel %vm634, %v622, 0
          %v657 = vsel %vm634, %v623, 0
          %659 = vmatprep.subr.mxu0 0.0
          %660 = vmatpush1.msra.mxu0 0.0
          %661 = vmatprep.subr.mxu0 0.0
          %662 = vmatpush1.msra.mxu0 0.0
          %663 = vmatprep.subr.mxu0 0.0
          %664 = vmatpush1.msra.mxu0 0.0
          %665 = vmatprep.subr.mxu0 0.0
          %666 = vmatpush1.msra.mxu0 0.0
          %667 = vmatprep.subr.mxu0 0.0
          %668 = vmatpush1.msra.mxu0 0.0
          %669 = vmatprep.subr.mxu0 0.0
          %670 = vmatpush1.msra.mxu0 0.0
          %671 = vmatprep.subr.mxu0 0.0
          %672 = vmatpush1.msra.mxu0 0.0
          %673 = vmatprep.subr.mxu0 0.0
          %674 = vmatpush1.msra.mxu0 0.0
          %675 = vmatprep.subr.mxu0 0.0
          %676 = vmatpush1.msra.mxu0 0.0
          %677 = vmatprep.subr.mxu0 0.0
          %678 = vmatpush1.msra.mxu0 0.0
          %679 = vmatprep.subr.mxu0 0.0
          %680 = vmatpush1.msra.mxu0 0.0
          %681 = vmatprep.subr.mxu0 0.0
          %682 = vmatpush1.msra.mxu0 0.0
          %683 = vmatprep.subr.mxu0 0.0
          %684 = vmatpush1.msra.mxu0 %v633
          %685 = vmatprep.subr.mxu0 0.0
          %686 = vmatpush1.msra.mxu0 %v632
          %687 = vmatprep.subr.mxu0 0.0
          %688 = vmatpush1.msra.mxu0 %v631
          %689 = vmatprep.subr.mxu0 0.0
          %690 = vmatpush1.msra.mxu0 %v630
          %691 = vmatprep.subr.mxu0 0.0
          %692 = vmatpush2.msra.mxu0 0.0
          %693 = vmatprep.subr.mxu0 0.0
          %694 = vmatpush2.msra.mxu0 0.0
          %695 = vmatprep.subr.mxu0 0.0
          %696 = vmatpush2.msra.mxu0 0.0
          %697 = vmatprep.subr.mxu0 0.0
          %698 = vmatpush2.msra.mxu0 0.0
          %699 = vmatprep.subr.mxu0 0.0
          %700 = vmatpush2.msra.mxu0 0.0
          %701 = vmatprep.subr.mxu0 0.0
          %702 = vmatpush2.msra.mxu0 0.0
          %703 = vmatprep.subr.mxu0 0.0
          %704 = vmatpush2.msra.mxu0 0.0
          %705 = vmatprep.subr.mxu0 0.0
          %706 = vmatpush2.msra.mxu0 0.0
          %707 = vmatprep.subr.mxu0 0.0
          %708 = vmatpush2.msra.mxu0 0.0
          %709 = vmatprep.subr.mxu0 0.0
          %710 = vmatpush2.msra.mxu0 0.0
          %711 = vmatprep.subr.mxu0 0.0
          %712 = vmatpush2.msra.mxu0 0.0
          %713 = vmatprep.subr.mxu0 0.0
          %714 = vmatpush2.msra.mxu0 0.0
          %715 = vmatprep.subr.mxu0 0.0
          %716 = vmatpush2.msra.mxu0 0.0
          %717 = vmatprep.subr.mxu0 0.0
          %718 = vmatpush2.msra.mxu0 0.0
          %719 = vmatprep.subr.mxu0 0.0
          %720 = vmatpush2.msra.mxu0 0.0
          %721 = vmatprep.subr.mxu0 0.0
          %722 = vmatpush2.msra.mxu0 0.0
          %723 = vmatprep.mubr.f32.mxu0 0.0
          %724 = vmatmul.mubr.f32.gmra.mxu0 %v636
          %v725 = vpop.f32.mrf.mxu0
          %v726 = vadd.f32 0.0, %v725
          %v727 = vpop.f32.mrf.mxu0
          %728 = vmatprep.mubr.f32.mxu0 0.0
          %729 = vmatmul.mubr.f32.gmra.mxu0 %v639
          %v730 = vpop.f32.mrf.mxu0
          %v731 = vadd.f32 0.0, %v730
          %v732 = vpop.f32.mrf.mxu0
          %733 = vmatprep.mubr.f32.mxu0 0.0
          %734 = vmatmul.mubr.f32.gmra.mxu0 %v642
          %v735 = vpop.f32.mrf.mxu0
          %v736 = vadd.f32 0.0, %v735
          %v737 = vpop.f32.mrf.mxu0
          %738 = vmatprep.mubr.f32.mxu0 0.0
          %739 = vmatmul.mubr.f32.gmra.mxu0 %v645
          %v740 = vpop.f32.mrf.mxu0
          %v741 = vadd.f32 0.0, %v740
          %v742 = vpop.f32.mrf.mxu0
          %743 = vmatprep.mubr.f32.mxu0 0.0
          %744 = vmatmul.mubr.f32.gmra.mxu0 %v648
          %v745 = vpop.f32.mrf.mxu0
          %v746 = vadd.f32 0.0, %v745
          %v747 = vpop.f32.mrf.mxu0
          %748 = vmatprep.mubr.f32.mxu0 0.0
          %749 = vmatmul.mubr.f32.gmra.mxu0 %v651
          %v750 = vpop.f32.mrf.mxu0
          %v751 = vadd.f32 0.0, %v750
          %v752 = vpop.f32.mrf.mxu0
          %753 = vmatprep.mubr.f32.mxu0 0.0
          %754 = vmatmul.mubr.f32.gmra.mxu0 %v654
          %v755 = vpop.f32.mrf.mxu0
          %v756 = vadd.f32 0.0, %v755
          %v757 = vpop.f32.mrf.mxu0
          %758 = vmatprep.mubr.f32.mxu0 0.0
          %759 = vmatmul.mubr.f32.gmra.mxu0 %v657
          %v760 = vpop.f32.mrf.mxu0
          %v761 = vadd.f32 0.0, %v760
          %v762 = vpop.f32.mrf.mxu0
          %763 = vdwg.mxu0
          %v765 = vsel %vm634, %v589, 0
          %v768 = vsel %vm634, %v590, 0
          %v771 = vsel %vm634, %v591, 0
          %v774 = vsel %vm634, %v592, 0
          %v777 = vsel %vm634, %v593, 0
          %v780 = vsel %vm634, %v594, 0
          %v783 = vsel %vm634, %v595, 0
          %v786 = vsel %vm634, %v596, 0
          %788 = vmatprep.subr.mxu0 0.0
          %789 = vmatpush1.msra.mxu0 0.0
          %790 = vmatprep.subr.mxu0 0.0
          %791 = vmatpush1.msra.mxu0 0.0
          %792 = vmatprep.subr.mxu0 0.0
          %793 = vmatpush1.msra.mxu0 0.0
          %794 = vmatprep.subr.mxu0 0.0
          %795 = vmatpush1.msra.mxu0 0.0
          %796 = vmatprep.subr.mxu0 0.0
          %797 = vmatpush1.msra.mxu0 0.0
          %798 = vmatprep.subr.mxu0 0.0
          %799 = vmatpush1.msra.mxu0 0.0
          %800 = vmatprep.subr.mxu0 0.0
          %801 = vmatpush1.msra.mxu0 0.0
          %802 = vmatprep.subr.mxu0 0.0
          %803 = vmatpush1.msra.mxu0 0.0
          %804 = vmatprep.subr.mxu0 0.0
          %805 = vmatpush1.msra.mxu0 0.0
          %806 = vmatprep.subr.mxu0 0.0
          %807 = vmatpush1.msra.mxu0 0.0
          %808 = vmatprep.subr.mxu0 0.0
          %809 = vmatpush1.msra.mxu0 0.0
          %810 = vmatprep.subr.mxu0 0.0
          %811 = vmatpush1.msra.mxu0 0.0
          %812 = vmatprep.subr.mxu0 0.0
          %813 = vmatpush1.msra.mxu0 %v606
          %814 = vmatprep.subr.mxu0 0.0
          %815 = vmatpush1.msra.mxu0 %v605
          %816 = vmatprep.subr.mxu0 0.0
          %817 = vmatpush1.msra.mxu0 %v604
          %818 = vmatprep.subr.mxu0 0.0
          %819 = vmatpush1.msra.mxu0 %v603
          %820 = vmatprep.subr.mxu0 0.0
          %821 = vmatpush2.msra.mxu0 0.0
          %822 = vmatprep.subr.mxu0 0.0
          %823 = vmatpush2.msra.mxu0 0.0
          %824 = vmatprep.subr.mxu0 0.0
          %825 = vmatpush2.msra.mxu0 0.0
          %826 = vmatprep.subr.mxu0 0.0
          %827 = vmatpush2.msra.mxu0 0.0
          %828 = vmatprep.subr.mxu0 0.0
          %829 = vmatpush2.msra.mxu0 0.0
          %830 = vmatprep.subr.mxu0 0.0
          %831 = vmatpush2.msra.mxu0 0.0
          %832 = vmatprep.subr.mxu0 0.0
          %833 = vmatpush2.msra.mxu0 0.0
          %834 = vmatprep.subr.mxu0 0.0
          %835 = vmatpush2.msra.mxu0 0.0
          %836 = vmatprep.subr.mxu0 0.0
          %837 = vmatpush2.msra.mxu0 0.0
          %838 = vmatprep.subr.mxu0 0.0
          %839 = vmatpush2.msra.mxu0 0.0
          %840 = vmatprep.subr.mxu0 0.0
          %841 = vmatpush2.msra.mxu0 0.0
          %842 = vmatprep.subr.mxu0 0.0
          %843 = vmatpush2.msra.mxu0 0.0
          %844 = vmatprep.subr.mxu0 0.0
          %845 = vmatpush2.msra.mxu0 0.0
          %846 = vmatprep.subr.mxu0 0.0
          %847 = vmatpush2.msra.mxu0 0.0
          %848 = vmatprep.subr.mxu0 0.0
          %849 = vmatpush2.msra.mxu0 0.0
          %850 = vmatprep.subr.mxu0 0.0
          %851 = vmatpush2.msra.mxu0 0.0
          %852 = vmatprep.mubr.f32.mxu0 0.0
          %853 = vmatmul.mubr.f32.gmra.mxu0 %v765
          %v854 = vpop.f32.mrf.mxu0
          %v855 = vadd.f32 %v726, %v854
          %v856 = vpop.f32.mrf.mxu0
          %857 = vmatprep.mubr.f32.mxu0 0.0
          %858 = vmatmul.mubr.f32.gmra.mxu0 %v768
          %v859 = vpop.f32.mrf.mxu0
          %v860 = vadd.f32 %v731, %v859
          %v861 = vpop.f32.mrf.mxu0
          %862 = vmatprep.mubr.f32.mxu0 0.0
          %863 = vmatmul.mubr.f32.gmra.mxu0 %v771
          %v864 = vpop.f32.mrf.mxu0
          %v865 = vadd.f32 %v736, %v864
          %v866 = vpop.f32.mrf.mxu0
          %867 = vmatprep.mubr.f32.mxu0 0.0
          %868 = vmatmul.mubr.f32.gmra.mxu0 %v774
          %v869 = vpop.f32.mrf.mxu0
          %v870 = vadd.f32 %v741, %v869
          %v871 = vpop.f32.mrf.mxu0
          %872 = vmatprep.mubr.f32.mxu0 0.0
          %873 = vmatmul.mubr.f32.gmra.mxu0 %v777
          %v874 = vpop.f32.mrf.mxu0
          %v875 = vadd.f32 %v746, %v874
          %v876 = vpop.f32.mrf.mxu0
          %877 = vmatprep.mubr.f32.mxu0 0.0
          %878 = vmatmul.mubr.f32.gmra.mxu0 %v780
          %v879 = vpop.f32.mrf.mxu0
          %v880 = vadd.f32 %v751, %v879
          %v881 = vpop.f32.mrf.mxu0
          %882 = vmatprep.mubr.f32.mxu0 0.0
          %883 = vmatmul.mubr.f32.gmra.mxu0 %v783
          %v884 = vpop.f32.mrf.mxu0
          %v885 = vadd.f32 %v756, %v884
          %v886 = vpop.f32.mrf.mxu0
          %887 = vmatprep.mubr.f32.mxu0 0.0
          %888 = vmatmul.mubr.f32.gmra.mxu0 %v786
          %v889 = vpop.f32.mrf.mxu0
          %v890 = vadd.f32 %v761, %v889
          %v891 = vpop.f32.mrf.mxu0
          %892 = vdwg.mxu0
          %893 = vrot.lane.b32.xlu0 %v563, 7
          %v894 = vpop.permute.xlu0 %893
          %895 = vrot.lane.b32.xlu0 %v568, 7
          %v896 = vpop.permute.xlu0 %895
          %897 = vrot.lane.b32.xlu0 %v573, 7
          %v898 = vpop.permute.xlu0 %897
          %899 = vrot.lane.b32.xlu0 %v578, 7
          %v900 = vpop.permute.xlu0 %899
          %s901 = scalar_lea.vmem %s4, 128
          %v902 = vld [vmem:[%s901] sm:$0xff]
          %v903 = vld [vmem:[%s901 + $0x8] sm:$0xff]
          %v904 = vld [vmem:[%s901 + $0x10] sm:$0xff]
          %v905 = vld [vmem:[%s901 + $0x18] sm:$0xff]
          %v906 = vld [vmem:[%s901 + $0x20] sm:$0xff]
          %v907 = vld [vmem:[%s901 + $0x28] sm:$0xff]
          %v908 = vld [vmem:[%s901 + $0x30] sm:$0xff]
          %v909 = vld [vmem:[%s901 + $0x38] sm:$0xff]
          %v911 = vlaneseq
          %v912 = vshrl.u32 %v911, 7
          %v913 = vsub.s32 0, %v912
          %v914 = vrot.slane %v386, %v913
          %v916 = vmul.f32 %v894, %v914
          %v917 = vmul.f32 %v896, %v914
          %v918 = vmul.f32 %v898, %v914
          %v919 = vmul.f32 %v900, %v914
          %v921 = vsel %vm634, %v902, 0
          %v924 = vsel %vm634, %v903, 0
          %v927 = vsel %vm634, %v904, 0
          %v930 = vsel %vm634, %v905, 0
          %v933 = vsel %vm634, %v906, 0
          %v936 = vsel %vm634, %v907, 0
          %v939 = vsel %vm634, %v908, 0
          %v942 = vsel %vm634, %v909, 0
          %944 = vmatprep.subr.mxu0 0.0
          %945 = vmatpush1.msra.mxu0 0.0
          %946 = vmatprep.subr.mxu0 0.0
          %947 = vmatpush1.msra.mxu0 0.0
          %948 = vmatprep.subr.mxu0 0.0
          %949 = vmatpush1.msra.mxu0 0.0
          %950 = vmatprep.subr.mxu0 0.0
          %951 = vmatpush1.msra.mxu0 0.0
          %952 = vmatprep.subr.mxu0 0.0
          %953 = vmatpush1.msra.mxu0 0.0
          %954 = vmatprep.subr.mxu0 0.0
          %955 = vmatpush1.msra.mxu0 0.0
          %956 = vmatprep.subr.mxu0 0.0
          %957 = vmatpush1.msra.mxu0 0.0
          %958 = vmatprep.subr.mxu0 0.0
          %959 = vmatpush1.msra.mxu0 0.0
          %960 = vmatprep.subr.mxu0 0.0
          %961 = vmatpush1.msra.mxu0 0.0
          %962 = vmatprep.subr.mxu0 0.0
          %963 = vmatpush1.msra.mxu0 0.0
          %964 = vmatprep.subr.mxu0 0.0
          %965 = vmatpush1.msra.mxu0 0.0
          %966 = vmatprep.subr.mxu0 0.0
          %967 = vmatpush1.msra.mxu0 0.0
          %968 = vmatprep.subr.mxu0 0.0
          %969 = vmatpush1.msra.mxu0 %v919
          %970 = vmatprep.subr.mxu0 0.0
          %971 = vmatpush1.msra.mxu0 %v918
          %972 = vmatprep.subr.mxu0 0.0
          %973 = vmatpush1.msra.mxu0 %v917
          %974 = vmatprep.subr.mxu0 0.0
          %975 = vmatpush1.msra.mxu0 %v916
          %976 = vmatprep.subr.mxu0 0.0
          %977 = vmatpush2.msra.mxu0 0.0
          %978 = vmatprep.subr.mxu0 0.0
          %979 = vmatpush2.msra.mxu0 0.0
          %980 = vmatprep.subr.mxu0 0.0
          %981 = vmatpush2.msra.mxu0 0.0
          %982 = vmatprep.subr.mxu0 0.0
          %983 = vmatpush2.msra.mxu0 0.0
          %984 = vmatprep.subr.mxu0 0.0
          %985 = vmatpush2.msra.mxu0 0.0
          %986 = vmatprep.subr.mxu0 0.0
          %987 = vmatpush2.msra.mxu0 0.0
          %988 = vmatprep.subr.mxu0 0.0
          %989 = vmatpush2.msra.mxu0 0.0
          %990 = vmatprep.subr.mxu0 0.0
          %991 = vmatpush2.msra.mxu0 0.0
          %992 = vmatprep.subr.mxu0 0.0
          %993 = vmatpush2.msra.mxu0 0.0
          %994 = vmatprep.subr.mxu0 0.0
          %995 = vmatpush2.msra.mxu0 0.0
          %996 = vmatprep.subr.mxu0 0.0
          %997 = vmatpush2.msra.mxu0 0.0
          %998 = vmatprep.subr.mxu0 0.0
          %999 = vmatpush2.msra.mxu0 0.0
          %1000 = vmatprep.subr.mxu0 0.0
          %1001 = vmatpush2.msra.mxu0 0.0
          %1002 = vmatprep.subr.mxu0 0.0
          %1003 = vmatpush2.msra.mxu0 0.0
          %1004 = vmatprep.subr.mxu0 0.0
          %1005 = vmatpush2.msra.mxu0 0.0
          %1006 = vmatprep.subr.mxu0 0.0
          %1007 = vmatpush2.msra.mxu0 0.0
          %1008 = vmatprep.mubr.f32.mxu0 0.0
          %1009 = vmatmul.mubr.f32.gmra.mxu0 %v921
          %v1010 = vpop.f32.mrf.mxu0
          %v1011 = vadd.f32 0.0, %v1010
          %v1012 = vpop.f32.mrf.mxu0
          %1013 = vmatprep.mubr.f32.mxu0 0.0
          %1014 = vmatmul.mubr.f32.gmra.mxu0 %v924
          %v1015 = vpop.f32.mrf.mxu0
          %v1016 = vadd.f32 0.0, %v1015
          %v1017 = vpop.f32.mrf.mxu0
          %1018 = vmatprep.mubr.f32.mxu0 0.0
          %1019 = vmatmul.mubr.f32.gmra.mxu0 %v927
          %v1020 = vpop.f32.mrf.mxu0
          %v1021 = vadd.f32 0.0, %v1020
          %v1022 = vpop.f32.mrf.mxu0
          %1023 = vmatprep.mubr.f32.mxu0 0.0
          %1024 = vmatmul.mubr.f32.gmra.mxu0 %v930
          %v1025 = vpop.f32.mrf.mxu0
          %v1026 = vadd.f32 0.0, %v1025
          %v1027 = vpop.f32.mrf.mxu0
          %1028 = vmatprep.mubr.f32.mxu0 0.0
          %1029 = vmatmul.mubr.f32.gmra.mxu0 %v933
          %v1030 = vpop.f32.mrf.mxu0
          %v1031 = vadd.f32 0.0, %v1030
          %v1032 = vpop.f32.mrf.mxu0
          %1033 = vmatprep.mubr.f32.mxu0 0.0
          %1034 = vmatmul.mubr.f32.gmra.mxu0 %v936
          %v1035 = vpop.f32.mrf.mxu0
          %v1036 = vadd.f32 0.0, %v1035
          %v1037 = vpop.f32.mrf.mxu0
          %1038 = vmatprep.mubr.f32.mxu0 0.0
          %1039 = vmatmul.mubr.f32.gmra.mxu0 %v939
          %v1040 = vpop.f32.mrf.mxu0
          %v1041 = vadd.f32 0.0, %v1040
          %v1042 = vpop.f32.mrf.mxu0
          %1043 = vmatprep.mubr.f32.mxu0 0.0
          %1044 = vmatmul.mubr.f32.gmra.mxu0 %v942
          %v1045 = vpop.f32.mrf.mxu0
          %v1046 = vadd.f32 0.0, %v1045
          %v1047 = vpop.f32.mrf.mxu0
          %1048 = vdwg.mxu0
          %v1049 = vadd.f32 %v855, %v1011
          %v1050 = vadd.f32 %v860, %v1016
          %v1051 = vadd.f32 %v865, %v1021
          %v1052 = vadd.f32 %v870, %v1026
          %v1053 = vadd.f32 %v875, %v1031
          %v1054 = vadd.f32 %v880, %v1036
          %v1055 = vadd.f32 %v885, %v1041
          %v1056 = vadd.f32 %v890, %v1046
          %1057 = vrot.lane.b32.xlu0 %v563, 1
          %v1058 = vpop.permute.xlu0 %1057
          %1059 = vrot.lane.b32.xlu0 %v568, 1
          %v1060 = vpop.permute.xlu0 %1059
          %1061 = vrot.lane.b32.xlu0 %v573, 1
          %v1062 = vpop.permute.xlu0 %1061
          %1063 = vrot.lane.b32.xlu0 %v578, 1
          %v1064 = vpop.permute.xlu0 %1063
          %s1065 = scalar_lea.vmem %s4, 192
          %v1066 = vld [vmem:[%s1065] sm:$0xff]
          %v1067 = vld [vmem:[%s1065 + $0x8] sm:$0xff]
          %v1068 = vld [vmem:[%s1065 + $0x10] sm:$0xff]
          %v1069 = vld [vmem:[%s1065 + $0x18] sm:$0xff]
          %v1070 = vld [vmem:[%s1065 + $0x20] sm:$0xff]
          %v1071 = vld [vmem:[%s1065 + $0x28] sm:$0xff]
          %v1072 = vld [vmem:[%s1065 + $0x30] sm:$0xff]
          %v1073 = vld [vmem:[%s1065 + $0x38] sm:$0xff]
          %v1075 = vlaneseq
          %v1076 = vshrl.u32 %v1075, 7
          %v1077 = vsub.s32 0, %v1076
          %v1078 = vrot.slane %v391, %v1077
          %v1080 = vmul.f32 %v1058, %v1078
          %v1081 = vmul.f32 %v1060, %v1078
          %v1082 = vmul.f32 %v1062, %v1078
          %v1083 = vmul.f32 %v1064, %v1078
          %v1085 = vsel %vm634, %v1066, 0
          %v1088 = vsel %vm634, %v1067, 0
          %v1091 = vsel %vm634, %v1068, 0
          %v1094 = vsel %vm634, %v1069, 0
          %v1097 = vsel %vm634, %v1070, 0
          %v1100 = vsel %vm634, %v1071, 0
          %v1103 = vsel %vm634, %v1072, 0
          %v1106 = vsel %vm634, %v1073, 0
          %1108 = vmatprep.subr.mxu0 0.0
          %1109 = vmatpush1.msra.mxu0 0.0
          %1110 = vmatprep.subr.mxu0 0.0
          %1111 = vmatpush1.msra.mxu0 0.0
          %1112 = vmatprep.subr.mxu0 0.0
          %1113 = vmatpush1.msra.mxu0 0.0
          %1114 = vmatprep.subr.mxu0 0.0
          %1115 = vmatpush1.msra.mxu0 0.0
          %1116 = vmatprep.subr.mxu0 0.0
          %1117 = vmatpush1.msra.mxu0 0.0
          %1118 = vmatprep.subr.mxu0 0.0
          %1119 = vmatpush1.msra.mxu0 0.0
          %1120 = vmatprep.subr.mxu0 0.0
          %1121 = vmatpush1.msra.mxu0 0.0
          %1122 = vmatprep.subr.mxu0 0.0
          %1123 = vmatpush1.msra.mxu0 0.0
          %1124 = vmatprep.subr.mxu0 0.0
          %1125 = vmatpush1.msra.mxu0 0.0
          %1126 = vmatprep.subr.mxu0 0.0
          %1127 = vmatpush1.msra.mxu0 0.0
          %1128 = vmatprep.subr.mxu0 0.0
          %1129 = vmatpush1.msra.mxu0 0.0
          %1130 = vmatprep.subr.mxu0 0.0
          %1131 = vmatpush1.msra.mxu0 0.0
          %1132 = vmatprep.subr.mxu0 0.0
          %1133 = vmatpush1.msra.mxu0 %v1083
          %1134 = vmatprep.subr.mxu0 0.0
          %1135 = vmatpush1.msra.mxu0 %v1082
          %1136 = vmatprep.subr.mxu0 0.0
          %1137 = vmatpush1.msra.mxu0 %v1081
          %1138 = vmatprep.subr.mxu0 0.0
          %1139 = vmatpush1.msra.mxu0 %v1080
          %1140 = vmatprep.subr.mxu0 0.0
          %1141 = vmatpush2.msra.mxu0 0.0
          %1142 = vmatprep.subr.mxu0 0.0
          %1143 = vmatpush2.msra.mxu0 0.0
          %1144 = vmatprep.subr.mxu0 0.0
          %1145 = vmatpush2.msra.mxu0 0.0
          %1146 = vmatprep.subr.mxu0 0.0
          %1147 = vmatpush2.msra.mxu0 0.0
          %1148 = vmatprep.subr.mxu0 0.0
          %1149 = vmatpush2.msra.mxu0 0.0
          %1150 = vmatprep.subr.mxu0 0.0
          %1151 = vmatpush2.msra.mxu0 0.0
          %1152 = vmatprep.subr.mxu0 0.0
          %1153 = vmatpush2.msra.mxu0 0.0
          %1154 = vmatprep.subr.mxu0 0.0
          %1155 = vmatpush2.msra.mxu0 0.0
          %1156 = vmatprep.subr.mxu0 0.0
          %1157 = vmatpush2.msra.mxu0 0.0
          %1158 = vmatprep.subr.mxu0 0.0
          %1159 = vmatpush2.msra.mxu0 0.0
          %1160 = vmatprep.subr.mxu0 0.0
          %1161 = vmatpush2.msra.mxu0 0.0
          %1162 = vmatprep.subr.mxu0 0.0
          %1163 = vmatpush2.msra.mxu0 0.0
          %1164 = vmatprep.subr.mxu0 0.0
          %1165 = vmatpush2.msra.mxu0 0.0
          %1166 = vmatprep.subr.mxu0 0.0
          %1167 = vmatpush2.msra.mxu0 0.0
          %1168 = vmatprep.subr.mxu0 0.0
          %1169 = vmatpush2.msra.mxu0 0.0
          %1170 = vmatprep.subr.mxu0 0.0
          %1171 = vmatpush2.msra.mxu0 0.0
          %1172 = vmatprep.mubr.f32.mxu0 0.0
          %1173 = vmatmul.mubr.f32.gmra.mxu0 %v1085
          %v1174 = vpop.f32.mrf.mxu0
          %v1175 = vadd.f32 0.0, %v1174
          %v1176 = vpop.f32.mrf.mxu0
          %1177 = vmatprep.mubr.f32.mxu0 0.0
          %1178 = vmatmul.mubr.f32.gmra.mxu0 %v1088
          %v1179 = vpop.f32.mrf.mxu0
          %v1180 = vadd.f32 0.0, %v1179
          %v1181 = vpop.f32.mrf.mxu0
          %1182 = vmatprep.mubr.f32.mxu0 0.0
          %1183 = vmatmul.mubr.f32.gmra.mxu0 %v1091
          %v1184 = vpop.f32.mrf.mxu0
          %v1185 = vadd.f32 0.0, %v1184
          %v1186 = vpop.f32.mrf.mxu0
          %1187 = vmatprep.mubr.f32.mxu0 0.0
          %1188 = vmatmul.mubr.f32.gmra.mxu0 %v1094
          %v1189 = vpop.f32.mrf.mxu0
          %v1190 = vadd.f32 0.0, %v1189
          %v1191 = vpop.f32.mrf.mxu0
          %1192 = vmatprep.mubr.f32.mxu0 0.0
          %1193 = vmatmul.mubr.f32.gmra.mxu0 %v1097
          %v1194 = vpop.f32.mrf.mxu0
          %v1195 = vadd.f32 0.0, %v1194
          %v1196 = vpop.f32.mrf.mxu0
          %1197 = vmatprep.mubr.f32.mxu0 0.0
          %1198 = vmatmul.mubr.f32.gmra.mxu0 %v1100
          %v1199 = vpop.f32.mrf.mxu0
          %v1200 = vadd.f32 0.0, %v1199
          %v1201 = vpop.f32.mrf.mxu0
          %1202 = vmatprep.mubr.f32.mxu0 0.0
          %1203 = vmatmul.mubr.f32.gmra.mxu0 %v1103
          %v1204 = vpop.f32.mrf.mxu0
          %v1205 = vadd.f32 0.0, %v1204
          %v1206 = vpop.f32.mrf.mxu0
          %1207 = vmatprep.mubr.f32.mxu0 0.0
          %1208 = vmatmul.mubr.f32.gmra.mxu0 %v1106
          %v1209 = vpop.f32.mrf.mxu0
          %v1210 = vadd.f32 0.0, %v1209
          %v1211 = vpop.f32.mrf.mxu0
          %1212 = vdwg.mxu0
          %v1213 = vadd.f32 %v1049, %v1175
          %v1214 = vadd.f32 %v1050, %v1180
          %v1215 = vadd.f32 %v1051, %v1185
          %v1216 = vadd.f32 %v1052, %v1190
          %v1217 = vadd.f32 %v1053, %v1195
          %v1218 = vadd.f32 %v1054, %v1200
          %v1219 = vadd.f32 %v1055, %v1205
          %v1220 = vadd.f32 %v1056, %v1210
          %s1221 = scalar_lea.vmem %s4, 256
          %v1222 = vld [vmem:[%s1221] sm:$0xff]
          %v1223 = vld [vmem:[%s1221 + $0x8] sm:$0xff]
          %v1224 = vld [vmem:[%s1221 + $0x10] sm:$0xff]
          %v1225 = vld [vmem:[%s1221 + $0x18] sm:$0xff]
          %v1226 = vld [vmem:[%s1221 + $0x20] sm:$0xff]
          %v1227 = vld [vmem:[%s1221 + $0x28] sm:$0xff]
          %v1228 = vld [vmem:[%s1221 + $0x30] sm:$0xff]
          %v1229 = vld [vmem:[%s1221 + $0x38] sm:$0xff]
          %v1231 = vlaneseq
          %v1232 = vshrl.u32 %v1231, 7
          %v1233 = vsub.s32 0, %v1232
          %v1234 = vrot.slane %v394, %v1233
          %v1236 = vmul.f32 %v563, %v1234
          %v1237 = vmul.f32 %v568, %v1234
          %v1238 = vmul.f32 %v573, %v1234
          %v1239 = vmul.f32 %v578, %v1234
          %v1241 = vsel %vm634, %v1222, 0
          %v1244 = vsel %vm634, %v1223, 0
          %v1247 = vsel %vm634, %v1224, 0
          %v1250 = vsel %vm634, %v1225, 0
          %v1253 = vsel %vm634, %v1226, 0
          %v1256 = vsel %vm634, %v1227, 0
          %v1259 = vsel %vm634, %v1228, 0
          %v1262 = vsel %vm634, %v1229, 0
          %1264 = vmatprep.subr.mxu0 0.0
          %1265 = vmatpush1.msra.mxu0 0.0
          %1266 = vmatprep.subr.mxu0 0.0
          %1267 = vmatpush1.msra.mxu0 0.0
          %1268 = vmatprep.subr.mxu0 0.0
          %1269 = vmatpush1.msra.mxu0 0.0
          %1270 = vmatprep.subr.mxu0 0.0
          %1271 = vmatpush1.msra.mxu0 0.0
          %1272 = vmatprep.subr.mxu0 0.0
          %1273 = vmatpush1.msra.mxu0 0.0
          %1274 = vmatprep.subr.mxu0 0.0
          %1275 = vmatpush1.msra.mxu0 0.0
          %1276 = vmatprep.subr.mxu0 0.0
          %1277 = vmatpush1.msra.mxu0 0.0
          %1278 = vmatprep.subr.mxu0 0.0
          %1279 = vmatpush1.msra.mxu0 0.0
          %1280 = vmatprep.subr.mxu0 0.0
          %1281 = vmatpush1.msra.mxu0 0.0
          %1282 = vmatprep.subr.mxu0 0.0
          %1283 = vmatpush1.msra.mxu0 0.0
          %1284 = vmatprep.subr.mxu0 0.0
          %1285 = vmatpush1.msra.mxu0 0.0
          %1286 = vmatprep.subr.mxu0 0.0
          %1287 = vmatpush1.msra.mxu0 0.0
          %1288 = vmatprep.subr.mxu0 0.0
          %1289 = vmatpush1.msra.mxu0 %v1239
          %1290 = vmatprep.subr.mxu0 0.0
          %1291 = vmatpush1.msra.mxu0 %v1238
          %1292 = vmatprep.subr.mxu0 0.0
          %1293 = vmatpush1.msra.mxu0 %v1237
          %1294 = vmatprep.subr.mxu0 0.0
          %1295 = vmatpush1.msra.mxu0 %v1236
          %1296 = vmatprep.subr.mxu0 0.0
          %1297 = vmatpush2.msra.mxu0 0.0
          %1298 = vmatprep.subr.mxu0 0.0
          %1299 = vmatpush2.msra.mxu0 0.0
          %1300 = vmatprep.subr.mxu0 0.0
          %1301 = vmatpush2.msra.mxu0 0.0
          %1302 = vmatprep.subr.mxu0 0.0
          %1303 = vmatpush2.msra.mxu0 0.0
          %1304 = vmatprep.subr.mxu0 0.0
          %1305 = vmatpush2.msra.mxu0 0.0
          %1306 = vmatprep.subr.mxu0 0.0
          %1307 = vmatpush2.msra.mxu0 0.0
          %1308 = vmatprep.subr.mxu0 0.0
          %1309 = vmatpush2.msra.mxu0 0.0
          %1310 = vmatprep.subr.mxu0 0.0
          %1311 = vmatpush2.msra.mxu0 0.0
          %1312 = vmatprep.subr.mxu0 0.0
          %1313 = vmatpush2.msra.mxu0 0.0
          %1314 = vmatprep.subr.mxu0 0.0
          %1315 = vmatpush2.msra.mxu0 0.0
          %1316 = vmatprep.subr.mxu0 0.0
          %1317 = vmatpush2.msra.mxu0 0.0
          %1318 = vmatprep.subr.mxu0 0.0
          %1319 = vmatpush2.msra.mxu0 0.0
          %1320 = vmatprep.subr.mxu0 0.0
          %1321 = vmatpush2.msra.mxu0 0.0
          %1322 = vmatprep.subr.mxu0 0.0
          %1323 = vmatpush2.msra.mxu0 0.0
          %1324 = vmatprep.subr.mxu0 0.0
          %1325 = vmatpush2.msra.mxu0 0.0
          %1326 = vmatprep.subr.mxu0 0.0
          %1327 = vmatpush2.msra.mxu0 0.0
          %1328 = vmatprep.mubr.f32.mxu0 0.0
          %1329 = vmatmul.mubr.f32.gmra.mxu0 %v1241
          %v1330 = vpop.f32.mrf.mxu0
          %v1331 = vadd.f32 0.0, %v1330
          %v1332 = vpop.f32.mrf.mxu0
          %1333 = vmatprep.mubr.f32.mxu0 0.0
          %1334 = vmatmul.mubr.f32.gmra.mxu0 %v1244
          %v1335 = vpop.f32.mrf.mxu0
          %v1336 = vadd.f32 0.0, %v1335
          %v1337 = vpop.f32.mrf.mxu0
          %1338 = vmatprep.mubr.f32.mxu0 0.0
          %1339 = vmatmul.mubr.f32.gmra.mxu0 %v1247
          %v1340 = vpop.f32.mrf.mxu0
          %v1341 = vadd.f32 0.0, %v1340
          %v1342 = vpop.f32.mrf.mxu0
          %1343 = vmatprep.mubr.f32.mxu0 0.0
          %1344 = vmatmul.mubr.f32.gmra.mxu0 %v1250
          %v1345 = vpop.f32.mrf.mxu0
          %v1346 = vadd.f32 0.0, %v1345
          %v1347 = vpop.f32.mrf.mxu0
          %1348 = vmatprep.mubr.f32.mxu0 0.0
          %1349 = vmatmul.mubr.f32.gmra.mxu0 %v1253
          %v1350 = vpop.f32.mrf.mxu0
          %v1351 = vadd.f32 0.0, %v1350
          %v1352 = vpop.f32.mrf.mxu0
          %1353 = vmatprep.mubr.f32.mxu0 0.0
          %1354 = vmatmul.mubr.f32.gmra.mxu0 %v1256
          %v1355 = vpop.f32.mrf.mxu0
          %v1356 = vadd.f32 0.0, %v1355
          %v1357 = vpop.f32.mrf.mxu0
          %1358 = vmatprep.mubr.f32.mxu0 0.0
          %1359 = vmatmul.mubr.f32.gmra.mxu0 %v1259
          %v1360 = vpop.f32.mrf.mxu0
          %v1361 = vadd.f32 0.0, %v1360
          %v1362 = vpop.f32.mrf.mxu0
          %1363 = vmatprep.mubr.f32.mxu0 0.0
          %1364 = vmatmul.mubr.f32.gmra.mxu0 %v1262
          %v1365 = vpop.f32.mrf.mxu0
          %v1366 = vadd.f32 0.0, %v1365
          %v1367 = vpop.f32.mrf.mxu0
          %1368 = vdwg.mxu0
          %v1369 = vadd.f32 %v1213, %v1331
          %v1370 = vadd.f32 %v1214, %v1336
          %v1371 = vadd.f32 %v1215, %v1341
          %v1372 = vadd.f32 %v1216, %v1346
          %v1373 = vadd.f32 %v1217, %v1351
          %v1374 = vadd.f32 %v1218, %v1356
          %v1375 = vadd.f32 %v1219, %v1361
          %v1376 = vadd.f32 %v1220, %v1366
          %1377 = vrot.lane.b32.xlu0 %v563, 127
          %v1378 = vpop.permute.xlu0 %1377
          %1379 = vrot.lane.b32.xlu0 %v568, 127
          %v1380 = vpop.permute.xlu0 %1379
          %1381 = vrot.lane.b32.xlu0 %v573, 127
          %v1382 = vpop.permute.xlu0 %1381
          %1383 = vrot.lane.b32.xlu0 %v578, 127
          %v1384 = vpop.permute.xlu0 %1383
          %s1385 = scalar_lea.vmem %s4, 320
          %v1386 = vld [vmem:[%s1385] sm:$0xff]
          %v1387 = vld [vmem:[%s1385 + $0x8] sm:$0xff]
          %v1388 = vld [vmem:[%s1385 + $0x10] sm:$0xff]
          %v1389 = vld [vmem:[%s1385 + $0x18] sm:$0xff]
          %v1390 = vld [vmem:[%s1385 + $0x20] sm:$0xff]
          %v1391 = vld [vmem:[%s1385 + $0x28] sm:$0xff]
          %v1392 = vld [vmem:[%s1385 + $0x30] sm:$0xff]
          %v1393 = vld [vmem:[%s1385 + $0x38] sm:$0xff]
          %v1395 = vlaneseq
          %v1396 = vshrl.u32 %v1395, 7
          %v1397 = vsub.s32 0, %v1396
          %v1398 = vrot.slane %v399, %v1397
          %v1400 = vmul.f32 %v1378, %v1398
          %v1401 = vmul.f32 %v1380, %v1398
          %v1402 = vmul.f32 %v1382, %v1398
          %v1403 = vmul.f32 %v1384, %v1398
          %v1405 = vsel %vm634, %v1386, 0
          %v1408 = vsel %vm634, %v1387, 0
          %v1411 = vsel %vm634, %v1388, 0
          %v1414 = vsel %vm634, %v1389, 0
          %v1417 = vsel %vm634, %v1390, 0
          %v1420 = vsel %vm634, %v1391, 0
          %v1423 = vsel %vm634, %v1392, 0
          %v1426 = vsel %vm634, %v1393, 0
          %1428 = vmatprep.subr.mxu0 0.0
          %1429 = vmatpush1.msra.mxu0 0.0
          %1430 = vmatprep.subr.mxu0 0.0
          %1431 = vmatpush1.msra.mxu0 0.0
          %1432 = vmatprep.subr.mxu0 0.0
          %1433 = vmatpush1.msra.mxu0 0.0
          %1434 = vmatprep.subr.mxu0 0.0
          %1435 = vmatpush1.msra.mxu0 0.0
          %1436 = vmatprep.subr.mxu0 0.0
          %1437 = vmatpush1.msra.mxu0 0.0
          %1438 = vmatprep.subr.mxu0 0.0
          %1439 = vmatpush1.msra.mxu0 0.0
          %1440 = vmatprep.subr.mxu0 0.0
          %1441 = vmatpush1.msra.mxu0 0.0
          %1442 = vmatprep.subr.mxu0 0.0
          %1443 = vmatpush1.msra.mxu0 0.0
          %1444 = vmatprep.subr.mxu0 0.0
          %1445 = vmatpush1.msra.mxu0 0.0
          %1446 = vmatprep.subr.mxu0 0.0
          %1447 = vmatpush1.msra.mxu0 0.0
          %1448 = vmatprep.subr.mxu0 0.0
          %1449 = vmatpush1.msra.mxu0 0.0
          %1450 = vmatprep.subr.mxu0 0.0
          %1451 = vmatpush1.msra.mxu0 0.0
          %1452 = vmatprep.subr.mxu0 0.0
          %1453 = vmatpush1.msra.mxu0 %v1403
          %1454 = vmatprep.subr.mxu0 0.0
          %1455 = vmatpush1.msra.mxu0 %v1402
          %1456 = vmatprep.subr.mxu0 0.0
          %1457 = vmatpush1.msra.mxu0 %v1401
          %1458 = vmatprep.subr.mxu0 0.0
          %1459 = vmatpush1.msra.mxu0 %v1400
          %1460 = vmatprep.subr.mxu0 0.0
          %1461 = vmatpush2.msra.mxu0 0.0
          %1462 = vmatprep.subr.mxu0 0.0
          %1463 = vmatpush2.msra.mxu0 0.0
          %1464 = vmatprep.subr.mxu0 0.0
          %1465 = vmatpush2.msra.mxu0 0.0
          %1466 = vmatprep.subr.mxu0 0.0
          %1467 = vmatpush2.msra.mxu0 0.0
          %1468 = vmatprep.subr.mxu0 0.0
          %1469 = vmatpush2.msra.mxu0 0.0
          %1470 = vmatprep.subr.mxu0 0.0
          %1471 = vmatpush2.msra.mxu0 0.0
          %1472 = vmatprep.subr.mxu0 0.0
          %1473 = vmatpush2.msra.mxu0 0.0
          %1474 = vmatprep.subr.mxu0 0.0
          %1475 = vmatpush2.msra.mxu0 0.0
          %1476 = vmatprep.subr.mxu0 0.0
          %1477 = vmatpush2.msra.mxu0 0.0
          %1478 = vmatprep.subr.mxu0 0.0
          %1479 = vmatpush2.msra.mxu0 0.0
          %1480 = vmatprep.subr.mxu0 0.0
          %1481 = vmatpush2.msra.mxu0 0.0
          %1482 = vmatprep.subr.mxu0 0.0
          %1483 = vmatpush2.msra.mxu0 0.0
          %1484 = vmatprep.subr.mxu0 0.0
          %1485 = vmatpush2.msra.mxu0 0.0
          %1486 = vmatprep.subr.mxu0 0.0
          %1487 = vmatpush2.msra.mxu0 0.0
          %1488 = vmatprep.subr.mxu0 0.0
          %1489 = vmatpush2.msra.mxu0 0.0
          %1490 = vmatprep.subr.mxu0 0.0
          %1491 = vmatpush2.msra.mxu0 0.0
          %1492 = vmatprep.mubr.f32.mxu0 0.0
          %1493 = vmatmul.mubr.f32.gmra.mxu0 %v1405
          %v1494 = vpop.f32.mrf.mxu0
          %v1495 = vadd.f32 0.0, %v1494
          %v1496 = vpop.f32.mrf.mxu0
          %1497 = vmatprep.mubr.f32.mxu0 0.0
          %1498 = vmatmul.mubr.f32.gmra.mxu0 %v1408
          %v1499 = vpop.f32.mrf.mxu0
          %v1500 = vadd.f32 0.0, %v1499
          %v1501 = vpop.f32.mrf.mxu0
          %1502 = vmatprep.mubr.f32.mxu0 0.0
          %1503 = vmatmul.mubr.f32.gmra.mxu0 %v1411
          %v1504 = vpop.f32.mrf.mxu0
          %v1505 = vadd.f32 0.0, %v1504
          %v1506 = vpop.f32.mrf.mxu0
          %1507 = vmatprep.mubr.f32.mxu0 0.0
          %1508 = vmatmul.mubr.f32.gmra.mxu0 %v1414
          %v1509 = vpop.f32.mrf.mxu0
          %v1510 = vadd.f32 0.0, %v1509
          %v1511 = vpop.f32.mrf.mxu0
          %1512 = vmatprep.mubr.f32.mxu0 0.0
          %1513 = vmatmul.mubr.f32.gmra.mxu0 %v1417
          %v1514 = vpop.f32.mrf.mxu0
          %v1515 = vadd.f32 0.0, %v1514
          %v1516 = vpop.f32.mrf.mxu0
          %1517 = vmatprep.mubr.f32.mxu0 0.0
          %1518 = vmatmul.mubr.f32.gmra.mxu0 %v1420
          %v1519 = vpop.f32.mrf.mxu0
          %v1520 = vadd.f32 0.0, %v1519
          %v1521 = vpop.f32.mrf.mxu0
          %1522 = vmatprep.mubr.f32.mxu0 0.0
          %1523 = vmatmul.mubr.f32.gmra.mxu0 %v1423
          %v1524 = vpop.f32.mrf.mxu0
          %v1525 = vadd.f32 0.0, %v1524
          %v1526 = vpop.f32.mrf.mxu0
          %1527 = vmatprep.mubr.f32.mxu0 0.0
          %1528 = vmatmul.mubr.f32.gmra.mxu0 %v1426
          %v1529 = vpop.f32.mrf.mxu0
          %v1530 = vadd.f32 0.0, %v1529
          %v1531 = vpop.f32.mrf.mxu0
          %1532 = vdwg.mxu0
          %v1533 = vadd.f32 %v1369, %v1495
          %v1534 = vadd.f32 %v1370, %v1500
          %v1535 = vadd.f32 %v1371, %v1505
          %v1536 = vadd.f32 %v1372, %v1510
          %v1537 = vadd.f32 %v1373, %v1515
          %v1538 = vadd.f32 %v1374, %v1520
          %v1539 = vadd.f32 %v1375, %v1525
          %v1540 = vadd.f32 %v1376, %v1530
          %1541 = vrot.lane.b32.xlu0 %v563, 121
          %v1542 = vpop.permute.xlu0 %1541
          %1543 = vrot.lane.b32.xlu0 %v568, 121
          %v1544 = vpop.permute.xlu0 %1543
          %1545 = vrot.lane.b32.xlu0 %v573, 121
          %v1546 = vpop.permute.xlu0 %1545
          %1547 = vrot.lane.b32.xlu0 %v578, 121
          %v1548 = vpop.permute.xlu0 %1547
          %s1549 = scalar_lea.vmem %s4, 384
          %v1550 = vld [vmem:[%s1549] sm:$0xff]
          %v1551 = vld [vmem:[%s1549 + $0x8] sm:$0xff]
          %v1552 = vld [vmem:[%s1549 + $0x10] sm:$0xff]
          %v1553 = vld [vmem:[%s1549 + $0x18] sm:$0xff]
          %v1554 = vld [vmem:[%s1549 + $0x20] sm:$0xff]
          %v1555 = vld [vmem:[%s1549 + $0x28] sm:$0xff]
          %v1556 = vld [vmem:[%s1549 + $0x30] sm:$0xff]
          %v1557 = vld [vmem:[%s1549 + $0x38] sm:$0xff]
          %v1559 = vlaneseq
          %v1560 = vshrl.u32 %v1559, 7
          %v1561 = vsub.s32 0, %v1560
          %v1562 = vrot.slane %v404, %v1561
          %v1564 = vmul.f32 %v1542, %v1562
          %v1565 = vmul.f32 %v1544, %v1562
          %v1566 = vmul.f32 %v1546, %v1562
          %v1567 = vmul.f32 %v1548, %v1562
          %v1569 = vsel %vm634, %v1550, 0
          %v1572 = vsel %vm634, %v1551, 0
          %v1575 = vsel %vm634, %v1552, 0
          %v1578 = vsel %vm634, %v1553, 0
          %v1581 = vsel %vm634, %v1554, 0
          %v1584 = vsel %vm634, %v1555, 0
          %v1587 = vsel %vm634, %v1556, 0
          %v1590 = vsel %vm634, %v1557, 0
          %1592 = vmatprep.subr.mxu0 0.0
          %1593 = vmatpush1.msra.mxu0 0.0
          %1594 = vmatprep.subr.mxu0 0.0
          %1595 = vmatpush1.msra.mxu0 0.0
          %1596 = vmatprep.subr.mxu0 0.0
          %1597 = vmatpush1.msra.mxu0 0.0
          %1598 = vmatprep.subr.mxu0 0.0
          %1599 = vmatpush1.msra.mxu0 0.0
          %1600 = vmatprep.subr.mxu0 0.0
          %1601 = vmatpush1.msra.mxu0 0.0
          %1602 = vmatprep.subr.mxu0 0.0
          %1603 = vmatpush1.msra.mxu0 0.0
          %1604 = vmatprep.subr.mxu0 0.0
          %1605 = vmatpush1.msra.mxu0 0.0
          %1606 = vmatprep.subr.mxu0 0.0
          %1607 = vmatpush1.msra.mxu0 0.0
          %1608 = vmatprep.subr.mxu0 0.0
          %1609 = vmatpush1.msra.mxu0 0.0
          %1610 = vmatprep.subr.mxu0 0.0
          %1611 = vmatpush1.msra.mxu0 0.0
          %1612 = vmatprep.subr.mxu0 0.0
          %1613 = vmatpush1.msra.mxu0 0.0
          %1614 = vmatprep.subr.mxu0 0.0
          %1615 = vmatpush1.msra.mxu0 0.0
          %1616 = vmatprep.subr.mxu0 0.0
          %1617 = vmatpush1.msra.mxu0 %v1567
          %1618 = vmatprep.subr.mxu0 0.0
          %1619 = vmatpush1.msra.mxu0 %v1566
          %1620 = vmatprep.subr.mxu0 0.0
          %1621 = vmatpush1.msra.mxu0 %v1565
          %1622 = vmatprep.subr.mxu0 0.0
          %1623 = vmatpush1.msra.mxu0 %v1564
          %1624 = vmatprep.subr.mxu0 0.0
          %1625 = vmatpush2.msra.mxu0 0.0
          %1626 = vmatprep.subr.mxu0 0.0
          %1627 = vmatpush2.msra.mxu0 0.0
          %1628 = vmatprep.subr.mxu0 0.0
          %1629 = vmatpush2.msra.mxu0 0.0
          %1630 = vmatprep.subr.mxu0 0.0
          %1631 = vmatpush2.msra.mxu0 0.0
          %1632 = vmatprep.subr.mxu0 0.0
          %1633 = vmatpush2.msra.mxu0 0.0
          %1634 = vmatprep.subr.mxu0 0.0
          %1635 = vmatpush2.msra.mxu0 0.0
          %1636 = vmatprep.subr.mxu0 0.0
          %1637 = vmatpush2.msra.mxu0 0.0
          %1638 = vmatprep.subr.mxu0 0.0
          %1639 = vmatpush2.msra.mxu0 0.0
          %1640 = vmatprep.subr.mxu0 0.0
          %1641 = vmatpush2.msra.mxu0 0.0
          %1642 = vmatprep.subr.mxu0 0.0
          %1643 = vmatpush2.msra.mxu0 0.0
          %1644 = vmatprep.subr.mxu0 0.0
          %1645 = vmatpush2.msra.mxu0 0.0
          %1646 = vmatprep.subr.mxu0 0.0
          %1647 = vmatpush2.msra.mxu0 0.0
          %1648 = vmatprep.subr.mxu0 0.0
          %1649 = vmatpush2.msra.mxu0 0.0
          %1650 = vmatprep.subr.mxu0 0.0
          %1651 = vmatpush2.msra.mxu0 0.0
          %1652 = vmatprep.subr.mxu0 0.0
          %1653 = vmatpush2.msra.mxu0 0.0
          %1654 = vmatprep.subr.mxu0 0.0
          %1655 = vmatpush2.msra.mxu0 0.0
          %1656 = vmatprep.mubr.f32.mxu0 0.0
          %1657 = vmatmul.mubr.f32.gmra.mxu0 %v1569
          %v1658 = vpop.f32.mrf.mxu0
          %v1659 = vadd.f32 0.0, %v1658
          %v1660 = vpop.f32.mrf.mxu0
          %1661 = vmatprep.mubr.f32.mxu0 0.0
          %1662 = vmatmul.mubr.f32.gmra.mxu0 %v1572
          %v1663 = vpop.f32.mrf.mxu0
          %v1664 = vadd.f32 0.0, %v1663
          %v1665 = vpop.f32.mrf.mxu0
          %1666 = vmatprep.mubr.f32.mxu0 0.0
          %1667 = vmatmul.mubr.f32.gmra.mxu0 %v1575
          %v1668 = vpop.f32.mrf.mxu0
          %v1669 = vadd.f32 0.0, %v1668
          %v1670 = vpop.f32.mrf.mxu0
          %1671 = vmatprep.mubr.f32.mxu0 0.0
          %1672 = vmatmul.mubr.f32.gmra.mxu0 %v1578
          %v1673 = vpop.f32.mrf.mxu0
          %v1674 = vadd.f32 0.0, %v1673
          %v1675 = vpop.f32.mrf.mxu0
          %1676 = vmatprep.mubr.f32.mxu0 0.0
          %1677 = vmatmul.mubr.f32.gmra.mxu0 %v1581
          %v1678 = vpop.f32.mrf.mxu0
          %v1679 = vadd.f32 0.0, %v1678
          %v1680 = vpop.f32.mrf.mxu0
          %1681 = vmatprep.mubr.f32.mxu0 0.0
          %1682 = vmatmul.mubr.f32.gmra.mxu0 %v1584
          %v1683 = vpop.f32.mrf.mxu0
          %v1684 = vadd.f32 0.0, %v1683
          %v1685 = vpop.f32.mrf.mxu0
          %1686 = vmatprep.mubr.f32.mxu0 0.0
          %1687 = vmatmul.mubr.f32.gmra.mxu0 %v1587
          %v1688 = vpop.f32.mrf.mxu0
          %v1689 = vadd.f32 0.0, %v1688
          %v1690 = vpop.f32.mrf.mxu0
          %1691 = vmatprep.mubr.f32.mxu0 0.0
          %1692 = vmatmul.mubr.f32.gmra.mxu0 %v1590
          %v1693 = vpop.f32.mrf.mxu0
          %v1694 = vadd.f32 0.0, %v1693
          %v1695 = vpop.f32.mrf.mxu0
          %1696 = vdwg.mxu0
          %v1697 = vadd.f32 %v1533, %v1659
          %v1698 = vadd.f32 %v1534, %v1664
          %v1699 = vadd.f32 %v1535, %v1669
          %v1700 = vadd.f32 %v1536, %v1674
          %v1701 = vadd.f32 %v1537, %v1679
          %v1702 = vadd.f32 %v1538, %v1684
          %v1703 = vadd.f32 %v1539, %v1689
          %v1704 = vadd.f32 %v1540, %v1694
          %1705 = vrot.lane.b32.xlu0 %v563, 120
          %v1706 = vpop.permute.xlu0 %1705
          %1707 = vrot.lane.b32.xlu0 %v568, 120
          %v1708 = vpop.permute.xlu0 %1707
          %1709 = vrot.lane.b32.xlu0 %v573, 120
          %v1710 = vpop.permute.xlu0 %1709
          %1711 = vrot.lane.b32.xlu0 %v578, 120
          %v1712 = vpop.permute.xlu0 %1711
          %s1713 = scalar_lea.vmem %s4, 448
          %v1714 = vld [vmem:[%s1713] sm:$0xff]
          %v1715 = vld [vmem:[%s1713 + $0x8] sm:$0xff]
          %v1716 = vld [vmem:[%s1713 + $0x10] sm:$0xff]
          %v1717 = vld [vmem:[%s1713 + $0x18] sm:$0xff]
          %v1718 = vld [vmem:[%s1713 + $0x20] sm:$0xff]
          %v1719 = vld [vmem:[%s1713 + $0x28] sm:$0xff]
          %v1720 = vld [vmem:[%s1713 + $0x30] sm:$0xff]
          %v1721 = vld [vmem:[%s1713 + $0x38] sm:$0xff]
          %v1723 = vlaneseq
          %v1724 = vshrl.u32 %v1723, 7
          %v1725 = vsub.s32 0, %v1724
          %v1726 = vrot.slane %v409, %v1725
          %v1728 = vmul.f32 %v1706, %v1726
          %v1729 = vmul.f32 %v1708, %v1726
          %v1730 = vmul.f32 %v1710, %v1726
          %v1731 = vmul.f32 %v1712, %v1726
          %v1733 = vsel %vm634, %v1714, 0
          %v1736 = vsel %vm634, %v1715, 0
          %v1739 = vsel %vm634, %v1716, 0
          %v1742 = vsel %vm634, %v1717, 0
          %v1745 = vsel %vm634, %v1718, 0
          %v1748 = vsel %vm634, %v1719, 0
          %v1751 = vsel %vm634, %v1720, 0
          %v1754 = vsel %vm634, %v1721, 0
          %1756 = vmatprep.subr.mxu0 0.0
          %1757 = vmatpush1.msra.mxu0 0.0
          %1758 = vmatprep.subr.mxu0 0.0
          %1759 = vmatpush1.msra.mxu0 0.0
          %1760 = vmatprep.subr.mxu0 0.0
          %1761 = vmatpush1.msra.mxu0 0.0
          %1762 = vmatprep.subr.mxu0 0.0
          %1763 = vmatpush1.msra.mxu0 0.0
          %1764 = vmatprep.subr.mxu0 0.0
          %1765 = vmatpush1.msra.mxu0 0.0
          %1766 = vmatprep.subr.mxu0 0.0
          %1767 = vmatpush1.msra.mxu0 0.0
          %1768 = vmatprep.subr.mxu0 0.0
          %1769 = vmatpush1.msra.mxu0 0.0
          %1770 = vmatprep.subr.mxu0 0.0
          %1771 = vmatpush1.msra.mxu0 0.0
          %1772 = vmatprep.subr.mxu0 0.0
          %1773 = vmatpush1.msra.mxu0 0.0
          %1774 = vmatprep.subr.mxu0 0.0
          %1775 = vmatpush1.msra.mxu0 0.0
          %1776 = vmatprep.subr.mxu0 0.0
          %1777 = vmatpush1.msra.mxu0 0.0
          %1778 = vmatprep.subr.mxu0 0.0
          %1779 = vmatpush1.msra.mxu0 0.0
          %1780 = vmatprep.subr.mxu0 0.0
          %1781 = vmatpush1.msra.mxu0 %v1731
          %1782 = vmatprep.subr.mxu0 0.0
          %1783 = vmatpush1.msra.mxu0 %v1730
          %1784 = vmatprep.subr.mxu0 0.0
          %1785 = vmatpush1.msra.mxu0 %v1729
          %1786 = vmatprep.subr.mxu0 0.0
          %1787 = vmatpush1.msra.mxu0 %v1728
          %1788 = vmatprep.subr.mxu0 0.0
          %1789 = vmatpush2.msra.mxu0 0.0
          %1790 = vmatprep.subr.mxu0 0.0
          %1791 = vmatpush2.msra.mxu0 0.0
          %1792 = vmatprep.subr.mxu0 0.0
          %1793 = vmatpush2.msra.mxu0 0.0
          %1794 = vmatprep.subr.mxu0 0.0
          %1795 = vmatpush2.msra.mxu0 0.0
          %1796 = vmatprep.subr.mxu0 0.0
          %1797 = vmatpush2.msra.mxu0 0.0
          %1798 = vmatprep.subr.mxu0 0.0
          %1799 = vmatpush2.msra.mxu0 0.0
          %1800 = vmatprep.subr.mxu0 0.0
          %1801 = vmatpush2.msra.mxu0 0.0
          %1802 = vmatprep.subr.mxu0 0.0
          %1803 = vmatpush2.msra.mxu0 0.0
          %1804 = vmatprep.subr.mxu0 0.0
          %1805 = vmatpush2.msra.mxu0 0.0
          %1806 = vmatprep.subr.mxu0 0.0
          %1807 = vmatpush2.msra.mxu0 0.0
          %1808 = vmatprep.subr.mxu0 0.0
          %1809 = vmatpush2.msra.mxu0 0.0
          %1810 = vmatprep.subr.mxu0 0.0
          %1811 = vmatpush2.msra.mxu0 0.0
          %1812 = vmatprep.subr.mxu0 0.0
          %1813 = vmatpush2.msra.mxu0 0.0
          %1814 = vmatprep.subr.mxu0 0.0
          %1815 = vmatpush2.msra.mxu0 0.0
          %1816 = vmatprep.subr.mxu0 0.0
          %1817 = vmatpush2.msra.mxu0 0.0
          %1818 = vmatprep.subr.mxu0 0.0
          %1819 = vmatpush2.msra.mxu0 0.0
          %1820 = vmatprep.mubr.f32.mxu0 0.0
          %1821 = vmatmul.mubr.f32.gmra.mxu0 %v1733
          %v1822 = vpop.f32.mrf.mxu0
          %v1823 = vadd.f32 0.0, %v1822
          %v1824 = vpop.f32.mrf.mxu0
          %1825 = vmatprep.mubr.f32.mxu0 0.0
          %1826 = vmatmul.mubr.f32.gmra.mxu0 %v1736
          %v1827 = vpop.f32.mrf.mxu0
          %v1828 = vadd.f32 0.0, %v1827
          %v1829 = vpop.f32.mrf.mxu0
          %1830 = vmatprep.mubr.f32.mxu0 0.0
          %1831 = vmatmul.mubr.f32.gmra.mxu0 %v1739
          %v1832 = vpop.f32.mrf.mxu0
          %v1833 = vadd.f32 0.0, %v1832
          %v1834 = vpop.f32.mrf.mxu0
          %1835 = vmatprep.mubr.f32.mxu0 0.0
          %1836 = vmatmul.mubr.f32.gmra.mxu0 %v1742
          %v1837 = vpop.f32.mrf.mxu0
          %v1838 = vadd.f32 0.0, %v1837
          %v1839 = vpop.f32.mrf.mxu0
          %1840 = vmatprep.mubr.f32.mxu0 0.0
          %1841 = vmatmul.mubr.f32.gmra.mxu0 %v1745
          %v1842 = vpop.f32.mrf.mxu0
          %v1843 = vadd.f32 0.0, %v1842
          %v1844 = vpop.f32.mrf.mxu0
          %1845 = vmatprep.mubr.f32.mxu0 0.0
          %1846 = vmatmul.mubr.f32.gmra.mxu0 %v1748
          %v1847 = vpop.f32.mrf.mxu0
          %v1848 = vadd.f32 0.0, %v1847
          %v1849 = vpop.f32.mrf.mxu0
          %1850 = vmatprep.mubr.f32.mxu0 0.0
          %1851 = vmatmul.mubr.f32.gmra.mxu0 %v1751
          %v1852 = vpop.f32.mrf.mxu0
          %v1853 = vadd.f32 0.0, %v1852
          %v1854 = vpop.f32.mrf.mxu0
          %1855 = vmatprep.mubr.f32.mxu0 0.0
          %1856 = vmatmul.mubr.f32.gmra.mxu0 %v1754
          %v1857 = vpop.f32.mrf.mxu0
          %v1858 = vadd.f32 0.0, %v1857
          %v1859 = vpop.f32.mrf.mxu0
          %1860 = vdwg.mxu0
          %v1861 = vadd.f32 %v1697, %v1823
          %v1862 = vadd.f32 %v1698, %v1828
          %v1863 = vadd.f32 %v1699, %v1833
          %v1864 = vadd.f32 %v1700, %v1838
          %v1865 = vadd.f32 %v1701, %v1843
          %v1866 = vadd.f32 %v1702, %v1848
          %v1867 = vadd.f32 %v1703, %v1853
          %v1868 = vadd.f32 %v1704, %v1858
          %1869 = vrot.lane.b32.xlu0 %v563, 119
          %v1870 = vpop.permute.xlu0 %1869
          %1871 = vrot.lane.b32.xlu0 %v568, 119
          %v1872 = vpop.permute.xlu0 %1871
          %1873 = vrot.lane.b32.xlu0 %v573, 119
          %v1874 = vpop.permute.xlu0 %1873
          %1875 = vrot.lane.b32.xlu0 %v578, 119
          %v1876 = vpop.permute.xlu0 %1875
          %s1877 = scalar_lea.vmem %s4, 512
          %v1878 = vld [vmem:[%s1877] sm:$0xff]
          %v1879 = vld [vmem:[%s1877 + $0x8] sm:$0xff]
          %v1880 = vld [vmem:[%s1877 + $0x10] sm:$0xff]
          %v1881 = vld [vmem:[%s1877 + $0x18] sm:$0xff]
          %v1882 = vld [vmem:[%s1877 + $0x20] sm:$0xff]
          %v1883 = vld [vmem:[%s1877 + $0x28] sm:$0xff]
          %v1884 = vld [vmem:[%s1877 + $0x30] sm:$0xff]
          %v1885 = vld [vmem:[%s1877 + $0x38] sm:$0xff]
          %v1887 = vlaneseq
          %v1888 = vshrl.u32 %v1887, 7
          %v1889 = vsub.s32 0, %v1888
          %v1890 = vrot.slane %v414, %v1889
          %v1892 = vmul.f32 %v1870, %v1890
          %v1893 = vmul.f32 %v1872, %v1890
          %v1894 = vmul.f32 %v1874, %v1890
          %v1895 = vmul.f32 %v1876, %v1890
          %v1897 = vsel %vm634, %v1878, 0
          %v1900 = vsel %vm634, %v1879, 0
          %v1903 = vsel %vm634, %v1880, 0
          %v1906 = vsel %vm634, %v1881, 0
          %v1909 = vsel %vm634, %v1882, 0
          %v1912 = vsel %vm634, %v1883, 0
          %v1915 = vsel %vm634, %v1884, 0
          %v1918 = vsel %vm634, %v1885, 0
          %1920 = vmatprep.subr.mxu0 0.0
          %1921 = vmatpush1.msra.mxu0 0.0
          %1922 = vmatprep.subr.mxu0 0.0
          %1923 = vmatpush1.msra.mxu0 0.0
          %1924 = vmatprep.subr.mxu0 0.0
          %1925 = vmatpush1.msra.mxu0 0.0
          %1926 = vmatprep.subr.mxu0 0.0
          %1927 = vmatpush1.msra.mxu0 0.0
          %1928 = vmatprep.subr.mxu0 0.0
          %1929 = vmatpush1.msra.mxu0 0.0
          %1930 = vmatprep.subr.mxu0 0.0
          %1931 = vmatpush1.msra.mxu0 0.0
          %1932 = vmatprep.subr.mxu0 0.0
          %1933 = vmatpush1.msra.mxu0 0.0
          %1934 = vmatprep.subr.mxu0 0.0
          %1935 = vmatpush1.msra.mxu0 0.0
          %1936 = vmatprep.subr.mxu0 0.0
          %1937 = vmatpush1.msra.mxu0 0.0
          %1938 = vmatprep.subr.mxu0 0.0
          %1939 = vmatpush1.msra.mxu0 0.0
          %1940 = vmatprep.subr.mxu0 0.0
          %1941 = vmatpush1.msra.mxu0 0.0
          %1942 = vmatprep.subr.mxu0 0.0
          %1943 = vmatpush1.msra.mxu0 0.0
          %1944 = vmatprep.subr.mxu0 0.0
          %1945 = vmatpush1.msra.mxu0 %v1895
          %1946 = vmatprep.subr.mxu0 0.0
          %1947 = vmatpush1.msra.mxu0 %v1894
          %1948 = vmatprep.subr.mxu0 0.0
          %1949 = vmatpush1.msra.mxu0 %v1893
          %1950 = vmatprep.subr.mxu0 0.0
          %1951 = vmatpush1.msra.mxu0 %v1892
          %1952 = vmatprep.subr.mxu0 0.0
          %1953 = vmatpush2.msra.mxu0 0.0
          %1954 = vmatprep.subr.mxu0 0.0
          %1955 = vmatpush2.msra.mxu0 0.0
          %1956 = vmatprep.subr.mxu0 0.0
          %1957 = vmatpush2.msra.mxu0 0.0
          %1958 = vmatprep.subr.mxu0 0.0
          %1959 = vmatpush2.msra.mxu0 0.0
          %1960 = vmatprep.subr.mxu0 0.0
          %1961 = vmatpush2.msra.mxu0 0.0
          %1962 = vmatprep.subr.mxu0 0.0
          %1963 = vmatpush2.msra.mxu0 0.0
          %1964 = vmatprep.subr.mxu0 0.0
          %1965 = vmatpush2.msra.mxu0 0.0
          %1966 = vmatprep.subr.mxu0 0.0
          %1967 = vmatpush2.msra.mxu0 0.0
          %1968 = vmatprep.subr.mxu0 0.0
          %1969 = vmatpush2.msra.mxu0 0.0
          %1970 = vmatprep.subr.mxu0 0.0
          %1971 = vmatpush2.msra.mxu0 0.0
          %1972 = vmatprep.subr.mxu0 0.0
          %1973 = vmatpush2.msra.mxu0 0.0
          %1974 = vmatprep.subr.mxu0 0.0
          %1975 = vmatpush2.msra.mxu0 0.0
          %1976 = vmatprep.subr.mxu0 0.0
          %1977 = vmatpush2.msra.mxu0 0.0
          %1978 = vmatprep.subr.mxu0 0.0
          %1979 = vmatpush2.msra.mxu0 0.0
          %1980 = vmatprep.subr.mxu0 0.0
          %1981 = vmatpush2.msra.mxu0 0.0
          %1982 = vmatprep.subr.mxu0 0.0
          %1983 = vmatpush2.msra.mxu0 0.0
          %1984 = vmatprep.mubr.f32.mxu0 0.0
          %1985 = vmatmul.mubr.f32.gmra.mxu0 %v1897
          %v1986 = vpop.f32.mrf.mxu0
          %v1987 = vadd.f32 0.0, %v1986
          %v1988 = vpop.f32.mrf.mxu0
          %1989 = vmatprep.mubr.f32.mxu0 0.0
          %1990 = vmatmul.mubr.f32.gmra.mxu0 %v1900
          %v1991 = vpop.f32.mrf.mxu0
          %v1992 = vadd.f32 0.0, %v1991
          %v1993 = vpop.f32.mrf.mxu0
          %1994 = vmatprep.mubr.f32.mxu0 0.0
          %1995 = vmatmul.mubr.f32.gmra.mxu0 %v1903
          %v1996 = vpop.f32.mrf.mxu0
          %v1997 = vadd.f32 0.0, %v1996
          %v1998 = vpop.f32.mrf.mxu0
          %1999 = vmatprep.mubr.f32.mxu0 0.0
          %2000 = vmatmul.mubr.f32.gmra.mxu0 %v1906
          %v2001 = vpop.f32.mrf.mxu0
          %v2002 = vadd.f32 0.0, %v2001
          %v2003 = vpop.f32.mrf.mxu0
          %2004 = vmatprep.mubr.f32.mxu0 0.0
          %2005 = vmatmul.mubr.f32.gmra.mxu0 %v1909
          %v2006 = vpop.f32.mrf.mxu0
          %v2007 = vadd.f32 0.0, %v2006
          %v2008 = vpop.f32.mrf.mxu0
          %2009 = vmatprep.mubr.f32.mxu0 0.0
          %2010 = vmatmul.mubr.f32.gmra.mxu0 %v1912
          %v2011 = vpop.f32.mrf.mxu0
          %v2012 = vadd.f32 0.0, %v2011
          %v2013 = vpop.f32.mrf.mxu0
          %2014 = vmatprep.mubr.f32.mxu0 0.0
          %2015 = vmatmul.mubr.f32.gmra.mxu0 %v1915
          %v2016 = vpop.f32.mrf.mxu0
          %v2017 = vadd.f32 0.0, %v2016
          %v2018 = vpop.f32.mrf.mxu0
          %2019 = vmatprep.mubr.f32.mxu0 0.0
          %2020 = vmatmul.mubr.f32.gmra.mxu0 %v1918
          %v2021 = vpop.f32.mrf.mxu0
          %v2022 = vadd.f32 0.0, %v2021
          %v2023 = vpop.f32.mrf.mxu0
          %2024 = vdwg.mxu0
          %v2025 = vadd.f32 %v1861, %v1987
          %v2026 = vadd.f32 %v1862, %v1992
          %v2027 = vadd.f32 %v1863, %v1997
          %v2028 = vadd.f32 %v1864, %v2002
          %v2029 = vadd.f32 %v1865, %v2007
          %v2030 = vadd.f32 %v1866, %v2012
          %v2031 = vadd.f32 %v1867, %v2017
          %v2032 = vadd.f32 %v1868, %v2022
          %v2033 = vld [vmem:[%s5] sm:$0xff]
          %v2034 = vld [vmem:[%s5 + $0x8] sm:$0xff]
          %v2035 = vld [vmem:[%s5 + $0x10] sm:$0xff]
          %v2036 = vld [vmem:[%s5 + $0x18] sm:$0xff]
          %v2037 = vld [vmem:[%s5 + $0x20] sm:$0xff]
          %v2038 = vld [vmem:[%s5 + $0x28] sm:$0xff]
          %v2039 = vld [vmem:[%s5 + $0x30] sm:$0xff]
          %v2040 = vld [vmem:[%s5 + $0x38] sm:$0xff]
          %2042 = vset.pattern.permute.xlu0 0
          %2043 = vperm.xlu0 %2042, %v2033
          %v2044 = vpop.permute.xlu0 %2043
          %2047 = vset.pattern.permute.xlu0 0
          %2048 = vperm.xlu0 %2047, %v2034
          %v2049 = vpop.permute.xlu0 %2048
          %2052 = vset.pattern.permute.xlu0 0
          %2053 = vperm.xlu0 %2052, %v2035
          %v2054 = vpop.permute.xlu0 %2053
          %2057 = vset.pattern.permute.xlu0 0
          %2058 = vperm.xlu0 %2057, %v2036
          %v2059 = vpop.permute.xlu0 %2058
          %2062 = vset.pattern.permute.xlu0 0
          %2063 = vperm.xlu0 %2062, %v2037
          %v2064 = vpop.permute.xlu0 %2063
          %2067 = vset.pattern.permute.xlu0 0
          %2068 = vperm.xlu0 %2067, %v2038
          %v2069 = vpop.permute.xlu0 %2068
          %2072 = vset.pattern.permute.xlu0 0
          %2073 = vperm.xlu0 %2072, %v2039
          %v2074 = vpop.permute.xlu0 %2073
          %2077 = vset.pattern.permute.xlu0 0
          %2078 = vperm.xlu0 %2077, %v2040
          %v2079 = vpop.permute.xlu0 %2078
          %v2081 = vadd.f32 %v2025, %v2044
          %v2082 = vadd.f32 %v2026, %v2049
          %v2083 = vadd.f32 %v2027, %v2054
          %v2084 = vadd.f32 %v2028, %v2059
          %v2085 = vadd.f32 %v2029, %v2064
          %v2086 = vadd.f32 %v2030, %v2069
          %v2087 = vadd.f32 %v2031, %v2074
          %v2088 = vadd.f32 %v2032, %v2079
          %v2089 = vmul.f32 %v2081, %v1234
          %v2090 = vmul.f32 %v2082, %v1234
          %v2091 = vmul.f32 %v2083, %v1234
          %v2092 = vmul.f32 %v2084, %v1234
          %v2093 = vmul.f32 %v2085, %v1234
          %v2094 = vmul.f32 %v2086, %v1234
          %v2095 = vmul.f32 %v2087, %v1234
          %v2096 = vmul.f32 %v2088, %v1234
          %2097 = vrot.lane.b32.xlu0 %v2093, 64
          %v2098 = vpop.permute.xlu0 %2097
          %2099 = vrot.lane.b32.xlu0 %v2094, 64
          %v2100 = vpop.permute.xlu0 %2099
          %2101 = vrot.lane.b32.xlu0 %v2095, 64
          %v2102 = vpop.permute.xlu0 %2101
          %2103 = vrot.lane.b32.xlu0 %v2096, 64
          %v2104 = vpop.permute.xlu0 %2103
          %v2105 = vadd.f32 %v2089, %v2098
          %v2106 = vadd.f32 %v2090, %v2100
          %v2107 = vadd.f32 %v2091, %v2102
          %v2108 = vadd.f32 %v2092, %v2104
          %v2113 = vcombine.high %v2105, %v2105
          %v2115 = vunpack.c.l.s4 1966171168
          %v2116 = vunpack.c.0.s8 %v2115
          %v2117 = vlaneseq
          %v2118 = vshrl.u32 %v2117, 7
          %v2119 = vsub.s32 %v2116, %v2118
          %v2120 = vrot.slane %v2105, %v2119
          %v2122 = vunpack.c.l.s4 1966171168
          %v2123 = vunpack.c.0.s8 %v2122
          %v2124 = vlaneseq
          %v2125 = vshrl.u32 %v2124, 7
          %v2126 = vsub.s32 %v2123, %v2125
          %v2127 = vrot.slane %v2113, %v2126
          %v2128 = vcombine.high %v2120, %v2120
          %v2129 = vcombine.high %v2127, %v2127
          %v2131 = vunpack.c.l.s4 1966171168
          %v2132 = vunpack.c.0.s8 %v2131
          %v2133 = vlaneseq
          %v2134 = vshrl.u32 %v2133, 7
          %v2135 = vsub.s32 %v2132, %v2134
          %v2136 = vrot.slane %v2120, %v2135
          %v2138 = vunpack.c.l.s4 1966171168
          %v2139 = vunpack.c.0.s8 %v2138
          %v2140 = vlaneseq
          %v2141 = vshrl.u32 %v2140, 7
          %v2142 = vsub.s32 %v2139, %v2141
          %v2143 = vrot.slane %v2127, %v2142
          %v2145 = vunpack.c.l.s4 1966171168
          %v2146 = vunpack.c.0.s8 %v2145
          %v2147 = vlaneseq
          %v2148 = vshrl.u32 %v2147, 7
          %v2149 = vsub.s32 %v2146, %v2148
          %v2150 = vrot.slane %v2128, %v2149
          %v2152 = vunpack.c.l.s4 1966171168
          %v2153 = vunpack.c.0.s8 %v2152
          %v2154 = vlaneseq
          %v2155 = vshrl.u32 %v2154, 7
          %v2156 = vsub.s32 %v2153, %v2155
          %v2157 = vrot.slane %v2129, %v2156
          %v2158 = vcombine.high %v2136, %v2136
          %v2159 = vcombine.high %v2143, %v2143
          %v2160 = vcombine.high %v2150, %v2150
          %v2161 = vcombine.high %v2157, %v2157
          %v2162 = vcombine.high %v2106, %v2106
          %v2164 = vunpack.c.l.s4 1966171168
          %v2165 = vunpack.c.0.s8 %v2164
          %v2166 = vlaneseq
          %v2167 = vshrl.u32 %v2166, 7
          %v2168 = vsub.s32 %v2165, %v2167
          %v2169 = vrot.slane %v2106, %v2168
          %v2171 = vunpack.c.l.s4 1966171168
          %v2172 = vunpack.c.0.s8 %v2171
          %v2173 = vlaneseq
          %v2174 = vshrl.u32 %v2173, 7
          %v2175 = vsub.s32 %v2172, %v2174
          %v2176 = vrot.slane %v2162, %v2175
          %v2177 = vcombine.high %v2169, %v2169
          %v2178 = vcombine.high %v2176, %v2176
          %v2180 = vunpack.c.l.s4 1966171168
          %v2181 = vunpack.c.0.s8 %v2180
          %v2182 = vlaneseq
          %v2183 = vshrl.u32 %v2182, 7
          %v2184 = vsub.s32 %v2181, %v2183
          %v2185 = vrot.slane %v2169, %v2184
          %v2187 = vunpack.c.l.s4 1966171168
          %v2188 = vunpack.c.0.s8 %v2187
          %v2189 = vlaneseq
          %v2190 = vshrl.u32 %v2189, 7
          %v2191 = vsub.s32 %v2188, %v2190
          %v2192 = vrot.slane %v2176, %v2191
          %v2194 = vunpack.c.l.s4 1966171168
          %v2195 = vunpack.c.0.s8 %v2194
          %v2196 = vlaneseq
          %v2197 = vshrl.u32 %v2196, 7
          %v2198 = vsub.s32 %v2195, %v2197
          %v2199 = vrot.slane %v2177, %v2198
          %v2201 = vunpack.c.l.s4 1966171168
          %v2202 = vunpack.c.0.s8 %v2201
          %v2203 = vlaneseq
          %v2204 = vshrl.u32 %v2203, 7
          %v2205 = vsub.s32 %v2202, %v2204
          %v2206 = vrot.slane %v2178, %v2205
          %v2207 = vcombine.high %v2185, %v2185
          %v2208 = vcombine.high %v2192, %v2192
          %v2209 = vcombine.high %v2199, %v2199
          %v2210 = vcombine.high %v2206, %v2206
          %v2211 = vcombine.high %v2107, %v2107
          %v2213 = vunpack.c.l.s4 1966171168
          %v2214 = vunpack.c.0.s8 %v2213
          %v2215 = vlaneseq
          %v2216 = vshrl.u32 %v2215, 7
          %v2217 = vsub.s32 %v2214, %v2216
          %v2218 = vrot.slane %v2107, %v2217
          %v2220 = vunpack.c.l.s4 1966171168
          %v2221 = vunpack.c.0.s8 %v2220
          %v2222 = vlaneseq
          %v2223 = vshrl.u32 %v2222, 7
          %v2224 = vsub.s32 %v2221, %v2223
          %v2225 = vrot.slane %v2211, %v2224
          %v2226 = vcombine.high %v2218, %v2218
          %v2227 = vcombine.high %v2225, %v2225
          %v2229 = vunpack.c.l.s4 1966171168
          %v2230 = vunpack.c.0.s8 %v2229
          %v2231 = vlaneseq
          %v2232 = vshrl.u32 %v2231, 7
          %v2233 = vsub.s32 %v2230, %v2232
          %v2234 = vrot.slane %v2218, %v2233
          %v2236 = vunpack.c.l.s4 1966171168
          %v2237 = vunpack.c.0.s8 %v2236
          %v2238 = vlaneseq
          %v2239 = vshrl.u32 %v2238, 7
          %v2240 = vsub.s32 %v2237, %v2239
          %v2241 = vrot.slane %v2225, %v2240
          %v2243 = vunpack.c.l.s4 1966171168
          %v2244 = vunpack.c.0.s8 %v2243
          %v2245 = vlaneseq
          %v2246 = vshrl.u32 %v2245, 7
          %v2247 = vsub.s32 %v2244, %v2246
          %v2248 = vrot.slane %v2226, %v2247
          %v2250 = vunpack.c.l.s4 1966171168
          %v2251 = vunpack.c.0.s8 %v2250
          %v2252 = vlaneseq
          %v2253 = vshrl.u32 %v2252, 7
          %v2254 = vsub.s32 %v2251, %v2253
          %v2255 = vrot.slane %v2227, %v2254
          %v2256 = vcombine.high %v2234, %v2234
          %v2257 = vcombine.high %v2241, %v2241
          %v2258 = vcombine.high %v2248, %v2248
          %v2259 = vcombine.high %v2255, %v2255
          %v2260 = vcombine.high %v2108, %v2108
          %v2262 = vunpack.c.l.s4 1966171168
          %v2263 = vunpack.c.0.s8 %v2262
          %v2264 = vlaneseq
          %v2265 = vshrl.u32 %v2264, 7
          %v2266 = vsub.s32 %v2263, %v2265
          %v2267 = vrot.slane %v2108, %v2266
          %v2269 = vunpack.c.l.s4 1966171168
          %v2270 = vunpack.c.0.s8 %v2269
          %v2271 = vlaneseq
          %v2272 = vshrl.u32 %v2271, 7
          %v2273 = vsub.s32 %v2270, %v2272
          %v2274 = vrot.slane %v2260, %v2273
          %v2275 = vcombine.high %v2267, %v2267
          %v2276 = vcombine.high %v2274, %v2274
          %v2278 = vunpack.c.l.s4 1966171168
          %v2279 = vunpack.c.0.s8 %v2278
          %v2280 = vlaneseq
          %v2281 = vshrl.u32 %v2280, 7
          %v2282 = vsub.s32 %v2279, %v2281
          %v2283 = vrot.slane %v2267, %v2282
          %v2285 = vunpack.c.l.s4 1966171168
          %v2286 = vunpack.c.0.s8 %v2285
          %v2287 = vlaneseq
          %v2288 = vshrl.u32 %v2287, 7
          %v2289 = vsub.s32 %v2286, %v2288
          %v2290 = vrot.slane %v2274, %v2289
          %v2292 = vunpack.c.l.s4 1966171168
          %v2293 = vunpack.c.0.s8 %v2292
          %v2294 = vlaneseq
          %v2295 = vshrl.u32 %v2294, 7
          %v2296 = vsub.s32 %v2293, %v2295
          %v2297 = vrot.slane %v2275, %v2296
          %v2299 = vunpack.c.l.s4 1966171168
          %v2300 = vunpack.c.0.s8 %v2299
          %v2301 = vlaneseq
          %v2302 = vshrl.u32 %v2301, 7
          %v2303 = vsub.s32 %v2300, %v2302
          %v2304 = vrot.slane %v2276, %v2303
          %v2305 = vcombine.high %v2283, %v2283
          %v2306 = vcombine.high %v2290, %v2290
          %v2307 = vcombine.high %v2297, %v2297
          %v2308 = vcombine.high %v2304, %v2304
          %2341 = vst [vmem:[#allocation2] sm:$0x1] %v2136
          %2342 = vst [vmem:[#allocation2 + $0x1] sm:$0x1] %v2150
          %2343 = vst [vmem:[#allocation2 + $0x2] sm:$0x1] %v2158
          %2344 = vst [vmem:[#allocation2 + $0x3] sm:$0x1] %v2160
          %2345 = vst [vmem:[#allocation2 + $0x4] sm:$0x1] %v2143
          %2346 = vst [vmem:[#allocation2 + $0x5] sm:$0x1] %v2157
          %2347 = vst [vmem:[#allocation2 + $0x6] sm:$0x1] %v2159
          %2348 = vst [vmem:[#allocation2 + $0x7] sm:$0x1] %v2161
          %2349 = vst [vmem:[#allocation2 + $0x8] sm:$0x1] %v2185
          %2350 = vst [vmem:[#allocation2 + $0x9] sm:$0x1] %v2199
          %2351 = vst [vmem:[#allocation2 + $0xa] sm:$0x1] %v2207
          %2352 = vst [vmem:[#allocation2 + $0xb] sm:$0x1] %v2209
          %2353 = vst [vmem:[#allocation2 + $0xc] sm:$0x1] %v2192
          %2354 = vst [vmem:[#allocation2 + $0xd] sm:$0x1] %v2206
          %2355 = vst [vmem:[#allocation2 + $0xe] sm:$0x1] %v2208
          %2356 = vst [vmem:[#allocation2 + $0xf] sm:$0x1] %v2210
          %2357 = vst [vmem:[#allocation2 + $0x10] sm:$0x1] %v2234
          %2358 = vst [vmem:[#allocation2 + $0x11] sm:$0x1] %v2248
          %2359 = vst [vmem:[#allocation2 + $0x12] sm:$0x1] %v2256
          %2360 = vst [vmem:[#allocation2 + $0x13] sm:$0x1] %v2258
          %2361 = vst [vmem:[#allocation2 + $0x14] sm:$0x1] %v2241
          %2362 = vst [vmem:[#allocation2 + $0x15] sm:$0x1] %v2255
          %2363 = vst [vmem:[#allocation2 + $0x16] sm:$0x1] %v2257
          %2364 = vst [vmem:[#allocation2 + $0x17] sm:$0x1] %v2259
          %2365 = vst [vmem:[#allocation2 + $0x18] sm:$0x1] %v2283
          %2366 = vst [vmem:[#allocation2 + $0x19] sm:$0x1] %v2297
          %2367 = vst [vmem:[#allocation2 + $0x1a] sm:$0x1] %v2305
          %2368 = vst [vmem:[#allocation2 + $0x1b] sm:$0x1] %v2307
          %2369 = vst [vmem:[#allocation2 + $0x1c] sm:$0x1] %v2290
          %2370 = vst [vmem:[#allocation2 + $0x1d] sm:$0x1] %v2304
          %2371 = vst [vmem:[#allocation2 + $0x1e] sm:$0x1] %v2306
          %2372 = vst [vmem:[#allocation2 + $0x1f] sm:$0x1] %v2308
          %v2373 = vld [vmem:[%s7] sm:$0x1]
          %2374 = vst [vmem:[#allocation3] sm:$0x1] %v2373
        $region68: #{sarsa_forward.1} parent=59 // pred_fallthru
          _
        %s2375 = smul.u32 %s25, 8
        %s2376 = scalar_lea.vmem [#allocation2], %s2375
        %v2377 = vld [vmem:[%s2376] sm:$0x1]
        %v2378 = vld [vmem:[%s2376 + $0x1] sm:$0x1]
        %v2379 = vld [vmem:[%s2376 + $0x2] sm:$0x1]
        %v2380 = vld [vmem:[%s2376 + $0x3] sm:$0x1]
        %v2381 = vld [vmem:[%s2376 + $0x4] sm:$0x1]
        %v2382 = vld [vmem:[%s2376 + $0x5] sm:$0x1]
        %v2383 = vld [vmem:[%s2376 + $0x6] sm:$0x1]
        %v2384 = vld [vmem:[%s2376 + $0x7] sm:$0x1]
        %v2385 = vpack.c.bf16 %v2377, %v2377
        %v2386 = vpack.c.bf16 %v2378, %v2378
        %v2387 = vpack.c.bf16 %v2379, %v2379
        %v2388 = vpack.c.bf16 %v2380, %v2380
        %v2389 = vpack.c.bf16 %v2381, %v2381
        %v2390 = vpack.c.bf16 %v2382, %v2382
        %v2391 = vpack.c.bf16 %v2383, %v2383
        %v2392 = vpack.c.bf16 %v2384, %v2384
        %v2393 = vld [vmem:[%s335] sm:$0xf]
        %v2394 = vld [vmem:[%s335 + $0x4] sm:$0xf]
        %v2395 = vld [vmem:[%s335 + $0x8] sm:$0xf]
        %v2396 = vld [vmem:[%s335 + $0xc] sm:$0xf]
        %v2397 = vld [vmem:[%s335 + $0x10] sm:$0xf]
        %v2398 = vld [vmem:[%s335 + $0x14] sm:$0xf]
        %v2399 = vld [vmem:[%s335 + $0x18] sm:$0xf]
        %v2400 = vld [vmem:[%s335 + $0x1c] sm:$0xf]
        %v2401 = vld [vmem:[%s335 + $0x20] sm:$0xf]
        %v2402 = vld [vmem:[%s335 + $0x24] sm:$0xf]
        %v2403 = vld [vmem:[%s335 + $0x28] sm:$0xf]
        %v2404 = vld [vmem:[%s335 + $0x2c] sm:$0xf]
        %v2405 = vld [vmem:[%s335 + $0x30] sm:$0xf]
        %v2406 = vld [vmem:[%s335 + $0x34] sm:$0xf]
        %v2407 = vld [vmem:[%s335 + $0x38] sm:$0xf]
        %v2408 = vld [vmem:[%s335 + $0x3c] sm:$0xf]
        %v2409 = vld [vmem:[%s335 + $0x40] sm:$0xf]
        %v2410 = vld [vmem:[%s335 + $0x44] sm:$0xf]
        %v2411 = vld [vmem:[%s335 + $0x48] sm:$0xf]
        %v2412 = vld [vmem:[%s335 + $0x4c] sm:$0xf]
        %v2413 = vld [vmem:[%s335 + $0x50] sm:$0xf]
        %v2414 = vld [vmem:[%s335 + $0x54] sm:$0xf]
        %v2415 = vld [vmem:[%s335 + $0x58] sm:$0xf]
        %v2416 = vld [vmem:[%s335 + $0x5c] sm:$0xf]
        %v2417 = vld [vmem:[%s335 + $0x60] sm:$0xf]
        %v2418 = vld [vmem:[%s335 + $0x64] sm:$0xf]
        %v2419 = vld [vmem:[%s335 + $0x68] sm:$0xf]
        %v2420 = vld [vmem:[%s335 + $0x6c] sm:$0xf]
        %v2421 = vld [vmem:[%s335 + $0x70] sm:$0xf]
        %v2422 = vld [vmem:[%s335 + $0x74] sm:$0xf]
        %v2423 = vld [vmem:[%s335 + $0x78] sm:$0xf]
        %v2424 = vld [vmem:[%s335 + $0x7c] sm:$0xf]
        %v2425 = vld [vmem:[%s335 + $0x80] sm:$0xf]
        %v2426 = vld [vmem:[%s335 + $0x84] sm:$0xf]
        %v2427 = vld [vmem:[%s335 + $0x88] sm:$0xf]
        %v2428 = vld [vmem:[%s335 + $0x8c] sm:$0xf]
        %v2429 = vld [vmem:[%s335 + $0x90] sm:$0xf]
        %v2430 = vld [vmem:[%s335 + $0x94] sm:$0xf]
        %v2431 = vld [vmem:[%s335 + $0x98] sm:$0xf]
        %v2432 = vld [vmem:[%s335 + $0x9c] sm:$0xf]
        %v2433 = vld [vmem:[%s335 + $0xa0] sm:$0xf]
        %v2434 = vld [vmem:[%s335 + $0xa4] sm:$0xf]
        %v2435 = vld [vmem:[%s335 + $0xa8] sm:$0xf]
        %v2436 = vld [vmem:[%s335 + $0xac] sm:$0xf]
        %v2437 = vld [vmem:[%s335 + $0xb0] sm:$0xf]
        %v2438 = vld [vmem:[%s335 + $0xb4] sm:$0xf]
        %v2439 = vld [vmem:[%s335 + $0xb8] sm:$0xf]
        %v2440 = vld [vmem:[%s335 + $0xbc] sm:$0xf]
        %v2441 = vld [vmem:[%s335 + $0xc0] sm:$0xf]
        %v2442 = vld [vmem:[%s335 + $0xc4] sm:$0xf]
        %v2443 = vld [vmem:[%s335 + $0xc8] sm:$0xf]
        %v2444 = vld [vmem:[%s335 + $0xcc] sm:$0xf]
        %v2445 = vld [vmem:[%s335 + $0xd0] sm:$0xf]
        %v2446 = vld [vmem:[%s335 + $0xd4] sm:$0xf]
        %v2447 = vld [vmem:[%s335 + $0xd8] sm:$0xf]
        %v2448 = vld [vmem:[%s335 + $0xdc] sm:$0xf]
        %v2449 = vld [vmem:[%s335 + $0xe0] sm:$0xf]
        %v2450 = vld [vmem:[%s335 + $0xe4] sm:$0xf]
        %v2451 = vld [vmem:[%s335 + $0xe8] sm:$0xf]
        %v2452 = vld [vmem:[%s335 + $0xec] sm:$0xf]
        %v2453 = vld [vmem:[%s335 + $0xf0] sm:$0xf]
        %v2454 = vld [vmem:[%s335 + $0xf4] sm:$0xf]
        %v2455 = vld [vmem:[%s335 + $0xf8] sm:$0xf]
        %v2456 = vld [vmem:[%s335 + $0xfc] sm:$0xf]
        %v2457 = vld [vmem:[%s335 + $0x100] sm:$0xf]
        %v2458 = vld [vmem:[%s335 + $0x104] sm:$0xf]
        %v2459 = vld [vmem:[%s335 + $0x108] sm:$0xf]
        %v2460 = vld [vmem:[%s335 + $0x10c] sm:$0xf]
        %v2461 = vld [vmem:[%s335 + $0x110] sm:$0xf]
        %v2462 = vld [vmem:[%s335 + $0x114] sm:$0xf]
        %v2463 = vld [vmem:[%s335 + $0x118] sm:$0xf]
        %v2464 = vld [vmem:[%s335 + $0x11c] sm:$0xf]
        %v2465 = vld [vmem:[%s335 + $0x120] sm:$0xf]
        %v2466 = vld [vmem:[%s335 + $0x124] sm:$0xf]
        %v2467 = vld [vmem:[%s335 + $0x128] sm:$0xf]
        %v2468 = vld [vmem:[%s335 + $0x12c] sm:$0xf]
        %v2469 = vld [vmem:[%s335 + $0x130] sm:$0xf]
        %v2470 = vld [vmem:[%s335 + $0x134] sm:$0xf]
        %v2471 = vld [vmem:[%s335 + $0x138] sm:$0xf]
        %v2472 = vld [vmem:[%s335 + $0x13c] sm:$0xf]
        %v2473 = vld [vmem:[%s335 + $0x140] sm:$0xf]
        %v2474 = vld [vmem:[%s335 + $0x144] sm:$0xf]
        %v2475 = vld [vmem:[%s335 + $0x148] sm:$0xf]
        %v2476 = vld [vmem:[%s335 + $0x14c] sm:$0xf]
        %v2477 = vld [vmem:[%s335 + $0x150] sm:$0xf]
        %v2478 = vld [vmem:[%s335 + $0x154] sm:$0xf]
        %v2479 = vld [vmem:[%s335 + $0x158] sm:$0xf]
        %v2480 = vld [vmem:[%s335 + $0x15c] sm:$0xf]
        %v2481 = vld [vmem:[%s335 + $0x160] sm:$0xf]
        %v2482 = vld [vmem:[%s335 + $0x164] sm:$0xf]
        %v2483 = vld [vmem:[%s335 + $0x168] sm:$0xf]
        %v2484 = vld [vmem:[%s335 + $0x16c] sm:$0xf]
        %v2485 = vld [vmem:[%s335 + $0x170] sm:$0xf]
        %v2486 = vld [vmem:[%s335 + $0x174] sm:$0xf]
        %v2487 = vld [vmem:[%s335 + $0x178] sm:$0xf]
        %v2488 = vld [vmem:[%s335 + $0x17c] sm:$0xf]
        %v2489 = vld [vmem:[%s335 + $0x180] sm:$0xf]
        %v2490 = vld [vmem:[%s335 + $0x184] sm:$0xf]
        %v2491 = vld [vmem:[%s335 + $0x188] sm:$0xf]
        %v2492 = vld [vmem:[%s335 + $0x18c] sm:$0xf]
        %v2493 = vld [vmem:[%s335 + $0x190] sm:$0xf]
        %v2494 = vld [vmem:[%s335 + $0x194] sm:$0xf]
        %v2495 = vld [vmem:[%s335 + $0x198] sm:$0xf]
        %v2496 = vld [vmem:[%s335 + $0x19c] sm:$0xf]
        %v2497 = vld [vmem:[%s335 + $0x1a0] sm:$0xf]
        %v2498 = vld [vmem:[%s335 + $0x1a4] sm:$0xf]
        %v2499 = vld [vmem:[%s335 + $0x1a8] sm:$0xf]
        %v2500 = vld [vmem:[%s335 + $0x1ac] sm:$0xf]
        %v2501 = vld [vmem:[%s335 + $0x1b0] sm:$0xf]
        %v2502 = vld [vmem:[%s335 + $0x1b4] sm:$0xf]
        %v2503 = vld [vmem:[%s335 + $0x1b8] sm:$0xf]
        %v2504 = vld [vmem:[%s335 + $0x1bc] sm:$0xf]
        %v2505 = vld [vmem:[%s335 + $0x1c0] sm:$0xf]
        %v2506 = vld [vmem:[%s335 + $0x1c4] sm:$0xf]
        %v2507 = vld [vmem:[%s335 + $0x1c8] sm:$0xf]
        %v2508 = vld [vmem:[%s335 + $0x1cc] sm:$0xf]
        %v2509 = vld [vmem:[%s335 + $0x1d0] sm:$0xf]
        %v2510 = vld [vmem:[%s335 + $0x1d4] sm:$0xf]
        %v2511 = vld [vmem:[%s335 + $0x1d8] sm:$0xf]
        %v2512 = vld [vmem:[%s335 + $0x1dc] sm:$0xf]
        %v2513 = vld [vmem:[%s335 + $0x1e0] sm:$0xf]
        %v2514 = vld [vmem:[%s335 + $0x1e4] sm:$0xf]
        %v2515 = vld [vmem:[%s335 + $0x1e8] sm:$0xf]
        %v2516 = vld [vmem:[%s335 + $0x1ec] sm:$0xf]
        %v2517 = vld [vmem:[%s335 + $0x1f0] sm:$0xf]
        %v2518 = vld [vmem:[%s335 + $0x1f4] sm:$0xf]
        %v2519 = vld [vmem:[%s335 + $0x1f8] sm:$0xf]
        %v2520 = vld [vmem:[%s335 + $0x1fc] sm:$0xf]
        %v2537 = vunpack.c.l.b16 %v2393
        %v2538 = vunpack.c.l.b16 %v2394
        %v2539 = vunpack.c.l.b16 %v2395
        %v2540 = vunpack.c.l.b16 %v2396
        %v2541 = vunpack.c.l.b16 %v2397
        %v2542 = vunpack.c.l.b16 %v2398
        %v2543 = vunpack.c.l.b16 %v2399
        %v2544 = vunpack.c.l.b16 %v2400
        %v2545 = vunpack.c.l.b16 %v2401
        %v2546 = vunpack.c.l.b16 %v2402
        %v2547 = vunpack.c.l.b16 %v2403
        %v2548 = vunpack.c.l.b16 %v2404
        %v2549 = vunpack.c.l.b16 %v2405
        %v2550 = vunpack.c.l.b16 %v2406
        %v2551 = vunpack.c.l.b16 %v2407
        %v2552 = vunpack.c.l.b16 %v2408
        %v2553 = vpack.c.b16 %v2538, %v2537
        %v2554 = vpack.c.b16 %v2540, %v2539
        %v2555 = vpack.c.b16 %v2542, %v2541
        %v2556 = vpack.c.b16 %v2544, %v2543
        %v2557 = vpack.c.b16 %v2546, %v2545
        %v2558 = vpack.c.b16 %v2548, %v2547
        %v2559 = vpack.c.b16 %v2550, %v2549
        %v2560 = vpack.c.b16 %v2552, %v2551
        %2569 = vmatprep.subr.bf16.mxu0 0
        %2570 = vmatpush1.bf16.msra.mxu0 %v2560
        %2571 = vmatprep.subr.bf16.mxu0 0
        %2572 = vmatpush1.bf16.msra.mxu0 %v2559
        %2573 = vmatprep.subr.bf16.mxu0 0
        %2574 = vmatpush1.bf16.msra.mxu0 %v2558
        %2575 = vmatprep.subr.bf16.mxu0 0
        %2576 = vmatpush1.bf16.msra.mxu0 %v2557
        %2577 = vmatprep.subr.bf16.mxu0 0
        %2578 = vmatpush1.bf16.msra.mxu0 %v2556
        %2579 = vmatprep.subr.bf16.mxu0 0
        %2580 = vmatpush1.bf16.msra.mxu0 %v2555
        %2581 = vmatprep.subr.bf16.mxu0 0
        %2582 = vmatpush1.bf16.msra.mxu0 %v2554
        %2583 = vmatprep.subr.bf16.mxu0 0
        %2584 = vmatpush1.bf16.msra.mxu0 %v2553
        %2585 = vmatprep.subr.bf16.mxu0 0
        %2586 = vmatpush2.bf16.msra.mxu0 0
        %2587 = vmatprep.subr.bf16.mxu0 0
        %2588 = vmatpush2.bf16.msra.mxu0 0
        %2589 = vmatprep.subr.bf16.mxu0 0
        %2590 = vmatpush2.bf16.msra.mxu0 0
        %2591 = vmatprep.subr.bf16.mxu0 0
        %2592 = vmatpush2.bf16.msra.mxu0 0
        %2593 = vmatprep.subr.bf16.mxu0 0
        %2594 = vmatpush2.bf16.msra.mxu0 0
        %2595 = vmatprep.subr.bf16.mxu0 0
        %2596 = vmatpush2.bf16.msra.mxu0 0
        %2597 = vmatprep.subr.bf16.mxu0 0
        %2598 = vmatpush2.bf16.msra.mxu0 0
        %2599 = vmatprep.subr.bf16.mxu0 0
        %2600 = vmatpush2.bf16.msra.mxu0 0
        %2601 = vmatprep.mubr.bf16.mxu0 0
        %2602 = vmatmul.mubr.bf16.gmra.mxu0 %v2385
        %v2603 = vpop.f32.mrf.mxu0
        %v2604 = vadd.f32 0.0, %v2603
        %v2605 = vpop.f32.mrf.mxu0
        %v2606 = vpop.f32.mrf.mxu0
        %v2607 = vpop.f32.mrf.mxu0
        %2608 = vdwg.mxu0
        %v2625 = vunpack.c.l.b16 %v2409
        %v2626 = vunpack.c.l.b16 %v2410
        %v2627 = vunpack.c.l.b16 %v2411
        %v2628 = vunpack.c.l.b16 %v2412
        %v2629 = vunpack.c.l.b16 %v2413
        %v2630 = vunpack.c.l.b16 %v2414
        %v2631 = vunpack.c.l.b16 %v2415
        %v2632 = vunpack.c.l.b16 %v2416
        %v2633 = vunpack.c.l.b16 %v2417
        %v2634 = vunpack.c.l.b16 %v2418
        %v2635 = vunpack.c.l.b16 %v2419
        %v2636 = vunpack.c.l.b16 %v2420
        %v2637 = vunpack.c.l.b16 %v2421
        %v2638 = vunpack.c.l.b16 %v2422
        %v2639 = vunpack.c.l.b16 %v2423
        %v2640 = vunpack.c.l.b16 %v2424
        %v2641 = vpack.c.b16 %v2626, %v2625
        %v2642 = vpack.c.b16 %v2628, %v2627
        %v2643 = vpack.c.b16 %v2630, %v2629
        %v2644 = vpack.c.b16 %v2632, %v2631
        %v2645 = vpack.c.b16 %v2634, %v2633
        %v2646 = vpack.c.b16 %v2636, %v2635
        %v2647 = vpack.c.b16 %v2638, %v2637
        %v2648 = vpack.c.b16 %v2640, %v2639
        %2657 = vmatprep.subr.bf16.mxu0 0
        %2658 = vmatpush1.bf16.msra.mxu0 %v2648
        %2659 = vmatprep.subr.bf16.mxu0 0
        %2660 = vmatpush1.bf16.msra.mxu0 %v2647
        %2661 = vmatprep.subr.bf16.mxu0 0
        %2662 = vmatpush1.bf16.msra.mxu0 %v2646
        %2663 = vmatprep.subr.bf16.mxu0 0
        %2664 = vmatpush1.bf16.msra.mxu0 %v2645
        %2665 = vmatprep.subr.bf16.mxu0 0
        %2666 = vmatpush1.bf16.msra.mxu0 %v2644
        %2667 = vmatprep.subr.bf16.mxu0 0
        %2668 = vmatpush1.bf16.msra.mxu0 %v2643
        %2669 = vmatprep.subr.bf16.mxu0 0
        %2670 = vmatpush1.bf16.msra.mxu0 %v2642
        %2671 = vmatprep.subr.bf16.mxu0 0
        %2672 = vmatpush1.bf16.msra.mxu0 %v2641
        %2673 = vmatprep.subr.bf16.mxu0 0
        %2674 = vmatpush2.bf16.msra.mxu0 0
        %2675 = vmatprep.subr.bf16.mxu0 0
        %2676 = vmatpush2.bf16.msra.mxu0 0
        %2677 = vmatprep.subr.bf16.mxu0 0
        %2678 = vmatpush2.bf16.msra.mxu0 0
        %2679 = vmatprep.subr.bf16.mxu0 0
        %2680 = vmatpush2.bf16.msra.mxu0 0
        %2681 = vmatprep.subr.bf16.mxu0 0
        %2682 = vmatpush2.bf16.msra.mxu0 0
        %2683 = vmatprep.subr.bf16.mxu0 0
        %2684 = vmatpush2.bf16.msra.mxu0 0
        %2685 = vmatprep.subr.bf16.mxu0 0
        %2686 = vmatpush2.bf16.msra.mxu0 0
        %2687 = vmatprep.subr.bf16.mxu0 0
        %2688 = vmatpush2.bf16.msra.mxu0 0
        %2689 = vmatprep.mubr.bf16.mxu0 0
        %2690 = vmatmul.mubr.bf16.gmra.mxu0 %v2386
        %v2691 = vpop.f32.mrf.mxu0
        %v2692 = vadd.f32 0.0, %v2691
        %v2693 = vpop.f32.mrf.mxu0
        %v2694 = vpop.f32.mrf.mxu0
        %v2695 = vpop.f32.mrf.mxu0
        %2696 = vdwg.mxu0
        %v2713 = vunpack.c.l.b16 %v2425
        %v2714 = vunpack.c.l.b16 %v2426
        %v2715 = vunpack.c.l.b16 %v2427
        %v2716 = vunpack.c.l.b16 %v2428
        %v2717 = vunpack.c.l.b16 %v2429
        %v2718 = vunpack.c.l.b16 %v2430
        %v2719 = vunpack.c.l.b16 %v2431
        %v2720 = vunpack.c.l.b16 %v2432
        %v2721 = vunpack.c.l.b16 %v2433
        %v2722 = vunpack.c.l.b16 %v2434
        %v2723 = vunpack.c.l.b16 %v2435
        %v2724 = vunpack.c.l.b16 %v2436
        %v2725 = vunpack.c.l.b16 %v2437
        %v2726 = vunpack.c.l.b16 %v2438
        %v2727 = vunpack.c.l.b16 %v2439
        %v2728 = vunpack.c.l.b16 %v2440
        %v2729 = vpack.c.b16 %v2714, %v2713
        %v2730 = vpack.c.b16 %v2716, %v2715
        %v2731 = vpack.c.b16 %v2718, %v2717
        %v2732 = vpack.c.b16 %v2720, %v2719
        %v2733 = vpack.c.b16 %v2722, %v2721
        %v2734 = vpack.c.b16 %v2724, %v2723
        %v2735 = vpack.c.b16 %v2726, %v2725
        %v2736 = vpack.c.b16 %v2728, %v2727
        %2745 = vmatprep.subr.bf16.mxu0 0
        %2746 = vmatpush1.bf16.msra.mxu0 %v2736
        %2747 = vmatprep.subr.bf16.mxu0 0
        %2748 = vmatpush1.bf16.msra.mxu0 %v2735
        %2749 = vmatprep.subr.bf16.mxu0 0
        %2750 = vmatpush1.bf16.msra.mxu0 %v2734
        %2751 = vmatprep.subr.bf16.mxu0 0
        %2752 = vmatpush1.bf16.msra.mxu0 %v2733
        %2753 = vmatprep.subr.bf16.mxu0 0
        %2754 = vmatpush1.bf16.msra.mxu0 %v2732
        %2755 = vmatprep.subr.bf16.mxu0 0
        %2756 = vmatpush1.bf16.msra.mxu0 %v2731
        %2757 = vmatprep.subr.bf16.mxu0 0
        %2758 = vmatpush1.bf16.msra.mxu0 %v2730
        %2759 = vmatprep.subr.bf16.mxu0 0
        %2760 = vmatpush1.bf16.msra.mxu0 %v2729
        %2761 = vmatprep.subr.bf16.mxu0 0
        %2762 = vmatpush2.bf16.msra.mxu0 0
        %2763 = vmatprep.subr.bf16.mxu0 0
        %2764 = vmatpush2.bf16.msra.mxu0 0
        %2765 = vmatprep.subr.bf16.mxu0 0
        %2766 = vmatpush2.bf16.msra.mxu0 0
        %2767 = vmatprep.subr.bf16.mxu0 0
        %2768 = vmatpush2.bf16.msra.mxu0 0
        %2769 = vmatprep.subr.bf16.mxu0 0
        %2770 = vmatpush2.bf16.msra.mxu0 0
        %2771 = vmatprep.subr.bf16.mxu0 0
        %2772 = vmatpush2.bf16.msra.mxu0 0
        %2773 = vmatprep.subr.bf16.mxu0 0
        %2774 = vmatpush2.bf16.msra.mxu0 0
        %2775 = vmatprep.subr.bf16.mxu0 0
        %2776 = vmatpush2.bf16.msra.mxu0 0
        %2777 = vmatprep.mubr.bf16.mxu0 0
        %2778 = vmatmul.mubr.bf16.gmra.mxu0 %v2387
        %v2779 = vpop.f32.mrf.mxu0
        %v2780 = vadd.f32 0.0, %v2779
        %v2781 = vpop.f32.mrf.mxu0
        %v2782 = vpop.f32.mrf.mxu0
        %v2783 = vpop.f32.mrf.mxu0
        %2784 = vdwg.mxu0
        %v2801 = vunpack.c.l.b16 %v2441
        %v2802 = vunpack.c.l.b16 %v2442
        %v2803 = vunpack.c.l.b16 %v2443
        %v2804 = vunpack.c.l.b16 %v2444
        %v2805 = vunpack.c.l.b16 %v2445
        %v2806 = vunpack.c.l.b16 %v2446
        %v2807 = vunpack.c.l.b16 %v2447
        %v2808 = vunpack.c.l.b16 %v2448
        %v2809 = vunpack.c.l.b16 %v2449
        %v2810 = vunpack.c.l.b16 %v2450
        %v2811 = vunpack.c.l.b16 %v2451
        %v2812 = vunpack.c.l.b16 %v2452
        %v2813 = vunpack.c.l.b16 %v2453
        %v2814 = vunpack.c.l.b16 %v2454
        %v2815 = vunpack.c.l.b16 %v2455
        %v2816 = vunpack.c.l.b16 %v2456
        %v2817 = vpack.c.b16 %v2802, %v2801
        %v2818 = vpack.c.b16 %v2804, %v2803
        %v2819 = vpack.c.b16 %v2806, %v2805
        %v2820 = vpack.c.b16 %v2808, %v2807
        %v2821 = vpack.c.b16 %v2810, %v2809
        %v2822 = vpack.c.b16 %v2812, %v2811
        %v2823 = vpack.c.b16 %v2814, %v2813
        %v2824 = vpack.c.b16 %v2816, %v2815
        %2833 = vmatprep.subr.bf16.mxu0 0
        %2834 = vmatpush1.bf16.msra.mxu0 %v2824
        %2835 = vmatprep.subr.bf16.mxu0 0
        %2836 = vmatpush1.bf16.msra.mxu0 %v2823
        %2837 = vmatprep.subr.bf16.mxu0 0
        %2838 = vmatpush1.bf16.msra.mxu0 %v2822
        %2839 = vmatprep.subr.bf16.mxu0 0
        %2840 = vmatpush1.bf16.msra.mxu0 %v2821
        %2841 = vmatprep.subr.bf16.mxu0 0
        %2842 = vmatpush1.bf16.msra.mxu0 %v2820
        %2843 = vmatprep.subr.bf16.mxu0 0
        %2844 = vmatpush1.bf16.msra.mxu0 %v2819
        %2845 = vmatprep.subr.bf16.mxu0 0
        %2846 = vmatpush1.bf16.msra.mxu0 %v2818
        %2847 = vmatprep.subr.bf16.mxu0 0
        %2848 = vmatpush1.bf16.msra.mxu0 %v2817
        %2849 = vmatprep.subr.bf16.mxu0 0
        %2850 = vmatpush2.bf16.msra.mxu0 0
        %2851 = vmatprep.subr.bf16.mxu0 0
        %2852 = vmatpush2.bf16.msra.mxu0 0
        %2853 = vmatprep.subr.bf16.mxu0 0
        %2854 = vmatpush2.bf16.msra.mxu0 0
        %2855 = vmatprep.subr.bf16.mxu0 0
        %2856 = vmatpush2.bf16.msra.mxu0 0
        %2857 = vmatprep.subr.bf16.mxu0 0
        %2858 = vmatpush2.bf16.msra.mxu0 0
        %2859 = vmatprep.subr.bf16.mxu0 0
        %2860 = vmatpush2.bf16.msra.mxu0 0
        %2861 = vmatprep.subr.bf16.mxu0 0
        %2862 = vmatpush2.bf16.msra.mxu0 0
        %2863 = vmatprep.subr.bf16.mxu0 0
        %2864 = vmatpush2.bf16.msra.mxu0 0
        %2865 = vmatprep.mubr.bf16.mxu0 0
        %2866 = vmatmul.mubr.bf16.gmra.mxu0 %v2388
        %v2867 = vpop.f32.mrf.mxu0
        %v2868 = vadd.f32 0.0, %v2867
        %v2869 = vpop.f32.mrf.mxu0
        %v2870 = vpop.f32.mrf.mxu0
        %v2871 = vpop.f32.mrf.mxu0
        %2872 = vdwg.mxu0
        %v2889 = vunpack.c.l.b16 %v2457
        %v2890 = vunpack.c.l.b16 %v2458
        %v2891 = vunpack.c.l.b16 %v2459
        %v2892 = vunpack.c.l.b16 %v2460
        %v2893 = vunpack.c.l.b16 %v2461
        %v2894 = vunpack.c.l.b16 %v2462
        %v2895 = vunpack.c.l.b16 %v2463
        %v2896 = vunpack.c.l.b16 %v2464
        %v2897 = vunpack.c.l.b16 %v2465
        %v2898 = vunpack.c.l.b16 %v2466
        %v2899 = vunpack.c.l.b16 %v2467
        %v2900 = vunpack.c.l.b16 %v2468
        %v2901 = vunpack.c.l.b16 %v2469
        %v2902 = vunpack.c.l.b16 %v2470
        %v2903 = vunpack.c.l.b16 %v2471
        %v2904 = vunpack.c.l.b16 %v2472
        %v2905 = vpack.c.b16 %v2890, %v2889
        %v2906 = vpack.c.b16 %v2892, %v2891
        %v2907 = vpack.c.b16 %v2894, %v2893
        %v2908 = vpack.c.b16 %v2896, %v2895
        %v2909 = vpack.c.b16 %v2898, %v2897
        %v2910 = vpack.c.b16 %v2900, %v2899
        %v2911 = vpack.c.b16 %v2902, %v2901
        %v2912 = vpack.c.b16 %v2904, %v2903
        %2921 = vmatprep.subr.bf16.mxu0 0
        %2922 = vmatpush1.bf16.msra.mxu0 %v2912
        %2923 = vmatprep.subr.bf16.mxu0 0
        %2924 = vmatpush1.bf16.msra.mxu0 %v2911
        %2925 = vmatprep.subr.bf16.mxu0 0
        %2926 = vmatpush1.bf16.msra.mxu0 %v2910
        %2927 = vmatprep.subr.bf16.mxu0 0
        %2928 = vmatpush1.bf16.msra.mxu0 %v2909
        %2929 = vmatprep.subr.bf16.mxu0 0
        %2930 = vmatpush1.bf16.msra.mxu0 %v2908
        %2931 = vmatprep.subr.bf16.mxu0 0
        %2932 = vmatpush1.bf16.msra.mxu0 %v2907
        %2933 = vmatprep.subr.bf16.mxu0 0
        %2934 = vmatpush1.bf16.msra.mxu0 %v2906
        %2935 = vmatprep.subr.bf16.mxu0 0
        %2936 = vmatpush1.bf16.msra.mxu0 %v2905
        %2937 = vmatprep.subr.bf16.mxu0 0
        %2938 = vmatpush2.bf16.msra.mxu0 0
        %2939 = vmatprep.subr.bf16.mxu0 0
        %2940 = vmatpush2.bf16.msra.mxu0 0
        %2941 = vmatprep.subr.bf16.mxu0 0
        %2942 = vmatpush2.bf16.msra.mxu0 0
        %2943 = vmatprep.subr.bf16.mxu0 0
        %2944 = vmatpush2.bf16.msra.mxu0 0
        %2945 = vmatprep.subr.bf16.mxu0 0
        %2946 = vmatpush2.bf16.msra.mxu0 0
        %2947 = vmatprep.subr.bf16.mxu0 0
        %2948 = vmatpush2.bf16.msra.mxu0 0
        %2949 = vmatprep.subr.bf16.mxu0 0
        %2950 = vmatpush2.bf16.msra.mxu0 0
        %2951 = vmatprep.subr.bf16.mxu0 0
        %2952 = vmatpush2.bf16.msra.mxu0 0
        %2953 = vmatprep.mubr.bf16.mxu0 0
        %2954 = vmatmul.mubr.bf16.gmra.mxu0 %v2389
        %v2955 = vpop.f32.mrf.mxu0
        %v2956 = vadd.f32 0.0, %v2955
        %v2957 = vpop.f32.mrf.mxu0
        %v2958 = vpop.f32.mrf.mxu0
        %v2959 = vpop.f32.mrf.mxu0
        %2960 = vdwg.mxu0
        %v2977 = vunpack.c.l.b16 %v2473
        %v2978 = vunpack.c.l.b16 %v2474
        %v2979 = vunpack.c.l.b16 %v2475
        %v2980 = vunpack.c.l.b16 %v2476
        %v2981 = vunpack.c.l.b16 %v2477
        %v2982 = vunpack.c.l.b16 %v2478
        %v2983 = vunpack.c.l.b16 %v2479
        %v2984 = vunpack.c.l.b16 %v2480
        %v2985 = vunpack.c.l.b16 %v2481
        %v2986 = vunpack.c.l.b16 %v2482
        %v2987 = vunpack.c.l.b16 %v2483
        %v2988 = vunpack.c.l.b16 %v2484
        %v2989 = vunpack.c.l.b16 %v2485
        %v2990 = vunpack.c.l.b16 %v2486
        %v2991 = vunpack.c.l.b16 %v2487
        %v2992 = vunpack.c.l.b16 %v2488
        %v2993 = vpack.c.b16 %v2978, %v2977
        %v2994 = vpack.c.b16 %v2980, %v2979
        %v2995 = vpack.c.b16 %v2982, %v2981
        %v2996 = vpack.c.b16 %v2984, %v2983
        %v2997 = vpack.c.b16 %v2986, %v2985
        %v2998 = vpack.c.b16 %v2988, %v2987
        %v2999 = vpack.c.b16 %v2990, %v2989
        %v3000 = vpack.c.b16 %v2992, %v2991
        %3009 = vmatprep.subr.bf16.mxu0 0
        %3010 = vmatpush1.bf16.msra.mxu0 %v3000
        %3011 = vmatprep.subr.bf16.mxu0 0
        %3012 = vmatpush1.bf16.msra.mxu0 %v2999
        %3013 = vmatprep.subr.bf16.mxu0 0
        %3014 = vmatpush1.bf16.msra.mxu0 %v2998
        %3015 = vmatprep.subr.bf16.mxu0 0
        %3016 = vmatpush1.bf16.msra.mxu0 %v2997
        %3017 = vmatprep.subr.bf16.mxu0 0
        %3018 = vmatpush1.bf16.msra.mxu0 %v2996
        %3019 = vmatprep.subr.bf16.mxu0 0
        %3020 = vmatpush1.bf16.msra.mxu0 %v2995
        %3021 = vmatprep.subr.bf16.mxu0 0
        %3022 = vmatpush1.bf16.msra.mxu0 %v2994
        %3023 = vmatprep.subr.bf16.mxu0 0
        %3024 = vmatpush1.bf16.msra.mxu0 %v2993
        %3025 = vmatprep.subr.bf16.mxu0 0
        %3026 = vmatpush2.bf16.msra.mxu0 0
        %3027 = vmatprep.subr.bf16.mxu0 0
        %3028 = vmatpush2.bf16.msra.mxu0 0
        %3029 = vmatprep.subr.bf16.mxu0 0
        %3030 = vmatpush2.bf16.msra.mxu0 0
        %3031 = vmatprep.subr.bf16.mxu0 0
        %3032 = vmatpush2.bf16.msra.mxu0 0
        %3033 = vmatprep.subr.bf16.mxu0 0
        %3034 = vmatpush2.bf16.msra.mxu0 0
        %3035 = vmatprep.subr.bf16.mxu0 0
        %3036 = vmatpush2.bf16.msra.mxu0 0
        %3037 = vmatprep.subr.bf16.mxu0 0
        %3038 = vmatpush2.bf16.msra.mxu0 0
        %3039 = vmatprep.subr.bf16.mxu0 0
        %3040 = vmatpush2.bf16.msra.mxu0 0
        %3041 = vmatprep.mubr.bf16.mxu0 0
        %3042 = vmatmul.mubr.bf16.gmra.mxu0 %v2390
        %v3043 = vpop.f32.mrf.mxu0
        %v3044 = vadd.f32 0.0, %v3043
        %v3045 = vpop.f32.mrf.mxu0
        %v3046 = vpop.f32.mrf.mxu0
        %v3047 = vpop.f32.mrf.mxu0
        %3048 = vdwg.mxu0
        %v3065 = vunpack.c.l.b16 %v2489
        %v3066 = vunpack.c.l.b16 %v2490
        %v3067 = vunpack.c.l.b16 %v2491
        %v3068 = vunpack.c.l.b16 %v2492
        %v3069 = vunpack.c.l.b16 %v2493
        %v3070 = vunpack.c.l.b16 %v2494
        %v3071 = vunpack.c.l.b16 %v2495
        %v3072 = vunpack.c.l.b16 %v2496
        %v3073 = vunpack.c.l.b16 %v2497
        %v3074 = vunpack.c.l.b16 %v2498
        %v3075 = vunpack.c.l.b16 %v2499
        %v3076 = vunpack.c.l.b16 %v2500
        %v3077 = vunpack.c.l.b16 %v2501
        %v3078 = vunpack.c.l.b16 %v2502
        %v3079 = vunpack.c.l.b16 %v2503
        %v3080 = vunpack.c.l.b16 %v2504
        %v3081 = vpack.c.b16 %v3066, %v3065
        %v3082 = vpack.c.b16 %v3068, %v3067
        %v3083 = vpack.c.b16 %v3070, %v3069
        %v3084 = vpack.c.b16 %v3072, %v3071
        %v3085 = vpack.c.b16 %v3074, %v3073
        %v3086 = vpack.c.b16 %v3076, %v3075
        %v3087 = vpack.c.b16 %v3078, %v3077
        %v3088 = vpack.c.b16 %v3080, %v3079
        %3097 = vmatprep.subr.bf16.mxu0 0
        %3098 = vmatpush1.bf16.msra.mxu0 %v3088
        %3099 = vmatprep.subr.bf16.mxu0 0
        %3100 = vmatpush1.bf16.msra.mxu0 %v3087
        %3101 = vmatprep.subr.bf16.mxu0 0
        %3102 = vmatpush1.bf16.msra.mxu0 %v3086
        %3103 = vmatprep.subr.bf16.mxu0 0
        %3104 = vmatpush1.bf16.msra.mxu0 %v3085
        %3105 = vmatprep.subr.bf16.mxu0 0
        %3106 = vmatpush1.bf16.msra.mxu0 %v3084
        %3107 = vmatprep.subr.bf16.mxu0 0
        %3108 = vmatpush1.bf16.msra.mxu0 %v3083
        %3109 = vmatprep.subr.bf16.mxu0 0
        %3110 = vmatpush1.bf16.msra.mxu0 %v3082
        %3111 = vmatprep.subr.bf16.mxu0 0
        %3112 = vmatpush1.bf16.msra.mxu0 %v3081
        %3113 = vmatprep.subr.bf16.mxu0 0
        %3114 = vmatpush2.bf16.msra.mxu0 0
        %3115 = vmatprep.subr.bf16.mxu0 0
        %3116 = vmatpush2.bf16.msra.mxu0 0
        %3117 = vmatprep.subr.bf16.mxu0 0
        %3118 = vmatpush2.bf16.msra.mxu0 0
        %3119 = vmatprep.subr.bf16.mxu0 0
        %3120 = vmatpush2.bf16.msra.mxu0 0
        %3121 = vmatprep.subr.bf16.mxu0 0
        %3122 = vmatpush2.bf16.msra.mxu0 0
        %3123 = vmatprep.subr.bf16.mxu0 0
        %3124 = vmatpush2.bf16.msra.mxu0 0
        %3125 = vmatprep.subr.bf16.mxu0 0
        %3126 = vmatpush2.bf16.msra.mxu0 0
        %3127 = vmatprep.subr.bf16.mxu0 0
        %3128 = vmatpush2.bf16.msra.mxu0 0
        %3129 = vmatprep.mubr.bf16.mxu0 0
        %3130 = vmatmul.mubr.bf16.gmra.mxu0 %v2391
        %v3131 = vpop.f32.mrf.mxu0
        %v3132 = vadd.f32 0.0, %v3131
        %v3133 = vpop.f32.mrf.mxu0
        %v3134 = vpop.f32.mrf.mxu0
        %v3135 = vpop.f32.mrf.mxu0
        %3136 = vdwg.mxu0
        %v3153 = vunpack.c.l.b16 %v2505
        %v3154 = vunpack.c.l.b16 %v2506
        %v3155 = vunpack.c.l.b16 %v2507
        %v3156 = vunpack.c.l.b16 %v2508
        %v3157 = vunpack.c.l.b16 %v2509
        %v3158 = vunpack.c.l.b16 %v2510
        %v3159 = vunpack.c.l.b16 %v2511
        %v3160 = vunpack.c.l.b16 %v2512
        %v3161 = vunpack.c.l.b16 %v2513
        %v3162 = vunpack.c.l.b16 %v2514
        %v3163 = vunpack.c.l.b16 %v2515
        %v3164 = vunpack.c.l.b16 %v2516
        %v3165 = vunpack.c.l.b16 %v2517
        %v3166 = vunpack.c.l.b16 %v2518
        %v3167 = vunpack.c.l.b16 %v2519
        %v3168 = vunpack.c.l.b16 %v2520
        %v3169 = vpack.c.b16 %v3154, %v3153
        %v3170 = vpack.c.b16 %v3156, %v3155
        %v3171 = vpack.c.b16 %v3158, %v3157
        %v3172 = vpack.c.b16 %v3160, %v3159
        %v3173 = vpack.c.b16 %v3162, %v3161
        %v3174 = vpack.c.b16 %v3164, %v3163
        %v3175 = vpack.c.b16 %v3166, %v3165
        %v3176 = vpack.c.b16 %v3168, %v3167
        %3185 = vmatprep.subr.bf16.mxu0 0
        %3186 = vmatpush1.bf16.msra.mxu0 %v3176
        %3187 = vmatprep.subr.bf16.mxu0 0
        %3188 = vmatpush1.bf16.msra.mxu0 %v3175
        %3189 = vmatprep.subr.bf16.mxu0 0
        %3190 = vmatpush1.bf16.msra.mxu0 %v3174
        %3191 = vmatprep.subr.bf16.mxu0 0
        %3192 = vmatpush1.bf16.msra.mxu0 %v3173
        %3193 = vmatprep.subr.bf16.mxu0 0
        %3194 = vmatpush1.bf16.msra.mxu0 %v3172
        %3195 = vmatprep.subr.bf16.mxu0 0
        %3196 = vmatpush1.bf16.msra.mxu0 %v3171
        %3197 = vmatprep.subr.bf16.mxu0 0
        %3198 = vmatpush1.bf16.msra.mxu0 %v3170
        %3199 = vmatprep.subr.bf16.mxu0 0
        %3200 = vmatpush1.bf16.msra.mxu0 %v3169
        %3201 = vmatprep.subr.bf16.mxu0 0
        %3202 = vmatpush2.bf16.msra.mxu0 0
        %3203 = vmatprep.subr.bf16.mxu0 0
        %3204 = vmatpush2.bf16.msra.mxu0 0
        %3205 = vmatprep.subr.bf16.mxu0 0
        %3206 = vmatpush2.bf16.msra.mxu0 0
        %3207 = vmatprep.subr.bf16.mxu0 0
        %3208 = vmatpush2.bf16.msra.mxu0 0
        %3209 = vmatprep.subr.bf16.mxu0 0
        %3210 = vmatpush2.bf16.msra.mxu0 0
        %3211 = vmatprep.subr.bf16.mxu0 0
        %3212 = vmatpush2.bf16.msra.mxu0 0
        %3213 = vmatprep.subr.bf16.mxu0 0
        %3214 = vmatpush2.bf16.msra.mxu0 0
        %3215 = vmatprep.subr.bf16.mxu0 0
        %3216 = vmatpush2.bf16.msra.mxu0 0
        %3217 = vmatprep.mubr.bf16.mxu0 0
        %3218 = vmatmul.mubr.bf16.gmra.mxu0 %v2392
        %v3219 = vpop.f32.mrf.mxu0
        %v3220 = vadd.f32 0.0, %v3219
        %v3221 = vpop.f32.mrf.mxu0
        %v3222 = vpop.f32.mrf.mxu0
        %v3223 = vpop.f32.mrf.mxu0
        %3224 = vdwg.mxu0
        %v3225 = vld [vmem:[#allocation3] sm:$0x1]
        %vm3226 = vcmask 1040384
        %v3227 = vsel %vm3226, %v2604, 0.0
        %v3228 = vsel %vm3226, %v2692, 0.0
        %v3229 = vadd.f32 %v3227, %v3228
        %v3230 = vsel %vm3226, %v2780, 0.0
        %v3231 = vadd.f32 %v3229, %v3230
        %v3232 = vsel %vm3226, %v2868, 0.0
        %v3233 = vadd.f32 %v3231, %v3232
        %v3234 = vsel %vm3226, %v2956, 0.0
        %v3235 = vadd.f32 %v3233, %v3234
        %v3236 = vsel %vm3226, %v3044, 0.0
        %v3237 = vadd.f32 %v3235, %v3236
        %v3238 = vsel %vm3226, %v3132, 0.0
        %v3239 = vadd.f32 %v3237, %v3238
        %v3240 = vsel %vm3226, %v3220, 0.0
        %v3241 = vadd.f32 %v3239, %v3240
        %v3242 = vadd.f32 %v3225, %v3241
        %3243 = vst [vmem:[#allocation3] sm:$0x1] %v3242
        %p3244 = scmp.eq.s32.totalorder %s25, 3
        // Predicated region
        $region69: #{sarsa_forward.1} parent=59 // pred_check
          %p3245 = pneg %p3244
        $region70: #{sarsa_forward.1} parent=59 // pred_check_branch
          %3247 = sbr.rel (%p3245) target = $region72
        $region71: #{sarsa_forward.1} parent=59 // pred_region
          %v3248 = vld [vmem:[#allocation3] sm:$0x1]
          %v3249 = vmax.f32 %v3248, 0.0
          %v3250 = vld [vmem:[%s8] sm:$0xff]
          %v3251 = vld [vmem:[%s8 + $0x8] sm:$0xff]
          %v3252 = vld [vmem:[%s8 + $0x10] sm:$0xff]
          %v3253 = vld [vmem:[%s8 + $0x18] sm:$0xff]
          %v3254 = vld [vmem:[%s8 + $0x20] sm:$0xff]
          %v3255 = vld [vmem:[%s8 + $0x28] sm:$0xff]
          %v3256 = vld [vmem:[%s8 + $0x30] sm:$0xff]
          %v3257 = vld [vmem:[%s8 + $0x38] sm:$0xff]
          %v3258 = vld [vmem:[%s8 + $0x40] sm:$0xff]
          %v3259 = vld [vmem:[%s8 + $0x48] sm:$0xff]
          %v3260 = vld [vmem:[%s8 + $0x50] sm:$0xff]
          %v3261 = vld [vmem:[%s8 + $0x58] sm:$0xff]
          %v3262 = vld [vmem:[%s8 + $0x60] sm:$0xff]
          %v3263 = vld [vmem:[%s8 + $0x68] sm:$0xff]
          %v3264 = vld [vmem:[%s8 + $0x70] sm:$0xff]
          %v3265 = vld [vmem:[%s8 + $0x78] sm:$0xff]
          %v3266 = vld [vmem:[%s9] sm:$0x1]
          %3267 = vmatprep.subr.mxu0 0.0
          %3268 = vmatpush1.msra.mxu0 %v3265
          %3269 = vmatprep.subr.mxu0 0.0
          %3270 = vmatpush1.msra.mxu0 %v3264
          %3271 = vmatprep.subr.mxu0 0.0
          %3272 = vmatpush1.msra.mxu0 %v3263
          %3273 = vmatprep.subr.mxu0 0.0
          %3274 = vmatpush1.msra.mxu0 %v3262
          %3275 = vmatprep.subr.mxu0 0.0
          %3276 = vmatpush1.msra.mxu0 %v3261
          %3277 = vmatprep.subr.mxu0 0.0
          %3278 = vmatpush1.msra.mxu0 %v3260
          %3279 = vmatprep.subr.mxu0 0.0
          %3280 = vmatpush1.msra.mxu0 %v3259
          %3281 = vmatprep.subr.mxu0 0.0
          %3282 = vmatpush1.msra.mxu0 %v3258
          %3283 = vmatprep.subr.mxu0 0.0
          %3284 = vmatpush1.msra.mxu0 %v3257
          %3285 = vmatprep.subr.mxu0 0.0
          %3286 = vmatpush1.msra.mxu0 %v3256
          %3287 = vmatprep.subr.mxu0 0.0
          %3288 = vmatpush1.msra.mxu0 %v3255
          %3289 = vmatprep.subr.mxu0 0.0
          %3290 = vmatpush1.msra.mxu0 %v3254
          %3291 = vmatprep.subr.mxu0 0.0
          %3292 = vmatpush1.msra.mxu0 %v3253
          %3293 = vmatprep.subr.mxu0 0.0
          %3294 = vmatpush1.msra.mxu0 %v3252
          %3295 = vmatprep.subr.mxu0 0.0
          %3296 = vmatpush1.msra.mxu0 %v3251
          %3297 = vmatprep.subr.mxu0 0.0
          %3298 = vmatpush1.msra.mxu0 %v3250
          %3299 = vmatprep.subr.mxu0 0.0
          %3300 = vmatpush2.msra.mxu0 0.0
          %3301 = vmatprep.subr.mxu0 0.0
          %3302 = vmatpush2.msra.mxu0 0.0
          %3303 = vmatprep.subr.mxu0 0.0
          %3304 = vmatpush2.msra.mxu0 0.0
          %3305 = vmatprep.subr.mxu0 0.0
          %3306 = vmatpush2.msra.mxu0 0.0
          %3307 = vmatprep.subr.mxu0 0.0
          %3308 = vmatpush2.msra.mxu0 0.0
          %3309 = vmatprep.subr.mxu0 0.0
          %3310 = vmatpush2.msra.mxu0 0.0
          %3311 = vmatprep.subr.mxu0 0.0
          %3312 = vmatpush2.msra.mxu0 0.0
          %3313 = vmatprep.subr.mxu0 0.0
          %3314 = vmatpush2.msra.mxu0 0.0
          %3315 = vmatprep.subr.mxu0 0.0
          %3316 = vmatpush2.msra.mxu0 0.0
          %3317 = vmatprep.subr.mxu0 0.0
          %3318 = vmatpush2.msra.mxu0 0.0
          %3319 = vmatprep.subr.mxu0 0.0
          %3320 = vmatpush2.msra.mxu0 0.0
          %3321 = vmatprep.subr.mxu0 0.0
          %3322 = vmatpush2.msra.mxu0 0.0
          %3323 = vmatprep.subr.mxu0 0.0
          %3324 = vmatpush2.msra.mxu0 0.0
          %3325 = vmatprep.subr.mxu0 0.0
          %3326 = vmatpush2.msra.mxu0 0.0
          %3327 = vmatprep.subr.mxu0 0.0
          %3328 = vmatpush2.msra.mxu0 0.0
          %3329 = vmatprep.subr.mxu0 0.0
          %3330 = vmatpush2.msra.mxu0 0.0
          %3331 = vmatprep.mubr.f32.mxu0 0.0
          %3332 = vmatmul.mubr.f32.gmra.mxu0 %v3249
          %v3333 = vpop.f32.mrf.mxu0
          %v3334 = vadd.f32 %v3266, %v3333
          %v3335 = vpop.f32.mrf.mxu0
          %3336 = vdwg.mxu0
          %3337 = vst [vmem:[#allocation7] sm:$0x1] %v3334
        $region72: #{sarsa_forward.1} parent=59 // pred_fallthru
          _
        // Predicated region
        $region73: #{sarsa_forward.1} parent=59 // pred_check
          %p3338 = pneg %p253
        $region74: #{sarsa_forward.1} parent=59 // pred_check_branch
          %3340 = sbr.rel (%p3338) target = $region76
        $region75: #{sarsa_forward.1} parent=59 // pred_region
          %s3342 = ssub.s32 16, 16
          %3343 = vsyncadd [#allocation6], %s3342
          %s3345 = sshll.u32 [#allocation7], 4
          %s3346 = int_to_ptr.vmem [resolvable:$true] %s3345
          %3348 = dma.vmem_to_hbm [thread:$0]  %s3346, 16, %s10, [#allocation6]
        $region76: #{sarsa_forward.1} parent=59 // pred_fallthru
          _
        // Predicated region
        $region77: #{sarsa_forward.1} parent=59 // pred_check
          %p3349 = pneg %p253
        $region78: #{sarsa_forward.1} parent=59 // pred_check_branch
          %3351 = sbr.rel (%p3349) target = $region80
        $region79: #{sarsa_forward.1} parent=59 // pred_region
          %3352 = dma.done [#allocation6], 16
        $region80: #{sarsa_forward.1} parent=59 // pred_fallthru
          _
      $region60: #{sarsa_forward.1} parent=5 // pred_fallthru
        _
      %p3353 = scmp.le.s32.totalorder 2, %s20
      // Predicated region
      $region81: #{sarsa_forward.1} parent=5 // pred_check
        %p3354 = pneg %p3353
      $region82: #{sarsa_forward.1} parent=5 // pred_check_branch
        %3356 = sbr.rel (%p3354) target = $region84
      $region83: #{sarsa_forward.1} parent=5 // pred_region
        %s3357 = ssub.s32 %s20, 2
      $region84: #{sarsa_forward.1} parent=5 // pred_fallthru
        _
    $region6: #{sarsa_forward.1} parent=1 // loop_footer
      %s24 = sadd.s32 1, %s20
    $region7: #{sarsa_forward.1} parent=1 // loop_footer_branch
      %19 = sbr.rel target = $region3
    $region8: #{sarsa_forward.1} parent=1 // loop_exit
      _
    %3358 = vsyncpa [#allocation5], 1
    %s3359 = scalar_lea.sflag [#allocation5], 1
    %3360 = vsyncpa %s3359, 1
    %3361 = vsyncpa [#allocation6], 1
    %s3362 = scalar_lea.sflag [#allocation6], 1
    %3363 = vsyncpa %s3362, 1

</llo_original>
